<compile_context>
chip_gen: v6e
topology: v6e:2x2x1
jax: 0.10.0
libtpu: 0.0.40
codegen_flags: <defaults>
</compile_context>

<pallas_src>
import jax
import jax.numpy as jnp
from jax.experimental import pallas as pl
from jax.experimental.pallas import tpu as pltpu

# Constants from the PyTorch module
FEATURE_SIZE = 49
FPAD = 64                # feature dim zero-padded to an 8-multiple
HIDDEN = 100
HP = 128                 # hidden padded to a full 128-lane tile
G4 = 4 * HP              # fused gate width (i|f|g|o) = 512
N_LAYERS = 5
PROJ = 1
DENSE = 64
RESULT = 1
SEQ = 8                  # implied by mlp input dim = 8 + 2*10 + 24
N_XY = 10
N_T = 24


def taxi_lstm2_kernel(featbig_ref, loc_ref, time_ref,
                      wih0_ref, wih_ref, whh_ref, b_ref, whr_ref,
                      w1s_ref, w1x_ref, w1y_ref, w1t_ref, b1_ref,
                      w2_ref, b2_ref,
                      out_ref, pre0_scr, sq_scr):
    B = loc_ref.shape[0]
    LB = whr_ref.shape[0]            # L * B stacked layer/batch rows
    L = LB // B
    T = w1s_ref.shape[0]
    LBP = featbig_ref.shape[0] // T  # per-timestep block, padded to 8-multiple
    n_xy = w1x_ref.shape[0]
    n_t = w1t_ref.shape[0]

    # ---------------- Hoisted layer-0 input projection (only real MXU work) --
    # featbig rows (t, l, b): l==0 rows carry the features, l>0 rows are zero,
    # so each aligned (LB, G4) slice of pre0 is already the per-step layer-0
    # pre-gate block with zeros for the upper layers.  Tiled by timestep so no
    # 64-vreg intermediate is ever live.
    for t in range(T):
        pre0_scr[t * LBP:(t + 1) * LBP, :] = jnp.dot(
            featbig_ref[t * LBP:(t + 1) * LBP, :], wih0_ref[...],
            preferred_element_type=jnp.float32)

    # ---------------- Hoisted small constants --------------------------------
    whr_exp = whr_ref[...]                                    # (LB, HP)
    col = jax.lax.broadcasted_iota(jnp.int32, (1, G4), 1)
    is_g = jnp.logical_and(col >= 2 * HP, col < 3 * HP)       # gate order i|f|g|o
    # i/f/o columns were pre-scaled by 0.5 in prepare_params:
    #   sigmoid(x) = 0.5*tanh(0.5*x) + 0.5 ; g stays tanh(x).
    alpha = jnp.where(is_g, 1.0, 0.5).astype(jnp.float32)
    beta = jnp.where(is_g, 0.0, 0.5).astype(jnp.float32)
    row = jax.lax.broadcasted_iota(jnp.int32, (LB, 1), 0)
    zeros_top = jnp.zeros((B, PROJ), jnp.float32)

    # ---------------- Wavefront over (layer, time) ---------------------------
    # Step s handles every cell (l, t) with l + t == s: chain length L+T-1 = 12
    # instead of L*T = 40.  Layers l > s are masked (stay zero); garbage past a
    # layer's time window is never consumed by the layer above.
    # c's padded lanes (HIDDEN..HP) stay exactly 0: their gate pre-activations
    # are 0 -> g = tanh(0) = 0, and whr is zero-padded, so nothing leaks.
    h_all = jnp.zeros((LB, PROJ), jnp.float32)   # per-layer projected h (proj=1)
    c_all = jnp.zeros((LB, HP), jnp.float32)     # per-layer cell state
    for s in range(L + T - 1):
        # Input to layer l is layer l-1's output from the previous step
        # (layer-0 rows are irrelevant: their wih rows are zero).
        x_in = jnp.concatenate([zeros_top, h_all[:LB - B, :]], axis=0)   # (LB,1)
        pre = x_in * wih_ref[...] + b_ref[...]                           # (LB,G4)
        if s < T:                      # layer-0 pre-gates for time t = s
            pre = pre + pre0_scr[s * LBP:s * LBP + LB, :]
        gates = pre + h_all * whh_ref[...]                               # (LB,G4)
        acts = jnp.tanh(gates) * alpha + beta        # one fused EUP push set
        i_g = acts[:, 0:HP]
        f_g = acts[:, HP:2 * HP]
        g_g = acts[:, 2 * HP:3 * HP]
        o_g = acts[:, 3 * HP:4 * HP]
        c_new = f_g * c_all + i_g * g_g                                  # (LB,HP)
        h_full = o_g * jnp.tanh(c_new)
        # proj_size=1: the H -> 1 projection is a lane reduction, not a matmul.
        h_new = jnp.sum(h_full * whr_exp, axis=-1, keepdims=True)        # (LB,1)
        if s < L - 1:                  # layers l > s have not started yet
            active = row < (s + 1) * B
            c_new = jnp.where(active, c_new, c_all)
            h_new = jnp.where(active, h_new, h_all)
        h_all, c_all = h_new, c_new
        if s >= L - 1:                 # top layer emits time t = s - (L-1)
            t = s - (L - 1)
            sq_scr[:, t:t + 1] = h_all[LB - B:, :]                       # (B,1)

    # ---------------- MLP head ------------------------------------------------
    squeeze = sq_scr[...]                                                # (B, T)
    xi = loc_ref[:, 0:1]
    yi = loc_ref[:, 1:2]
    ti = time_ref[...]
    iota_xy = jax.lax.broadcasted_iota(jnp.int32, (B, n_xy), 1)
    iota_t = jax.lax.broadcasted_iota(jnp.int32, (B, n_t), 1)
    oh_x = (iota_xy == xi).astype(jnp.float32)                           # (B,10)
    oh_y = (iota_xy == yi).astype(jnp.float32)
    oh_t = (iota_t == ti).astype(jnp.float32)                            # (B,24)
    acc = (jnp.dot(squeeze, w1s_ref[...], preferred_element_type=jnp.float32)
           + jnp.dot(oh_x, w1x_ref[...], preferred_element_type=jnp.float32)
           + jnp.dot(oh_y, w1y_ref[...], preferred_element_type=jnp.float32)
           + jnp.dot(oh_t, w1t_ref[...], preferred_element_type=jnp.float32)
           + b1_ref[...])                                                # (B,64)
    hidden = jnp.maximum(acc, 0.0)                                       # ReLU
    # Second Linear has output width 1 -> lane reduce instead of N=1 matmul.
    out_ref[...] = (jnp.sum(hidden * w2_ref[...], axis=-1, keepdims=True)
                    + b2_ref[...])


def prepare_params(raw):
    """Convert PyTorch-layout LSTM/MLP weights into the fused/padded layout."""
    def pad_gates(w):
        # trailing dim = 4*HIDDEN in PyTorch gate order (i|f|g|o)
        lead = w.shape[:-1]
        w = w.reshape(lead + (4, HIDDEN))
        w = jnp.pad(w, [(0, 0)] * len(lead) + [(0, 0), (0, HP - HIDDEN)])
        return w.reshape(lead + (G4,))

    # Pre-scale i|f|o gate columns by 0.5 so the kernel computes all four gate
    # nonlinearities with ONE tanh: sigmoid(x) = 0.5*tanh(0.5*x) + 0.5.
    # NOTE: must follow the i|f|g|o gate ordering exactly (g unscaled).
    gate_scale = jnp.concatenate([jnp.full((HP,), 0.5), jnp.full((HP,), 0.5),
                                  jnp.ones((HP,)), jnp.full((HP,), 0.5)])

    wih0 = pad_gates(raw["weight_ih_l0"].T) * gate_scale                # (F, G4)
    wih0 = jnp.pad(wih0, ((0, FPAD - FEATURE_SIZE), (0, 0)))            # (FPAD, G4)

    # Layer-0 row is zero: its input contribution comes from the hoisted matmul.
    wihk = jnp.concatenate(
        [jnp.zeros((1, G4))]
        + [pad_gates(raw[f"weight_ih_l{k}"].T) for k in range(1, N_LAYERS)],
        axis=0) * gate_scale                                             # (L, G4)
    whh = jnp.concatenate([pad_gates(raw[f"weight_hh_l{k}"].T)
                           for k in range(N_LAYERS)], axis=0) * gate_scale
    b = jnp.concatenate(
        [pad_gates((raw[f"bias_ih_l{k}"] + raw[f"bias_hh_l{k}"]).reshape(1, 4 * HIDDEN))
         for k in range(N_LAYERS)], axis=0) * gate_scale                 # (L, G4)
    whr = jnp.concatenate([jnp.pad(raw[f"weight_hr_l{k}"],
                                   ((0, 0), (0, HP - HIDDEN)))
                           for k in range(N_LAYERS)], axis=0)            # (L, HP)

    w1 = raw["mlp_w1"]                                                   # (DENSE, 52)
    params = {
        "wih0": wih0, "wihk": wihk, "whh": whh, "b": b, "whr": whr,
        "w1s": w1[:, 0:SEQ].T,                                           # (SEQ, DENSE)
        "w1x": w1[:, SEQ:SEQ + N_XY].T,                                  # (10, DENSE)
        "w1y": w1[:, SEQ + N_XY:SEQ + 2 * N_XY].T,                       # (10, DENSE)
        "w1t": w1[:, SEQ + 2 * N_XY:].T,                                 # (24, DENSE)
        "b1": raw["mlp_b1"].reshape(1, DENSE),
        "w2": raw["mlp_w2"].reshape(1, DENSE),                           # RESULT = 1
        "b2": raw["mlp_b2"].reshape(1, RESULT),
    }
    return jax.tree_util.tree_map(lambda x: x.astype(jnp.float32), params)


def taxi_lstm2_forward(features, locations, times, params):
    B, T, F = features.shape
    LB = N_LAYERS * B
    LBP = ((LB + 7) // 8) * 8          # per-timestep block padded to 8 sublanes

    # (T, LBP, FPAD) slab: rows (t, l=0, b) carry the (zero-padded) features,
    # rows for l > 0 are zero, so ONE hoisted matmul yields aligned per-step
    # (LB, G4) layer-0 pre-gate blocks with zero upper-layer rows.
    feats = jnp.transpose(features.astype(jnp.float32), (1, 0, 2))       # (T,B,F)
    feats = jnp.pad(feats, ((0, 0), (0, 0), (0, FPAD - F)))              # (T,B,FPAD)
    featbig = jnp.zeros((T, LBP, FPAD), jnp.float32).at[:, :B, :].set(feats)
    featbig = featbig.reshape(T * LBP, FPAD)

    # Expand per-layer weight rows to the stacked (L*B, ...) row layout
    # (row index = l*B + b) used by the wavefront.
    rep = lambda a: jnp.repeat(a, B, axis=0)
    wih_exp = rep(params["wihk"])
    whh_exp = rep(params["whh"])
    b_exp = rep(params["b"])
    whr_exp = rep(params["whr"])

    loc = locations.astype(jnp.int32)                   # (B, 2)
    tms = times.astype(jnp.int32).reshape(B, 1)         # (B, 1)

    vmem = pl.BlockSpec(memory_space=pltpu.MemorySpace.VMEM)
    return pl.pallas_call(
        taxi_lstm2_kernel,
        out_shape=jax.ShapeDtypeStruct((B, RESULT), jnp.float32),
        in_specs=[vmem] * 15,
        out_specs=vmem,
        scratch_shapes=[pltpu.VMEM((T * LBP, G4), jnp.float32),   # layer-0 pre-gates
                        pltpu.VMEM((B, T), jnp.float32)],         # packed squeeze
    )(featbig, loc, tms,
      params["wih0"], wih_exp, whh_exp, b_exp, whr_exp,
      params["w1s"], params["w1x"], params["w1y"], params["w1t"],
      params["b1"], params["w2"], params["b2"])


if __name__ == "__main__":
    key = jax.random.PRNGKey(0)
    keys = iter(jax.random.split(key, 64))
    B = 2

    features = jax.random.normal(next(keys), (B, SEQ, FEATURE_SIZE), jnp.float32)
    locations = jax.random.randint(next(keys), (B, 2), 0, N_XY, jnp.int32)
    times = jax.random.randint(next(keys), (B,), 0, N_T, jnp.int32)

    s = 0.1  # deterministic synthetic weights in PyTorch layout (not a checkpoint)
    raw = {"weight_ih_l0": s * jax.random.normal(next(keys), (4 * HIDDEN, FEATURE_SIZE))}
    for k in range(1, N_LAYERS):
        raw[f"weight_ih_l{k}"] = s * jax.random.normal(next(keys), (4 * HIDDEN, PROJ))
    for k in range(N_LAYERS):
        raw[f"weight_hh_l{k}"] = s * jax.random.normal(next(keys), (4 * HIDDEN, PROJ))
        raw[f"bias_ih_l{k}"] = s * jax.random.normal(next(keys), (4 * HIDDEN,))
        raw[f"bias_hh_l{k}"] = s * jax.random.normal(next(keys), (4 * HIDDEN,))
        raw[f"weight_hr_l{k}"] = s * jax.random.normal(next(keys), (PROJ, HIDDEN))
    raw["mlp_w1"] = s * jax.random.normal(next(keys), (DENSE, SEQ + 2 * N_XY + N_T))
    raw["mlp_b1"] = s * jax.random.normal(next(keys), (DENSE,))
    raw["mlp_w2"] = s * jax.random.normal(next(keys), (RESULT, DENSE))
    raw["mlp_b2"] = s * jax.random.normal(next(keys), (RESULT,))

    params = prepare_params(raw)
    out = taxi_lstm2_forward(features, locations, times, params)
    jax.block_until_ready(out)
    assert out.shape == (B, RESULT) and out.dtype == jnp.float32
    print("KERNEL_OK")
</pallas_src>

<mosaic_0001>
module attributes {stable_mosaic.version = 11 : i64} {
  func.func @taxi_lstm2_kernel(%arg0: memref<128x64xf32, #tpu.memory_space<vmem>>, %arg1: memref<2x2xi32, #tpu.memory_space<vmem>>, %arg2: memref<2x1xi32, #tpu.memory_space<vmem>>, %arg3: memref<64x512xf32, #tpu.memory_space<vmem>>, %arg4: memref<10x512xf32, #tpu.memory_space<vmem>>, %arg5: memref<10x512xf32, #tpu.memory_space<vmem>>, %arg6: memref<10x512xf32, #tpu.memory_space<vmem>>, %arg7: memref<10x128xf32, #tpu.memory_space<vmem>>, %arg8: memref<8x64xf32, #tpu.memory_space<vmem>>, %arg9: memref<10x64xf32, #tpu.memory_space<vmem>>, %arg10: memref<10x64xf32, #tpu.memory_space<vmem>>, %arg11: memref<24x64xf32, #tpu.memory_space<vmem>>, %arg12: memref<1x64xf32, #tpu.memory_space<vmem>>, %arg13: memref<1x64xf32, #tpu.memory_space<vmem>>, %arg14: memref<1x1xf32, #tpu.memory_space<vmem>>, %arg15: memref<2x1xf32, #tpu.memory_space<vmem>>, %arg16: memref<128x512xf32, #tpu.memory_space<vmem>>, %arg17: memref<2x8xf32, #tpu.memory_space<vmem>>) attributes {dimension_semantics = [], scalar_prefetch = 0 : i64, scratch_operands = 2 : i64, tpu.core_type = #tpu.core_type<tc>} {
    %c0 = arith.constant 0 : index
    %c0_0 = arith.constant 0 : index
    %0 = vector.load %arg0[%c0, %c0_0] : memref<128x64xf32, #tpu.memory_space<vmem>>, vector<16x64xf32>
    %c0_1 = arith.constant 0 : index
    %c0_2 = arith.constant 0 : index
    %1 = vector.load %arg3[%c0_1, %c0_2] : memref<64x512xf32, #tpu.memory_space<vmem>>, vector<64x512xf32>
    %cst = arith.constant dense<0.000000e+00> : vector<16x512xf32>
    %2 = tpu.matmul %0, %1, %cst {dimension_numbers = #tpu.dot_dimension_numbers<[1], [0], [0], [1], [0, 0, 1, 1], [], []>} : vector<16x64xf32>, vector<64x512xf32>, vector<16x512xf32> -> vector<16x512xf32>
    %c0_3 = arith.constant 0 : index
    %c0_4 = arith.constant 0 : index
    %3 = vector.load %arg16[%c0_3, %c0_4] : memref<128x512xf32, #tpu.memory_space<vmem>>, vector<16x512xf32>
    tpu.vector_store %arg16[%c0_3, %c0_4], %2 {strides = array<i32>} : memref<128x512xf32, #tpu.memory_space<vmem>>, vector<16x512xf32>,
    %c16 = arith.constant 16 : index
    %c0_5 = arith.constant 0 : index
    %4 = vector.load %arg0[%c16, %c0_5] : memref<128x64xf32, #tpu.memory_space<vmem>>, vector<16x64xf32>
    %c0_6 = arith.constant 0 : index
    %c0_7 = arith.constant 0 : index
    %5 = vector.load %arg3[%c0_6, %c0_7] : memref<64x512xf32, #tpu.memory_space<vmem>>, vector<64x512xf32>
    %cst_8 = arith.constant dense<0.000000e+00> : vector<16x512xf32>
    %6 = tpu.matmul %4, %5, %cst_8 {dimension_numbers = #tpu.dot_dimension_numbers<[1], [0], [0], [1], [0, 0, 1, 1], [], []>} : vector<16x64xf32>, vector<64x512xf32>, vector<16x512xf32> -> vector<16x512xf32>
    %c16_9 = arith.constant 16 : index
    %c0_10 = arith.constant 0 : index
    %7 = vector.load %arg16[%c16_9, %c0_10] : memref<128x512xf32, #tpu.memory_space<vmem>>, vector<16x512xf32>
    tpu.vector_store %arg16[%c16_9, %c0_10], %6 {strides = array<i32>} : memref<128x512xf32, #tpu.memory_space<vmem>>, vector<16x512xf32>,
    %c32 = arith.constant 32 : index
    %c0_11 = arith.constant 0 : index
    %8 = vector.load %arg0[%c32, %c0_11] : memref<128x64xf32, #tpu.memory_space<vmem>>, vector<16x64xf32>
    %c0_12 = arith.constant 0 : index
    %c0_13 = arith.constant 0 : index
    %9 = vector.load %arg3[%c0_12, %c0_13] : memref<64x512xf32, #tpu.memory_space<vmem>>, vector<64x512xf32>
    %cst_14 = arith.constant dense<0.000000e+00> : vector<16x512xf32>
    %10 = tpu.matmul %8, %9, %cst_14 {dimension_numbers = #tpu.dot_dimension_numbers<[1], [0], [0], [1], [0, 0, 1, 1], [], []>} : vector<16x64xf32>, vector<64x512xf32>, vector<16x512xf32> -> vector<16x512xf32>
    %c32_15 = arith.constant 32 : index
    %c0_16 = arith.constant 0 : index
    %11 = vector.load %arg16[%c32_15, %c0_16] : memref<128x512xf32, #tpu.memory_space<vmem>>, vector<16x512xf32>
    tpu.vector_store %arg16[%c32_15, %c0_16], %10 {strides = array<i32>} : memref<128x512xf32, #tpu.memory_space<vmem>>, vector<16x512xf32>,
    %c48 = arith.constant 48 : index
    %c0_17 = arith.constant 0 : index
    %12 = vector.load %arg0[%c48, %c0_17] : memref<128x64xf32, #tpu.memory_space<vmem>>, vector<16x64xf32>
    %c0_18 = arith.constant 0 : index
    %c0_19 = arith.constant 0 : index
    %13 = vector.load %arg3[%c0_18, %c0_19] : memref<64x512xf32, #tpu.memory_space<vmem>>, vector<64x512xf32>
    %cst_20 = arith.constant dense<0.000000e+00> : vector<16x512xf32>
    %14 = tpu.matmul %12, %13, %cst_20 {dimension_numbers = #tpu.dot_dimension_numbers<[1], [0], [0], [1], [0, 0, 1, 1], [], []>} : vector<16x64xf32>, vector<64x512xf32>, vector<16x512xf32> -> vector<16x512xf32>
    %c48_21 = arith.constant 48 : index
    %c0_22 = arith.constant 0 : index
    %15 = vector.load %arg16[%c48_21, %c0_22] : memref<128x512xf32, #tpu.memory_space<vmem>>, vector<16x512xf32>
    tpu.vector_store %arg16[%c48_21, %c0_22], %14 {strides = array<i32>} : memref<128x512xf32, #tpu.memory_space<vmem>>, vector<16x512xf32>,
    %c64 = arith.constant 64 : index
    %c0_23 = arith.constant 0 : index
    %16 = vector.load %arg0[%c64, %c0_23] : memref<128x64xf32, #tpu.memory_space<vmem>>, vector<16x64xf32>
    %c0_24 = arith.constant 0 : index
    %c0_25 = arith.constant 0 : index
    %17 = vector.load %arg3[%c0_24, %c0_25] : memref<64x512xf32, #tpu.memory_space<vmem>>, vector<64x512xf32>
    %cst_26 = arith.constant dense<0.000000e+00> : vector<16x512xf32>
    %18 = tpu.matmul %16, %17, %cst_26 {dimension_numbers = #tpu.dot_dimension_numbers<[1], [0], [0], [1], [0, 0, 1, 1], [], []>} : vector<16x64xf32>, vector<64x512xf32>, vector<16x512xf32> -> vector<16x512xf32>
    %c64_27 = arith.constant 64 : index
    %c0_28 = arith.constant 0 : index
    %19 = vector.load %arg16[%c64_27, %c0_28] : memref<128x512xf32, #tpu.memory_space<vmem>>, vector<16x512xf32>
    tpu.vector_store %arg16[%c64_27, %c0_28], %18 {strides = array<i32>} : memref<128x512xf32, #tpu.memory_space<vmem>>, vector<16x512xf32>,
    %c80 = arith.constant 80 : index
    %c0_29 = arith.constant 0 : index
    %20 = vector.load %arg0[%c80, %c0_29] : memref<128x64xf32, #tpu.memory_space<vmem>>, vector<16x64xf32>
    %c0_30 = arith.constant 0 : index
    %c0_31 = arith.constant 0 : index
    %21 = vector.load %arg3[%c0_30, %c0_31] : memref<64x512xf32, #tpu.memory_space<vmem>>, vector<64x512xf32>
    %cst_32 = arith.constant dense<0.000000e+00> : vector<16x512xf32>
    %22 = tpu.matmul %20, %21, %cst_32 {dimension_numbers = #tpu.dot_dimension_numbers<[1], [0], [0], [1], [0, 0, 1, 1], [], []>} : vector<16x64xf32>, vector<64x512xf32>, vector<16x512xf32> -> vector<16x512xf32>
    %c80_33 = arith.constant 80 : index
    %c0_34 = arith.constant 0 : index
    %23 = vector.load %arg16[%c80_33, %c0_34] : memref<128x512xf32, #tpu.memory_space<vmem>>, vector<16x512xf32>
    tpu.vector_store %arg16[%c80_33, %c0_34], %22 {strides = array<i32>} : memref<128x512xf32, #tpu.memory_space<vmem>>, vector<16x512xf32>,
    %c96 = arith.constant 96 : index
    %c0_35 = arith.constant 0 : index
    %24 = vector.load %arg0[%c96, %c0_35] : memref<128x64xf32, #tpu.memory_space<vmem>>, vector<16x64xf32>
    %c0_36 = arith.constant 0 : index
    %c0_37 = arith.constant 0 : index
    %25 = vector.load %arg3[%c0_36, %c0_37] : memref<64x512xf32, #tpu.memory_space<vmem>>, vector<64x512xf32>
    %cst_38 = arith.constant dense<0.000000e+00> : vector<16x512xf32>
    %26 = tpu.matmul %24, %25, %cst_38 {dimension_numbers = #tpu.dot_dimension_numbers<[1], [0], [0], [1], [0, 0, 1, 1], [], []>} : vector<16x64xf32>, vector<64x512xf32>, vector<16x512xf32> -> vector<16x512xf32>
    %c96_39 = arith.constant 96 : index
    %c0_40 = arith.constant 0 : index
    %27 = vector.load %arg16[%c96_39, %c0_40] : memref<128x512xf32, #tpu.memory_space<vmem>>, vector<16x512xf32>
    tpu.vector_store %arg16[%c96_39, %c0_40], %26 {strides = array<i32>} : memref<128x512xf32, #tpu.memory_space<vmem>>, vector<16x512xf32>,
    %c112 = arith.constant 112 : index
    %c0_41 = arith.constant 0 : index
    %28 = vector.load %arg0[%c112, %c0_41] : memref<128x64xf32, #tpu.memory_space<vmem>>, vector<16x64xf32>
    %c0_42 = arith.constant 0 : index
    %c0_43 = arith.constant 0 : index
    %29 = vector.load %arg3[%c0_42, %c0_43] : memref<64x512xf32, #tpu.memory_space<vmem>>, vector<64x512xf32>
    %cst_44 = arith.constant dense<0.000000e+00> : vector<16x512xf32>
    %30 = tpu.matmul %28, %29, %cst_44 {dimension_numbers = #tpu.dot_dimension_numbers<[1], [0], [0], [1], [0, 0, 1, 1], [], []>} : vector<16x64xf32>, vector<64x512xf32>, vector<16x512xf32> -> vector<16x512xf32>
    %c112_45 = arith.constant 112 : index
    %c0_46 = arith.constant 0 : index
    %31 = vector.load %arg16[%c112_45, %c0_46] : memref<128x512xf32, #tpu.memory_space<vmem>>, vector<16x512xf32>
    tpu.vector_store %arg16[%c112_45, %c0_46], %30 {strides = array<i32>} : memref<128x512xf32, #tpu.memory_space<vmem>>, vector<16x512xf32>,
    %c0_47 = arith.constant 0 : index
    %c0_48 = arith.constant 0 : index
    %32 = vector.load %arg7[%c0_47, %c0_48] : memref<10x128xf32, #tpu.memory_space<vmem>>, vector<10x128xf32>
    %33 = tpu.iota {dimensions = array<i32: 1>} : vector<1x512xi32>
    %c256_i32 = arith.constant 256 : i32
    %34 = vector.broadcast %c256_i32 : i32 to vector<1x512xi32>
    %35 = arith.cmpi sge, %33, %34 : vector<1x512xi32>
    %c384_i32 = arith.constant 384 : i32
    %36 = vector.broadcast %c384_i32 : i32 to vector<1x512xi32>
    %37 = arith.cmpi slt, %33, %36 : vector<1x512xi32>
    %38 = arith.andi %35, %37 : vector<1x512xi1>
    %cst_49 = arith.constant 1.000000e+00 : f32
    %cst_50 = arith.constant 5.000000e-01 : f32
    %39 = vector.broadcast %cst_49 : f32 to vector<1x512xf32>
    %40 = vector.broadcast %cst_50 : f32 to vector<1x512xf32>
    %41 = arith.select %38, %39, %40 : vector<1x512xi1>, vector<1x512xf32>
    %cst_51 = arith.constant 0.000000e+00 : f32
    %cst_52 = arith.constant 5.000000e-01 : f32
    %42 = vector.broadcast %cst_51 : f32 to vector<1x512xf32>
    %43 = vector.broadcast %cst_52 : f32 to vector<1x512xf32>
    %44 = arith.select %38, %42, %43 : vector<1x512xi1>, vector<1x512xf32>
    %45 = tpu.iota {dimensions = array<i32: 0>} : vector<10x1xi32>
    %cst_53 = arith.constant 0.000000e+00 : f32
    %46 = vector.broadcast %cst_53 : f32 to vector<2x1xf32>
    %cst_54 = arith.constant 0.000000e+00 : f32
    %47 = vector.broadcast %cst_54 : f32 to vector<10x1xf32>
    %cst_55 = arith.constant 0.000000e+00 : f32
    %48 = vector.broadcast %cst_55 : f32 to vector<10x128xf32>
    %49 = vector.extract_strided_slice %47 {offsets = [0, 0], sizes = [8, 1], strides = [1, 1]} : vector<10x1xf32> to vector<8x1xf32>
    %50 = tpu.concatenate %46, %49 in 0 : vector<2x1xf32>, vector<8x1xf32> -> vector<10x1xf32>
    %c0_56 = arith.constant 0 : index
    %c0_57 = arith.constant 0 : index
    %51 = vector.load %arg4[%c0_56, %c0_57] : memref<10x512xf32, #tpu.memory_space<vmem>>, vector<10x512xf32>
    %52 = vector.broadcast %50 : vector<10x1xf32> to vector<10x512xf32>
    %53 = arith.mulf %52, %51 : vector<10x512xf32>
    %c0_58 = arith.constant 0 : index
    %c0_59 = arith.constant 0 : index
    %54 = vector.load %arg6[%c0_58, %c0_59] : memref<10x512xf32, #tpu.memory_space<vmem>>, vector<10x512xf32>
    %55 = arith.addf %53, %54 : vector<10x512xf32>
    %c0_60 = arith.constant 0 : index
    %c0_61 = arith.constant 0 : index
    %56 = vector.load %arg16[%c0_60, %c0_61] : memref<128x512xf32, #tpu.memory_space<vmem>>, vector<10x512xf32>
    %57 = arith.addf %55, %56 : vector<10x512xf32>
    %c0_62 = arith.constant 0 : index
    %c0_63 = arith.constant 0 : index
    %58 = vector.load %arg5[%c0_62, %c0_63] : memref<10x512xf32, #tpu.memory_space<vmem>>, vector<10x512xf32>
    %59 = vector.broadcast %47 : vector<10x1xf32> to vector<10x512xf32>
    %60 = arith.mulf %59, %58 : vector<10x512xf32>
    %61 = arith.addf %57, %60 : vector<10x512xf32>
    %62 = math.tanh %61 : vector<10x512xf32>
    %63 = vector.broadcast %41 : vector<1x512xf32> to vector<10x512xf32>
    %64 = arith.mulf %62, %63 : vector<10x512xf32>
    %65 = vector.broadcast %44 : vector<1x512xf32> to vector<10x512xf32>
    %66 = arith.addf %64, %65 : vector<10x512xf32>
    %67 = vector.extract_strided_slice %66 {offsets = [0, 0], sizes = [10, 128], strides = [1, 1]} : vector<10x512xf32> to vector<10x128xf32>
    %68 = vector.extract_strided_slice %66 {offsets = [0, 128], sizes = [10, 128], strides = [1, 1]} : vector<10x512xf32> to vector<10x128xf32>
    %69 = vector.extract_strided_slice %66 {offsets = [0, 256], sizes = [10, 128], strides = [1, 1]} : vector<10x512xf32> to vector<10x128xf32>
    %70 = vector.extract_strided_slice %66 {offsets = [0, 384], sizes = [10, 128], strides = [1, 1]} : vector<10x512xf32> to vector<10x128xf32>
    %71 = arith.mulf %68, %48 : vector<10x128xf32>
    %72 = arith.mulf %67, %69 : vector<10x128xf32>
    %73 = arith.addf %71, %72 : vector<10x128xf32>
    %74 = math.tanh %73 : vector<10x128xf32>
    %75 = arith.mulf %70, %74 : vector<10x128xf32>
    %76 = arith.mulf %75, %32 : vector<10x128xf32>
    %cst_64 = arith.constant dense<0.000000e+00> : vector<10xf32>
    %77 = vector.multi_reduction <add>, %76, %cst_64 [1] : vector<10x128xf32> to vector<10xf32>
    %78 = vector.shape_cast %77 : vector<10xf32> to vector<10x1xf32>
    %c2_i32 = arith.constant 2 : i32
    %79 = vector.broadcast %c2_i32 : i32 to vector<10x1xi32>
    %80 = arith.cmpi slt, %45, %79 : vector<10x1xi32>
    %81 = vector.shape_cast %80 : vector<10x1xi1> to vector<10x1xi1>
    %82 = vector.broadcast %81 : vector<10x1xi1> to vector<10x128xi1>
    %83 = arith.select %82, %73, %48 : vector<10x128xi1>, vector<10x128xf32>
    %84 = arith.select %80, %78, %47 : vector<10x1xi1>, vector<10x1xf32>
    %85 = vector.extract_strided_slice %84 {offsets = [0, 0], sizes = [8, 1], strides = [1, 1]} : vector<10x1xf32> to vector<8x1xf32>
    %86 = tpu.concatenate %46, %85 in 0 : vector<2x1xf32>, vector<8x1xf32> -> vector<10x1xf32>
    %c0_65 = arith.constant 0 : index
    %c0_66 = arith.constant 0 : index
    %87 = vector.load %arg4[%c0_65, %c0_66] : memref<10x512xf32, #tpu.memory_space<vmem>>, vector<10x512xf32>
    %88 = vector.broadcast %86 : vector<10x1xf32> to vector<10x512xf32>
    %89 = arith.mulf %88, %87 : vector<10x512xf32>
    %c0_67 = arith.constant 0 : index
    %c0_68 = arith.constant 0 : index
    %90 = vector.load %arg6[%c0_67, %c0_68] : memref<10x512xf32, #tpu.memory_space<vmem>>, vector<10x512xf32>
    %91 = arith.addf %89, %90 : vector<10x512xf32>
    %c16_69 = arith.constant 16 : index
    %c0_70 = arith.constant 0 : index
    %92 = vector.load %arg16[%c16_69, %c0_70] : memref<128x512xf32, #tpu.memory_space<vmem>>, vector<10x512xf32>
    %93 = arith.addf %91, %92 : vector<10x512xf32>
    %c0_71 = arith.constant 0 : index
    %c0_72 = arith.constant 0 : index
    %94 = vector.load %arg5[%c0_71, %c0_72] : memref<10x512xf32, #tpu.memory_space<vmem>>, vector<10x512xf32>
    %95 = vector.broadcast %84 : vector<10x1xf32> to vector<10x512xf32>
    %96 = arith.mulf %95, %94 : vector<10x512xf32>
    %97 = arith.addf %93, %96 : vector<10x512xf32>
    %98 = math.tanh %97 : vector<10x512xf32>
    %99 = vector.broadcast %41 : vector<1x512xf32> to vector<10x512xf32>
    %100 = arith.mulf %98, %99 : vector<10x512xf32>
    %101 = vector.broadcast %44 : vector<1x512xf32> to vector<10x512xf32>
    %102 = arith.addf %100, %101 : vector<10x512xf32>
    %103 = vector.extract_strided_slice %102 {offsets = [0, 0], sizes = [10, 128], strides = [1, 1]} : vector<10x512xf32> to vector<10x128xf32>
    %104 = vector.extract_strided_slice %102 {offsets = [0, 128], sizes = [10, 128], strides = [1, 1]} : vector<10x512xf32> to vector<10x128xf32>
    %105 = vector.extract_strided_slice %102 {offsets = [0, 256], sizes = [10, 128], strides = [1, 1]} : vector<10x512xf32> to vector<10x128xf32>
    %106 = vector.extract_strided_slice %102 {offsets = [0, 384], sizes = [10, 128], strides = [1, 1]} : vector<10x512xf32> to vector<10x128xf32>
    %107 = arith.mulf %104, %83 : vector<10x128xf32>
    %108 = arith.mulf %103, %105 : vector<10x128xf32>
    %109 = arith.addf %107, %108 : vector<10x128xf32>
    %110 = math.tanh %109 : vector<10x128xf32>
    %111 = arith.mulf %106, %110 : vector<10x128xf32>
    %112 = arith.mulf %111, %32 : vector<10x128xf32>
    %cst_73 = arith.constant dense<0.000000e+00> : vector<10xf32>
    %113 = vector.multi_reduction <add>, %112, %cst_73 [1] : vector<10x128xf32> to vector<10xf32>
    %114 = vector.shape_cast %113 : vector<10xf32> to vector<10x1xf32>
    %c4_i32 = arith.constant 4 : i32
    %115 = vector.broadcast %c4_i32 : i32 to vector<10x1xi32>
    %116 = arith.cmpi slt, %45, %115 : vector<10x1xi32>
    %117 = vector.shape_cast %116 : vector<10x1xi1> to vector<10x1xi1>
    %118 = vector.broadcast %117 : vector<10x1xi1> to vector<10x128xi1>
    %119 = arith.select %118, %109, %83 : vector<10x128xi1>, vector<10x128xf32>
    %120 = arith.select %116, %114, %84 : vector<10x1xi1>, vector<10x1xf32>
    %121 = vector.extract_strided_slice %120 {offsets = [0, 0], sizes = [8, 1], strides = [1, 1]} : vector<10x1xf32> to vector<8x1xf32>
    %122 = tpu.concatenate %46, %121 in 0 : vector<2x1xf32>, vector<8x1xf32> -> vector<10x1xf32>
    %c0_74 = arith.constant 0 : index
    %c0_75 = arith.constant 0 : index
    %123 = vector.load %arg4[%c0_74, %c0_75] : memref<10x512xf32, #tpu.memory_space<vmem>>, vector<10x512xf32>
    %124 = vector.broadcast %122 : vector<10x1xf32> to vector<10x512xf32>
    %125 = arith.mulf %124, %123 : vector<10x512xf32>
    %c0_76 = arith.constant 0 : index
    %c0_77 = arith.constant 0 : index
    %126 = vector.load %arg6[%c0_76, %c0_77] : memref<10x512xf32, #tpu.memory_space<vmem>>, vector<10x512xf32>
    %127 = arith.addf %125, %126 : vector<10x512xf32>
    %c32_78 = arith.constant 32 : index
    %c0_79 = arith.constant 0 : index
    %128 = vector.load %arg16[%c32_78, %c0_79] : memref<128x512xf32, #tpu.memory_space<vmem>>, vector<10x512xf32>
    %129 = arith.addf %127, %128 : vector<10x512xf32>
    %c0_80 = arith.constant 0 : index
    %c0_81 = arith.constant 0 : index
    %130 = vector.load %arg5[%c0_80, %c0_81] : memref<10x512xf32, #tpu.memory_space<vmem>>, vector<10x512xf32>
    %131 = vector.broadcast %120 : vector<10x1xf32> to vector<10x512xf32>
    %132 = arith.mulf %131, %130 : vector<10x512xf32>
    %133 = arith.addf %129, %132 : vector<10x512xf32>
    %134 = math.tanh %133 : vector<10x512xf32>
    %135 = vector.broadcast %41 : vector<1x512xf32> to vector<10x512xf32>
    %136 = arith.mulf %134, %135 : vector<10x512xf32>
    %137 = vector.broadcast %44 : vector<1x512xf32> to vector<10x512xf32>
    %138 = arith.addf %136, %137 : vector<10x512xf32>
    %139 = vector.extract_strided_slice %138 {offsets = [0, 0], sizes = [10, 128], strides = [1, 1]} : vector<10x512xf32> to vector<10x128xf32>
    %140 = vector.extract_strided_slice %138 {offsets = [0, 128], sizes = [10, 128], strides = [1, 1]} : vector<10x512xf32> to vector<10x128xf32>
    %141 = vector.extract_strided_slice %138 {offsets = [0, 256], sizes = [10, 128], strides = [1, 1]} : vector<10x512xf32> to vector<10x128xf32>
    %142 = vector.extract_strided_slice %138 {offsets = [0, 384], sizes = [10, 128], strides = [1, 1]} : vector<10x512xf32> to vector<10x128xf32>
    %143 = arith.mulf %140, %119 : vector<10x128xf32>
    %144 = arith.mulf %139, %141 : vector<10x128xf32>
    %145 = arith.addf %143, %144 : vector<10x128xf32>
    %146 = math.tanh %145 : vector<10x128xf32>
    %147 = arith.mulf %142, %146 : vector<10x128xf32>
    %148 = arith.mulf %147, %32 : vector<10x128xf32>
    %cst_82 = arith.constant dense<0.000000e+00> : vector<10xf32>
    %149 = vector.multi_reduction <add>, %148, %cst_82 [1] : vector<10x128xf32> to vector<10xf32>
    %150 = vector.shape_cast %149 : vector<10xf32> to vector<10x1xf32>
    %c6_i32 = arith.constant 6 : i32
    %151 = vector.broadcast %c6_i32 : i32 to vector<10x1xi32>
    %152 = arith.cmpi slt, %45, %151 : vector<10x1xi32>
    %153 = vector.shape_cast %152 : vector<10x1xi1> to vector<10x1xi1>
    %154 = vector.broadcast %153 : vector<10x1xi1> to vector<10x128xi1>
    %155 = arith.select %154, %145, %119 : vector<10x128xi1>, vector<10x128xf32>
    %156 = arith.select %152, %150, %120 : vector<10x1xi1>, vector<10x1xf32>
    %157 = vector.extract_strided_slice %156 {offsets = [0, 0], sizes = [8, 1], strides = [1, 1]} : vector<10x1xf32> to vector<8x1xf32>
    %158 = tpu.concatenate %46, %157 in 0 : vector<2x1xf32>, vector<8x1xf32> -> vector<10x1xf32>
    %c0_83 = arith.constant 0 : index
    %c0_84 = arith.constant 0 : index
    %159 = vector.load %arg4[%c0_83, %c0_84] : memref<10x512xf32, #tpu.memory_space<vmem>>, vector<10x512xf32>
    %160 = vector.broadcast %158 : vector<10x1xf32> to vector<10x512xf32>
    %161 = arith.mulf %160, %159 : vector<10x512xf32>
    %c0_85 = arith.constant 0 : index
    %c0_86 = arith.constant 0 : index
    %162 = vector.load %arg6[%c0_85, %c0_86] : memref<10x512xf32, #tpu.memory_space<vmem>>, vector<10x512xf32>
    %163 = arith.addf %161, %162 : vector<10x512xf32>
    %c48_87 = arith.constant 48 : index
    %c0_88 = arith.constant 0 : index
    %164 = vector.load %arg16[%c48_87, %c0_88] : memref<128x512xf32, #tpu.memory_space<vmem>>, vector<10x512xf32>
    %165 = arith.addf %163, %164 : vector<10x512xf32>
    %c0_89 = arith.constant 0 : index
    %c0_90 = arith.constant 0 : index
    %166 = vector.load %arg5[%c0_89, %c0_90] : memref<10x512xf32, #tpu.memory_space<vmem>>, vector<10x512xf32>
    %167 = vector.broadcast %156 : vector<10x1xf32> to vector<10x512xf32>
    %168 = arith.mulf %167, %166 : vector<10x512xf32>
    %169 = arith.addf %165, %168 : vector<10x512xf32>
    %170 = math.tanh %169 : vector<10x512xf32>
    %171 = vector.broadcast %41 : vector<1x512xf32> to vector<10x512xf32>
    %172 = arith.mulf %170, %171 : vector<10x512xf32>
    %173 = vector.broadcast %44 : vector<1x512xf32> to vector<10x512xf32>
    %174 = arith.addf %172, %173 : vector<10x512xf32>
    %175 = vector.extract_strided_slice %174 {offsets = [0, 0], sizes = [10, 128], strides = [1, 1]} : vector<10x512xf32> to vector<10x128xf32>
    %176 = vector.extract_strided_slice %174 {offsets = [0, 128], sizes = [10, 128], strides = [1, 1]} : vector<10x512xf32> to vector<10x128xf32>
    %177 = vector.extract_strided_slice %174 {offsets = [0, 256], sizes = [10, 128], strides = [1, 1]} : vector<10x512xf32> to vector<10x128xf32>
    %178 = vector.extract_strided_slice %174 {offsets = [0, 384], sizes = [10, 128], strides = [1, 1]} : vector<10x512xf32> to vector<10x128xf32>
    %179 = arith.mulf %176, %155 : vector<10x128xf32>
    %180 = arith.mulf %175, %177 : vector<10x128xf32>
    %181 = arith.addf %179, %180 : vector<10x128xf32>
    %182 = math.tanh %181 : vector<10x128xf32>
    %183 = arith.mulf %178, %182 : vector<10x128xf32>
    %184 = arith.mulf %183, %32 : vector<10x128xf32>
    %cst_91 = arith.constant dense<0.000000e+00> : vector<10xf32>
    %185 = vector.multi_reduction <add>, %184, %cst_91 [1] : vector<10x128xf32> to vector<10xf32>
    %186 = vector.shape_cast %185 : vector<10xf32> to vector<10x1xf32>
    %c8_i32 = arith.constant 8 : i32
    %187 = vector.broadcast %c8_i32 : i32 to vector<10x1xi32>
    %188 = arith.cmpi slt, %45, %187 : vector<10x1xi32>
    %189 = vector.shape_cast %188 : vector<10x1xi1> to vector<10x1xi1>
    %190 = vector.broadcast %189 : vector<10x1xi1> to vector<10x128xi1>
    %191 = arith.select %190, %181, %155 : vector<10x128xi1>, vector<10x128xf32>
    %192 = arith.select %188, %186, %156 : vector<10x1xi1>, vector<10x1xf32>
    %193 = vector.extract_strided_slice %192 {offsets = [0, 0], sizes = [8, 1], strides = [1, 1]} : vector<10x1xf32> to vector<8x1xf32>
    %194 = tpu.concatenate %46, %193 in 0 : vector<2x1xf32>, vector<8x1xf32> -> vector<10x1xf32>
    %c0_92 = arith.constant 0 : index
    %c0_93 = arith.constant 0 : index
    %195 = vector.load %arg4[%c0_92, %c0_93] : memref<10x512xf32, #tpu.memory_space<vmem>>, vector<10x512xf32>
    %196 = vector.broadcast %194 : vector<10x1xf32> to vector<10x512xf32>
    %197 = arith.mulf %196, %195 : vector<10x512xf32>
    %c0_94 = arith.constant 0 : index
    %c0_95 = arith.constant 0 : index
    %198 = vector.load %arg6[%c0_94, %c0_95] : memref<10x512xf32, #tpu.memory_space<vmem>>, vector<10x512xf32>
    %199 = arith.addf %197, %198 : vector<10x512xf32>
    %c64_96 = arith.constant 64 : index
    %c0_97 = arith.constant 0 : index
    %200 = vector.load %arg16[%c64_96, %c0_97] : memref<128x512xf32, #tpu.memory_space<vmem>>, vector<10x512xf32>
    %201 = arith.addf %199, %200 : vector<10x512xf32>
    %c0_98 = arith.constant 0 : index
    %c0_99 = arith.constant 0 : index
    %202 = vector.load %arg5[%c0_98, %c0_99] : memref<10x512xf32, #tpu.memory_space<vmem>>, vector<10x512xf32>
    %203 = vector.broadcast %192 : vector<10x1xf32> to vector<10x512xf32>
    %204 = arith.mulf %203, %202 : vector<10x512xf32>
    %205 = arith.addf %201, %204 : vector<10x512xf32>
    %206 = math.tanh %205 : vector<10x512xf32>
    %207 = vector.broadcast %41 : vector<1x512xf32> to vector<10x512xf32>
    %208 = arith.mulf %206, %207 : vector<10x512xf32>
    %209 = vector.broadcast %44 : vector<1x512xf32> to vector<10x512xf32>
    %210 = arith.addf %208, %209 : vector<10x512xf32>
    %211 = vector.extract_strided_slice %210 {offsets = [0, 0], sizes = [10, 128], strides = [1, 1]} : vector<10x512xf32> to vector<10x128xf32>
    %212 = vector.extract_strided_slice %210 {offsets = [0, 128], sizes = [10, 128], strides = [1, 1]} : vector<10x512xf32> to vector<10x128xf32>
    %213 = vector.extract_strided_slice %210 {offsets = [0, 256], sizes = [10, 128], strides = [1, 1]} : vector<10x512xf32> to vector<10x128xf32>
    %214 = vector.extract_strided_slice %210 {offsets = [0, 384], sizes = [10, 128], strides = [1, 1]} : vector<10x512xf32> to vector<10x128xf32>
    %215 = arith.mulf %212, %191 : vector<10x128xf32>
    %216 = arith.mulf %211, %213 : vector<10x128xf32>
    %217 = arith.addf %215, %216 : vector<10x128xf32>
    %218 = math.tanh %217 : vector<10x128xf32>
    %219 = arith.mulf %214, %218 : vector<10x128xf32>
    %220 = arith.mulf %219, %32 : vector<10x128xf32>
    %cst_100 = arith.constant dense<0.000000e+00> : vector<10xf32>
    %221 = vector.multi_reduction <add>, %220, %cst_100 [1] : vector<10x128xf32> to vector<10xf32>
    %222 = vector.shape_cast %221 : vector<10xf32> to vector<10x1xf32>
    %223 = vector.extract_strided_slice %222 {offsets = [8, 0], sizes = [2, 1], strides = [1, 1]} : vector<10x1xf32> to vector<2x1xf32>
    %c0_101 = arith.constant 0 : index
    %c0_102 = arith.constant 0 : index
    %224 = vector.load %arg17[%c0_101, %c0_102] : memref<2x8xf32, #tpu.memory_space<vmem>>, vector<2x1xf32>
    tpu.vector_store %arg17[%c0_101, %c0_102], %223 {strides = array<i32>} : memref<2x8xf32, #tpu.memory_space<vmem>>, vector<2x1xf32>,
    %225 = vector.extract_strided_slice %222 {offsets = [0, 0], sizes = [8, 1], strides = [1, 1]} : vector<10x1xf32> to vector<8x1xf32>
    %226 = tpu.concatenate %46, %225 in 0 : vector<2x1xf32>, vector<8x1xf32> -> vector<10x1xf32>
    %c0_103 = arith.constant 0 : index
    %c0_104 = arith.constant 0 : index
    %227 = vector.load %arg4[%c0_103, %c0_104] : memref<10x512xf32, #tpu.memory_space<vmem>>, vector<10x512xf32>
    %228 = vector.broadcast %226 : vector<10x1xf32> to vector<10x512xf32>
    %229 = arith.mulf %228, %227 : vector<10x512xf32>
    %c0_105 = arith.constant 0 : index
    %c0_106 = arith.constant 0 : index
    %230 = vector.load %arg6[%c0_105, %c0_106] : memref<10x512xf32, #tpu.memory_space<vmem>>, vector<10x512xf32>
    %231 = arith.addf %229, %230 : vector<10x512xf32>
    %c80_107 = arith.constant 80 : index
    %c0_108 = arith.constant 0 : index
    %232 = vector.load %arg16[%c80_107, %c0_108] : memref<128x512xf32, #tpu.memory_space<vmem>>, vector<10x512xf32>
    %233 = arith.addf %231, %232 : vector<10x512xf32>
    %c0_109 = arith.constant 0 : index
    %c0_110 = arith.constant 0 : index
    %234 = vector.load %arg5[%c0_109, %c0_110] : memref<10x512xf32, #tpu.memory_space<vmem>>, vector<10x512xf32>
    %235 = vector.broadcast %222 : vector<10x1xf32> to vector<10x512xf32>
    %236 = arith.mulf %235, %234 : vector<10x512xf32>
    %237 = arith.addf %233, %236 : vector<10x512xf32>
    %238 = math.tanh %237 : vector<10x512xf32>
    %239 = vector.broadcast %41 : vector<1x512xf32> to vector<10x512xf32>
    %240 = arith.mulf %238, %239 : vector<10x512xf32>
    %241 = vector.broadcast %44 : vector<1x512xf32> to vector<10x512xf32>
    %242 = arith.addf %240, %241 : vector<10x512xf32>
    %243 = vector.extract_strided_slice %242 {offsets = [0, 0], sizes = [10, 128], strides = [1, 1]} : vector<10x512xf32> to vector<10x128xf32>
    %244 = vector.extract_strided_slice %242 {offsets = [0, 128], sizes = [10, 128], strides = [1, 1]} : vector<10x512xf32> to vector<10x128xf32>
    %245 = vector.extract_strided_slice %242 {offsets = [0, 256], sizes = [10, 128], strides = [1, 1]} : vector<10x512xf32> to vector<10x128xf32>
    %246 = vector.extract_strided_slice %242 {offsets = [0, 384], sizes = [10, 128], strides = [1, 1]} : vector<10x512xf32> to vector<10x128xf32>
    %247 = arith.mulf %244, %217 : vector<10x128xf32>
    %248 = arith.mulf %243, %245 : vector<10x128xf32>
    %249 = arith.addf %247, %248 : vector<10x128xf32>
    %250 = math.tanh %249 : vector<10x128xf32>
    %251 = arith.mulf %246, %250 : vector<10x128xf32>
    %252 = arith.mulf %251, %32 : vector<10x128xf32>
    %cst_111 = arith.constant dense<0.000000e+00> : vector<10xf32>
    %253 = vector.multi_reduction <add>, %252, %cst_111 [1] : vector<10x128xf32> to vector<10xf32>
    %254 = vector.shape_cast %253 : vector<10xf32> to vector<10x1xf32>
    %255 = vector.extract_strided_slice %254 {offsets = [8, 0], sizes = [2, 1], strides = [1, 1]} : vector<10x1xf32> to vector<2x1xf32>
    %c0_112 = arith.constant 0 : index
    %c1 = arith.constant 1 : index
    %256 = vector.load %arg17[%c0_112, %c1] : memref<2x8xf32, #tpu.memory_space<vmem>>, vector<2x1xf32>
    tpu.vector_store %arg17[%c0_112, %c1], %255 {strides = array<i32>} : memref<2x8xf32, #tpu.memory_space<vmem>>, vector<2x1xf32>,
    %257 = vector.extract_strided_slice %254 {offsets = [0, 0], sizes = [8, 1], strides = [1, 1]} : vector<10x1xf32> to vector<8x1xf32>
    %258 = tpu.concatenate %46, %257 in 0 : vector<2x1xf32>, vector<8x1xf32> -> vector<10x1xf32>
    %c0_113 = arith.constant 0 : index
    %c0_114 = arith.constant 0 : index
    %259 = vector.load %arg4[%c0_113, %c0_114] : memref<10x512xf32, #tpu.memory_space<vmem>>, vector<10x512xf32>
    %260 = vector.broadcast %258 : vector<10x1xf32> to vector<10x512xf32>
    %261 = arith.mulf %260, %259 : vector<10x512xf32>
    %c0_115 = arith.constant 0 : index
    %c0_116 = arith.constant 0 : index
    %262 = vector.load %arg6[%c0_115, %c0_116] : memref<10x512xf32, #tpu.memory_space<vmem>>, vector<10x512xf32>
    %263 = arith.addf %261, %262 : vector<10x512xf32>
    %c96_117 = arith.constant 96 : index
    %c0_118 = arith.constant 0 : index
    %264 = vector.load %arg16[%c96_117, %c0_118] : memref<128x512xf32, #tpu.memory_space<vmem>>, vector<10x512xf32>
    %265 = arith.addf %263, %264 : vector<10x512xf32>
    %c0_119 = arith.constant 0 : index
    %c0_120 = arith.constant 0 : index
    %266 = vector.load %arg5[%c0_119, %c0_120] : memref<10x512xf32, #tpu.memory_space<vmem>>, vector<10x512xf32>
    %267 = vector.broadcast %254 : vector<10x1xf32> to vector<10x512xf32>
    %268 = arith.mulf %267, %266 : vector<10x512xf32>
    %269 = arith.addf %265, %268 : vector<10x512xf32>
    %270 = math.tanh %269 : vector<10x512xf32>
    %271 = vector.broadcast %41 : vector<1x512xf32> to vector<10x512xf32>
    %272 = arith.mulf %270, %271 : vector<10x512xf32>
    %273 = vector.broadcast %44 : vector<1x512xf32> to vector<10x512xf32>
    %274 = arith.addf %272, %273 : vector<10x512xf32>
    %275 = vector.extract_strided_slice %274 {offsets = [0, 0], sizes = [10, 128], strides = [1, 1]} : vector<10x512xf32> to vector<10x128xf32>
    %276 = vector.extract_strided_slice %274 {offsets = [0, 128], sizes = [10, 128], strides = [1, 1]} : vector<10x512xf32> to vector<10x128xf32>
    %277 = vector.extract_strided_slice %274 {offsets = [0, 256], sizes = [10, 128], strides = [1, 1]} : vector<10x512xf32> to vector<10x128xf32>
    %278 = vector.extract_strided_slice %274 {offsets = [0, 384], sizes = [10, 128], strides = [1, 1]} : vector<10x512xf32> to vector<10x128xf32>
    %279 = arith.mulf %276, %249 : vector<10x128xf32>
    %280 = arith.mulf %275, %277 : vector<10x128xf32>
    %281 = arith.addf %279, %280 : vector<10x128xf32>
    %282 = math.tanh %281 : vector<10x128xf32>
    %283 = arith.mulf %278, %282 : vector<10x128xf32>
    %284 = arith.mulf %283, %32 : vector<10x128xf32>
    %cst_121 = arith.constant dense<0.000000e+00> : vector<10xf32>
    %285 = vector.multi_reduction <add>, %284, %cst_121 [1] : vector<10x128xf32> to vector<10xf32>
    %286 = vector.shape_cast %285 : vector<10xf32> to vector<10x1xf32>
    %287 = vector.extract_strided_slice %286 {offsets = [8, 0], sizes = [2, 1], strides = [1, 1]} : vector<10x1xf32> to vector<2x1xf32>
    %c0_122 = arith.constant 0 : index
    %c2 = arith.constant 2 : index
    %288 = vector.load %arg17[%c0_122, %c2] : memref<2x8xf32, #tpu.memory_space<vmem>>, vector<2x1xf32>
    tpu.vector_store %arg17[%c0_122, %c2], %287 {strides = array<i32>} : memref<2x8xf32, #tpu.memory_space<vmem>>, vector<2x1xf32>,
    %289 = vector.extract_strided_slice %286 {offsets = [0, 0], sizes = [8, 1], strides = [1, 1]} : vector<10x1xf32> to vector<8x1xf32>
    %290 = tpu.concatenate %46, %289 in 0 : vector<2x1xf32>, vector<8x1xf32> -> vector<10x1xf32>
    %c0_123 = arith.constant 0 : index
    %c0_124 = arith.constant 0 : index
    %291 = vector.load %arg4[%c0_123, %c0_124] : memref<10x512xf32, #tpu.memory_space<vmem>>, vector<10x512xf32>
    %292 = vector.broadcast %290 : vector<10x1xf32> to vector<10x512xf32>
    %293 = arith.mulf %292, %291 : vector<10x512xf32>
    %c0_125 = arith.constant 0 : index
    %c0_126 = arith.constant 0 : index
    %294 = vector.load %arg6[%c0_125, %c0_126] : memref<10x512xf32, #tpu.memory_space<vmem>>, vector<10x512xf32>
    %295 = arith.addf %293, %294 : vector<10x512xf32>
    %c112_127 = arith.constant 112 : index
    %c0_128 = arith.constant 0 : index
    %296 = vector.load %arg16[%c112_127, %c0_128] : memref<128x512xf32, #tpu.memory_space<vmem>>, vector<10x512xf32>
    %297 = arith.addf %295, %296 : vector<10x512xf32>
    %c0_129 = arith.constant 0 : index
    %c0_130 = arith.constant 0 : index
    %298 = vector.load %arg5[%c0_129, %c0_130] : memref<10x512xf32, #tpu.memory_space<vmem>>, vector<10x512xf32>
    %299 = vector.broadcast %286 : vector<10x1xf32> to vector<10x512xf32>
    %300 = arith.mulf %299, %298 : vector<10x512xf32>
    %301 = arith.addf %297, %300 : vector<10x512xf32>
    %302 = math.tanh %301 : vector<10x512xf32>
    %303 = vector.broadcast %41 : vector<1x512xf32> to vector<10x512xf32>
    %304 = arith.mulf %302, %303 : vector<10x512xf32>
    %305 = vector.broadcast %44 : vector<1x512xf32> to vector<10x512xf32>
    %306 = arith.addf %304, %305 : vector<10x512xf32>
    %307 = vector.extract_strided_slice %306 {offsets = [0, 0], sizes = [10, 128], strides = [1, 1]} : vector<10x512xf32> to vector<10x128xf32>
    %308 = vector.extract_strided_slice %306 {offsets = [0, 128], sizes = [10, 128], strides = [1, 1]} : vector<10x512xf32> to vector<10x128xf32>
    %309 = vector.extract_strided_slice %306 {offsets = [0, 256], sizes = [10, 128], strides = [1, 1]} : vector<10x512xf32> to vector<10x128xf32>
    %310 = vector.extract_strided_slice %306 {offsets = [0, 384], sizes = [10, 128], strides = [1, 1]} : vector<10x512xf32> to vector<10x128xf32>
    %311 = arith.mulf %308, %281 : vector<10x128xf32>
    %312 = arith.mulf %307, %309 : vector<10x128xf32>
    %313 = arith.addf %311, %312 : vector<10x128xf32>
    %314 = math.tanh %313 : vector<10x128xf32>
    %315 = arith.mulf %310, %314 : vector<10x128xf32>
    %316 = arith.mulf %315, %32 : vector<10x128xf32>
    %cst_131 = arith.constant dense<0.000000e+00> : vector<10xf32>
    %317 = vector.multi_reduction <add>, %316, %cst_131 [1] : vector<10x128xf32> to vector<10xf32>
    %318 = vector.shape_cast %317 : vector<10xf32> to vector<10x1xf32>
    %319 = vector.extract_strided_slice %318 {offsets = [8, 0], sizes = [2, 1], strides = [1, 1]} : vector<10x1xf32> to vector<2x1xf32>
    %c0_132 = arith.constant 0 : index
    %c3 = arith.constant 3 : index
    %320 = vector.load %arg17[%c0_132, %c3] : memref<2x8xf32, #tpu.memory_space<vmem>>, vector<2x1xf32>
    tpu.vector_store %arg17[%c0_132, %c3], %319 {strides = array<i32>} : memref<2x8xf32, #tpu.memory_space<vmem>>, vector<2x1xf32>,
    %321 = vector.extract_strided_slice %318 {offsets = [0, 0], sizes = [8, 1], strides = [1, 1]} : vector<10x1xf32> to vector<8x1xf32>
    %322 = tpu.concatenate %46, %321 in 0 : vector<2x1xf32>, vector<8x1xf32> -> vector<10x1xf32>
    %c0_133 = arith.constant 0 : index
    %c0_134 = arith.constant 0 : index
    %323 = vector.load %arg4[%c0_133, %c0_134] : memref<10x512xf32, #tpu.memory_space<vmem>>, vector<10x512xf32>
    %324 = vector.broadcast %322 : vector<10x1xf32> to vector<10x512xf32>
    %325 = arith.mulf %324, %323 : vector<10x512xf32>
    %c0_135 = arith.constant 0 : index
    %c0_136 = arith.constant 0 : index
    %326 = vector.load %arg6[%c0_135, %c0_136] : memref<10x512xf32, #tpu.memory_space<vmem>>, vector<10x512xf32>
    %327 = arith.addf %325, %326 : vector<10x512xf32>
    %c0_137 = arith.constant 0 : index
    %c0_138 = arith.constant 0 : index
    %328 = vector.load %arg5[%c0_137, %c0_138] : memref<10x512xf32, #tpu.memory_space<vmem>>, vector<10x512xf32>
    %329 = vector.broadcast %318 : vector<10x1xf32> to vector<10x512xf32>
    %330 = arith.mulf %329, %328 : vector<10x512xf32>
    %331 = arith.addf %327, %330 : vector<10x512xf32>
    %332 = math.tanh %331 : vector<10x512xf32>
    %333 = vector.broadcast %41 : vector<1x512xf32> to vector<10x512xf32>
    %334 = arith.mulf %332, %333 : vector<10x512xf32>
    %335 = vector.broadcast %44 : vector<1x512xf32> to vector<10x512xf32>
    %336 = arith.addf %334, %335 : vector<10x512xf32>
    %337 = vector.extract_strided_slice %336 {offsets = [0, 0], sizes = [10, 128], strides = [1, 1]} : vector<10x512xf32> to vector<10x128xf32>
    %338 = vector.extract_strided_slice %336 {offsets = [0, 128], sizes = [10, 128], strides = [1, 1]} : vector<10x512xf32> to vector<10x128xf32>
    %339 = vector.extract_strided_slice %336 {offsets = [0, 256], sizes = [10, 128], strides = [1, 1]} : vector<10x512xf32> to vector<10x128xf32>
    %340 = vector.extract_strided_slice %336 {offsets = [0, 384], sizes = [10, 128], strides = [1, 1]} : vector<10x512xf32> to vector<10x128xf32>
    %341 = arith.mulf %338, %313 : vector<10x128xf32>
    %342 = arith.mulf %337, %339 : vector<10x128xf32>
    %343 = arith.addf %341, %342 : vector<10x128xf32>
    %344 = math.tanh %343 : vector<10x128xf32>
    %345 = arith.mulf %340, %344 : vector<10x128xf32>
    %346 = arith.mulf %345, %32 : vector<10x128xf32>
    %cst_139 = arith.constant dense<0.000000e+00> : vector<10xf32>
    %347 = vector.multi_reduction <add>, %346, %cst_139 [1] : vector<10x128xf32> to vector<10xf32>
    %348 = vector.shape_cast %347 : vector<10xf32> to vector<10x1xf32>
    %349 = vector.extract_strided_slice %348 {offsets = [8, 0], sizes = [2, 1], strides = [1, 1]} : vector<10x1xf32> to vector<2x1xf32>
    %c0_140 = arith.constant 0 : index
    %c4 = arith.constant 4 : index
    %350 = vector.load %arg17[%c0_140, %c4] : memref<2x8xf32, #tpu.memory_space<vmem>>, vector<2x1xf32>
    tpu.vector_store %arg17[%c0_140, %c4], %349 {strides = array<i32>} : memref<2x8xf32, #tpu.memory_space<vmem>>, vector<2x1xf32>,
    %351 = vector.extract_strided_slice %348 {offsets = [0, 0], sizes = [8, 1], strides = [1, 1]} : vector<10x1xf32> to vector<8x1xf32>
    %352 = tpu.concatenate %46, %351 in 0 : vector<2x1xf32>, vector<8x1xf32> -> vector<10x1xf32>
    %c0_141 = arith.constant 0 : index
    %c0_142 = arith.constant 0 : index
    %353 = vector.load %arg4[%c0_141, %c0_142] : memref<10x512xf32, #tpu.memory_space<vmem>>, vector<10x512xf32>
    %354 = vector.broadcast %352 : vector<10x1xf32> to vector<10x512xf32>
    %355 = arith.mulf %354, %353 : vector<10x512xf32>
    %c0_143 = arith.constant 0 : index
    %c0_144 = arith.constant 0 : index
    %356 = vector.load %arg6[%c0_143, %c0_144] : memref<10x512xf32, #tpu.memory_space<vmem>>, vector<10x512xf32>
    %357 = arith.addf %355, %356 : vector<10x512xf32>
    %c0_145 = arith.constant 0 : index
    %c0_146 = arith.constant 0 : index
    %358 = vector.load %arg5[%c0_145, %c0_146] : memref<10x512xf32, #tpu.memory_space<vmem>>, vector<10x512xf32>
    %359 = vector.broadcast %348 : vector<10x1xf32> to vector<10x512xf32>
    %360 = arith.mulf %359, %358 : vector<10x512xf32>
    %361 = arith.addf %357, %360 : vector<10x512xf32>
    %362 = math.tanh %361 : vector<10x512xf32>
    %363 = vector.broadcast %41 : vector<1x512xf32> to vector<10x512xf32>
    %364 = arith.mulf %362, %363 : vector<10x512xf32>
    %365 = vector.broadcast %44 : vector<1x512xf32> to vector<10x512xf32>
    %366 = arith.addf %364, %365 : vector<10x512xf32>
    %367 = vector.extract_strided_slice %366 {offsets = [0, 0], sizes = [10, 128], strides = [1, 1]} : vector<10x512xf32> to vector<10x128xf32>
    %368 = vector.extract_strided_slice %366 {offsets = [0, 128], sizes = [10, 128], strides = [1, 1]} : vector<10x512xf32> to vector<10x128xf32>
    %369 = vector.extract_strided_slice %366 {offsets = [0, 256], sizes = [10, 128], strides = [1, 1]} : vector<10x512xf32> to vector<10x128xf32>
    %370 = vector.extract_strided_slice %366 {offsets = [0, 384], sizes = [10, 128], strides = [1, 1]} : vector<10x512xf32> to vector<10x128xf32>
    %371 = arith.mulf %368, %343 : vector<10x128xf32>
    %372 = arith.mulf %367, %369 : vector<10x128xf32>
    %373 = arith.addf %371, %372 : vector<10x128xf32>
    %374 = math.tanh %373 : vector<10x128xf32>
    %375 = arith.mulf %370, %374 : vector<10x128xf32>
    %376 = arith.mulf %375, %32 : vector<10x128xf32>
    %cst_147 = arith.constant dense<0.000000e+00> : vector<10xf32>
    %377 = vector.multi_reduction <add>, %376, %cst_147 [1] : vector<10x128xf32> to vector<10xf32>
    %378 = vector.shape_cast %377 : vector<10xf32> to vector<10x1xf32>
    %379 = vector.extract_strided_slice %378 {offsets = [8, 0], sizes = [2, 1], strides = [1, 1]} : vector<10x1xf32> to vector<2x1xf32>
    %c0_148 = arith.constant 0 : index
    %c5 = arith.constant 5 : index
    %380 = vector.load %arg17[%c0_148, %c5] : memref<2x8xf32, #tpu.memory_space<vmem>>, vector<2x1xf32>
    tpu.vector_store %arg17[%c0_148, %c5], %379 {strides = array<i32>} : memref<2x8xf32, #tpu.memory_space<vmem>>, vector<2x1xf32>,
    %381 = vector.extract_strided_slice %378 {offsets = [0, 0], sizes = [8, 1], strides = [1, 1]} : vector<10x1xf32> to vector<8x1xf32>
    %382 = tpu.concatenate %46, %381 in 0 : vector<2x1xf32>, vector<8x1xf32> -> vector<10x1xf32>
    %c0_149 = arith.constant 0 : index
    %c0_150 = arith.constant 0 : index
    %383 = vector.load %arg4[%c0_149, %c0_150] : memref<10x512xf32, #tpu.memory_space<vmem>>, vector<10x512xf32>
    %384 = vector.broadcast %382 : vector<10x1xf32> to vector<10x512xf32>
    %385 = arith.mulf %384, %383 : vector<10x512xf32>
    %c0_151 = arith.constant 0 : index
    %c0_152 = arith.constant 0 : index
    %386 = vector.load %arg6[%c0_151, %c0_152] : memref<10x512xf32, #tpu.memory_space<vmem>>, vector<10x512xf32>
    %387 = arith.addf %385, %386 : vector<10x512xf32>
    %c0_153 = arith.constant 0 : index
    %c0_154 = arith.constant 0 : index
    %388 = vector.load %arg5[%c0_153, %c0_154] : memref<10x512xf32, #tpu.memory_space<vmem>>, vector<10x512xf32>
    %389 = vector.broadcast %378 : vector<10x1xf32> to vector<10x512xf32>
    %390 = arith.mulf %389, %388 : vector<10x512xf32>
    %391 = arith.addf %387, %390 : vector<10x512xf32>
    %392 = math.tanh %391 : vector<10x512xf32>
    %393 = vector.broadcast %41 : vector<1x512xf32> to vector<10x512xf32>
    %394 = arith.mulf %392, %393 : vector<10x512xf32>
    %395 = vector.broadcast %44 : vector<1x512xf32> to vector<10x512xf32>
    %396 = arith.addf %394, %395 : vector<10x512xf32>
    %397 = vector.extract_strided_slice %396 {offsets = [0, 0], sizes = [10, 128], strides = [1, 1]} : vector<10x512xf32> to vector<10x128xf32>
    %398 = vector.extract_strided_slice %396 {offsets = [0, 128], sizes = [10, 128], strides = [1, 1]} : vector<10x512xf32> to vector<10x128xf32>
    %399 = vector.extract_strided_slice %396 {offsets = [0, 256], sizes = [10, 128], strides = [1, 1]} : vector<10x512xf32> to vector<10x128xf32>
    %400 = vector.extract_strided_slice %396 {offsets = [0, 384], sizes = [10, 128], strides = [1, 1]} : vector<10x512xf32> to vector<10x128xf32>
    %401 = arith.mulf %398, %373 : vector<10x128xf32>
    %402 = arith.mulf %397, %399 : vector<10x128xf32>
    %403 = arith.addf %401, %402 : vector<10x128xf32>
    %404 = math.tanh %403 : vector<10x128xf32>
    %405 = arith.mulf %400, %404 : vector<10x128xf32>
    %406 = arith.mulf %405, %32 : vector<10x128xf32>
    %cst_155 = arith.constant dense<0.000000e+00> : vector<10xf32>
    %407 = vector.multi_reduction <add>, %406, %cst_155 [1] : vector<10x128xf32> to vector<10xf32>
    %408 = vector.shape_cast %407 : vector<10xf32> to vector<10x1xf32>
    %409 = vector.extract_strided_slice %408 {offsets = [8, 0], sizes = [2, 1], strides = [1, 1]} : vector<10x1xf32> to vector<2x1xf32>
    %c0_156 = arith.constant 0 : index
    %c6 = arith.constant 6 : index
    %410 = vector.load %arg17[%c0_156, %c6] : memref<2x8xf32, #tpu.memory_space<vmem>>, vector<2x1xf32>
    tpu.vector_store %arg17[%c0_156, %c6], %409 {strides = array<i32>} : memref<2x8xf32, #tpu.memory_space<vmem>>, vector<2x1xf32>,
    %411 = vector.extract_strided_slice %408 {offsets = [0, 0], sizes = [8, 1], strides = [1, 1]} : vector<10x1xf32> to vector<8x1xf32>
    %412 = tpu.concatenate %46, %411 in 0 : vector<2x1xf32>, vector<8x1xf32> -> vector<10x1xf32>
    %c0_157 = arith.constant 0 : index
    %c0_158 = arith.constant 0 : index
    %413 = vector.load %arg4[%c0_157, %c0_158] : memref<10x512xf32, #tpu.memory_space<vmem>>, vector<10x512xf32>
    %414 = vector.broadcast %412 : vector<10x1xf32> to vector<10x512xf32>
    %415 = arith.mulf %414, %413 : vector<10x512xf32>
    %c0_159 = arith.constant 0 : index
    %c0_160 = arith.constant 0 : index
    %416 = vector.load %arg6[%c0_159, %c0_160] : memref<10x512xf32, #tpu.memory_space<vmem>>, vector<10x512xf32>
    %417 = arith.addf %415, %416 : vector<10x512xf32>
    %c0_161 = arith.constant 0 : index
    %c0_162 = arith.constant 0 : index
    %418 = vector.load %arg5[%c0_161, %c0_162] : memref<10x512xf32, #tpu.memory_space<vmem>>, vector<10x512xf32>
    %419 = vector.broadcast %408 : vector<10x1xf32> to vector<10x512xf32>
    %420 = arith.mulf %419, %418 : vector<10x512xf32>
    %421 = arith.addf %417, %420 : vector<10x512xf32>
    %422 = math.tanh %421 : vector<10x512xf32>
    %423 = vector.broadcast %41 : vector<1x512xf32> to vector<10x512xf32>
    %424 = arith.mulf %422, %423 : vector<10x512xf32>
    %425 = vector.broadcast %44 : vector<1x512xf32> to vector<10x512xf32>
    %426 = arith.addf %424, %425 : vector<10x512xf32>
    %427 = vector.extract_strided_slice %426 {offsets = [0, 0], sizes = [10, 128], strides = [1, 1]} : vector<10x512xf32> to vector<10x128xf32>
    %428 = vector.extract_strided_slice %426 {offsets = [0, 128], sizes = [10, 128], strides = [1, 1]} : vector<10x512xf32> to vector<10x128xf32>
    %429 = vector.extract_strided_slice %426 {offsets = [0, 256], sizes = [10, 128], strides = [1, 1]} : vector<10x512xf32> to vector<10x128xf32>
    %430 = vector.extract_strided_slice %426 {offsets = [0, 384], sizes = [10, 128], strides = [1, 1]} : vector<10x512xf32> to vector<10x128xf32>
    %431 = arith.mulf %428, %403 : vector<10x128xf32>
    %432 = arith.mulf %427, %429 : vector<10x128xf32>
    %433 = arith.addf %431, %432 : vector<10x128xf32>
    %434 = math.tanh %433 : vector<10x128xf32>
    %435 = arith.mulf %430, %434 : vector<10x128xf32>
    %436 = arith.mulf %435, %32 : vector<10x128xf32>
    %cst_163 = arith.constant dense<0.000000e+00> : vector<10xf32>
    %437 = vector.multi_reduction <add>, %436, %cst_163 [1] : vector<10x128xf32> to vector<10xf32>
    %438 = vector.shape_cast %437 : vector<10xf32> to vector<10x1xf32>
    %439 = vector.extract_strided_slice %438 {offsets = [8, 0], sizes = [2, 1], strides = [1, 1]} : vector<10x1xf32> to vector<2x1xf32>
    %c0_164 = arith.constant 0 : index
    %c7 = arith.constant 7 : index
    %440 = vector.load %arg17[%c0_164, %c7] : memref<2x8xf32, #tpu.memory_space<vmem>>, vector<2x1xf32>
    tpu.vector_store %arg17[%c0_164, %c7], %439 {strides = array<i32>} : memref<2x8xf32, #tpu.memory_space<vmem>>, vector<2x1xf32>,
    %c0_165 = arith.constant 0 : index
    %c0_166 = arith.constant 0 : index
    %441 = vector.load %arg17[%c0_165, %c0_166] : memref<2x8xf32, #tpu.memory_space<vmem>>, vector<2x8xf32>
    %c0_167 = arith.constant 0 : index
    %c0_168 = arith.constant 0 : index
    %442 = vector.load %arg1[%c0_167, %c0_168] : memref<2x2xi32, #tpu.memory_space<vmem>>, vector<2x1xi32>
    %c0_169 = arith.constant 0 : index
    %c1_170 = arith.constant 1 : index
    %443 = vector.load %arg1[%c0_169, %c1_170] : memref<2x2xi32, #tpu.memory_space<vmem>>, vector<2x1xi32>
    %c0_171 = arith.constant 0 : index
    %c0_172 = arith.constant 0 : index
    %444 = vector.load %arg2[%c0_171, %c0_172] : memref<2x1xi32, #tpu.memory_space<vmem>>, vector<2x1xi32>
    %445 = tpu.iota {dimensions = array<i32: 1>} : vector<2x10xi32>
    %446 = tpu.iota {dimensions = array<i32: 1>} : vector<2x24xi32>
    %447 = vector.broadcast %442 : vector<2x1xi32> to vector<2x10xi32>
    %448 = arith.cmpi eq, %445, %447 : vector<2x10xi32>
    %449 = arith.extui %448 : vector<2x10xi1> to vector<2x10xi32>
    %450 = arith.sitofp %449 : vector<2x10xi32> to vector<2x10xf32>
    %451 = vector.broadcast %443 : vector<2x1xi32> to vector<2x10xi32>
    %452 = arith.cmpi eq, %445, %451 : vector<2x10xi32>
    %453 = arith.extui %452 : vector<2x10xi1> to vector<2x10xi32>
    %454 = arith.sitofp %453 : vector<2x10xi32> to vector<2x10xf32>
    %455 = vector.broadcast %444 : vector<2x1xi32> to vector<2x24xi32>
    %456 = arith.cmpi eq, %446, %455 : vector<2x24xi32>
    %457 = arith.extui %456 : vector<2x24xi1> to vector<2x24xi32>
    %458 = arith.sitofp %457 : vector<2x24xi32> to vector<2x24xf32>
    %c0_173 = arith.constant 0 : index
    %c0_174 = arith.constant 0 : index
    %459 = vector.load %arg8[%c0_173, %c0_174] : memref<8x64xf32, #tpu.memory_space<vmem>>, vector<8x64xf32>
    %cst_175 = arith.constant dense<0.000000e+00> : vector<2x64xf32>
    %460 = tpu.matmul %441, %459, %cst_175 {dimension_numbers = #tpu.dot_dimension_numbers<[1], [0], [0], [1], [0, 0, 1, 1], [], []>} : vector<2x8xf32>, vector<8x64xf32>, vector<2x64xf32> -> vector<2x64xf32>
    %c0_176 = arith.constant 0 : index
    %c0_177 = arith.constant 0 : index
    %461 = vector.load %arg9[%c0_176, %c0_177] : memref<10x64xf32, #tpu.memory_space<vmem>>, vector<10x64xf32>
    %cst_178 = arith.constant dense<0.000000e+00> : vector<2x64xf32>
    %462 = tpu.matmul %450, %461, %cst_178 {dimension_numbers = #tpu.dot_dimension_numbers<[1], [0], [0], [1], [0, 0, 1, 1], [], []>} : vector<2x10xf32>, vector<10x64xf32>, vector<2x64xf32> -> vector<2x64xf32>
    %463 = arith.addf %460, %462 : vector<2x64xf32>
    %c0_179 = arith.constant 0 : index
    %c0_180 = arith.constant 0 : index
    %464 = vector.load %arg10[%c0_179, %c0_180] : memref<10x64xf32, #tpu.memory_space<vmem>>, vector<10x64xf32>
    %cst_181 = arith.constant dense<0.000000e+00> : vector<2x64xf32>
    %465 = tpu.matmul %454, %464, %cst_181 {dimension_numbers = #tpu.dot_dimension_numbers<[1], [0], [0], [1], [0, 0, 1, 1], [], []>} : vector<2x10xf32>, vector<10x64xf32>, vector<2x64xf32> -> vector<2x64xf32>
    %466 = arith.addf %463, %465 : vector<2x64xf32>
    %c0_182 = arith.constant 0 : index
    %c0_183 = arith.constant 0 : index
    %467 = vector.load %arg11[%c0_182, %c0_183] : memref<24x64xf32, #tpu.memory_space<vmem>>, vector<24x64xf32>
    %cst_184 = arith.constant dense<0.000000e+00> : vector<2x64xf32>
    %468 = tpu.matmul %458, %467, %cst_184 {dimension_numbers = #tpu.dot_dimension_numbers<[1], [0], [0], [1], [0, 0, 1, 1], [], []>} : vector<2x24xf32>, vector<24x64xf32>, vector<2x64xf32> -> vector<2x64xf32>
    %469 = arith.addf %466, %468 : vector<2x64xf32>
    %c0_185 = arith.constant 0 : index
    %c0_186 = arith.constant 0 : index
    %470 = vector.load %arg12[%c0_185, %c0_186] : memref<1x64xf32, #tpu.memory_space<vmem>>, vector<1x64xf32>
    %471 = vector.broadcast %470 : vector<1x64xf32> to vector<2x64xf32>
    %472 = arith.addf %469, %471 : vector<2x64xf32>
    %cst_187 = arith.constant 0.000000e+00 : f32
    %473 = vector.broadcast %cst_187 : f32 to vector<2x64xf32>
    %474 = arith.maximumf %472, %473 : vector<2x64xf32>
    %c0_188 = arith.constant 0 : index
    %c0_189 = arith.constant 0 : index
    %475 = vector.load %arg13[%c0_188, %c0_189] : memref<1x64xf32, #tpu.memory_space<vmem>>, vector<1x64xf32>
    %476 = vector.broadcast %475 : vector<1x64xf32> to vector<2x64xf32>
    %477 = arith.mulf %474, %476 : vector<2x64xf32>
    %cst_190 = arith.constant dense<0.000000e+00> : vector<2xf32>
    %478 = vector.multi_reduction <add>, %477, %cst_190 [1] : vector<2x64xf32> to vector<2xf32>
    %479 = vector.shape_cast %478 : vector<2xf32> to vector<2x1xf32>
    %c0_191 = arith.constant 0 : index
    %c0_192 = arith.constant 0 : index
    %480 = vector.load %arg14[%c0_191, %c0_192] : memref<1x1xf32, #tpu.memory_space<vmem>>, vector<1x1xf32>
    %481 = vector.broadcast %480 : vector<1x1xf32> to vector<2x1xf32>
    %482 = arith.addf %479, %481 : vector<2x1xf32>
    %c0_193 = arith.constant 0 : index
    %c0_194 = arith.constant 0 : index
    %483 = vector.load %arg15[%c0_193, %c0_194] : memref<2x1xf32, #tpu.memory_space<vmem>>, vector<2x1xf32>
    tpu.vector_store %arg15[%c0_193, %c0_194], %482 {strides = array<i32>} : memref<2x1xf32, #tpu.memory_space<vmem>>, vector<2x1xf32>,
    return
  }
}

</mosaic_0001>

<llo_original>
// kernel: tpu_custom_call.1
$region0: #{tpu_custom_call.1}
  #allocation0 [shape = 'u32[]', space=smem, size = 0x4, offset = 0x4, fixed_abs, tag = 'smem constant byte address 0x4 - core index']
  #allocation1 [shape = 'u32[144,128]{1,0:T(1,128)}', space=vmem, size = 0x12000, scoped, tag = 'internal scratch']
  #allocation2 [shape = 'f32[128,512]{1,0:T(8,128)}', space=vmem, size = 0x40000, scoped, tag = 'scratch operand']
  #allocation3 [shape = 'f32[2,8]{1,0:T(2,128)}', space=vmem, size = 0x400, scoped, tag = 'scratch operand']
  #allocation4 [shape = 'f32[1,1]{1,0:T(1,128)S(1)}', space=vmem, size = 0x200, scoped, tag = 'scoped memory for tpu_custom_call.1']
  %s0 = inlined_call_operand.vmem [shape: f32[128,64], index: 0, kind: input, shape index: {}]
  %s1 = inlined_call_operand.hbm [shape: s32[2,2], index: 1, kind: input, shape index: {}]
  %s2 = inlined_call_operand.vmem [shape: s32[2,1], index: 2, kind: input, shape index: {}]
  %s3 = inlined_call_operand.hbm [shape: f32[64,512], index: 3, kind: input, shape index: {}]
  %s4 = inlined_call_operand.vmem [shape: f32[10,512], index: 4, kind: input, shape index: {}]
  %s5 = inlined_call_operand.vmem [shape: f32[10,512], index: 5, kind: input, shape index: {}]
  %s6 = inlined_call_operand.vmem [shape: f32[10,512], index: 6, kind: input, shape index: {}]
  %s7 = inlined_call_operand.hbm [shape: f32[10,128], index: 7, kind: input, shape index: {}]
  %s8 = inlined_call_operand.hbm [shape: f32[8,64], index: 8, kind: input, shape index: {}]
  %s9 = inlined_call_operand.hbm [shape: f32[10,64], index: 9, kind: input, shape index: {}]
  %s10 = inlined_call_operand.hbm [shape: f32[10,64], index: 10, kind: input, shape index: {}]
  %s11 = inlined_call_operand.vmem [shape: f32[24,64], index: 11, kind: input, shape index: {}]
  %s12 = inlined_call_operand.vmem [shape: f32[1,64], index: 12, kind: input, shape index: {}]
  %s13 = inlined_call_operand.vmem [shape: f32[1,64], index: 13, kind: input, shape index: {}]
  %s14 = inlined_call_operand.<no memory space> [shape: f32[1,1], index: 14, kind: input, shape index: {}]
  %s15 = inlined_call_operand.vmem [shape: f32[2,1], index: 15, kind: output, shape index: {}]
  %s16 = sld [smem:[#allocation0]]
  $region94: #{tpu_custom_call.1} parent=0
    _
  %s18 = ssub.s32 1, %s16
  %s19 = scalar_select 0, %s18, %s16
  %v20 = vstv %s14
  %21 = vst [vmem:[#allocation4] sm:$0x1] %v20
  $region1: #{tpu_custom_call.1} parent=0
    #allocation5 [shape = 'u8[1024]{0}', space=vmem, size = 0x400, scoped, tag = 'input window, operand 1, single buffered']
    #allocation6 [shape = 's32[1]{0}', space=sflag, size = 0x4, scoped, tag = 'scoped memory for tpu_custom_call.1']
    #allocation7 [shape = 'u8[131072]{0}', space=vmem, size = 0x20000, scoped, tag = 'input window, operand 3, single buffered']
    #allocation8 [shape = 's32[1]{0}', space=sflag, size = 0x4, scoped, tag = 'scoped memory for tpu_custom_call.1']
    #allocation9 [shape = 'u8[8192]{0}', space=vmem, size = 0x2000, scoped, tag = 'input window, operand 7, single buffered']
    #allocation10 [shape = 'u8[4096]{0}', space=vmem, size = 0x1000, scoped, tag = 'input window, operand 8, single buffered']
    #allocation11 [shape = 's32[1]{0}', space=sflag, size = 0x4, scoped, tag = 'scoped memory for tpu_custom_call.1']
    #allocation12 [shape = 'u8[8192]{0}', space=vmem, size = 0x2000, scoped, tag = 'input window, operand 9, single buffered']
    #allocation13 [shape = 'u8[8192]{0}', space=vmem, size = 0x2000, scoped, tag = 'input window, operand 10, single buffered']
    #allocation14 [shape = 's32[1]{0}', space=sflag, size = 0x4, scoped, tag = 'scoped memory for tpu_custom_call.1']
    %22 = vsyncpa [#allocation6], 0
    %23 = vsyncpa [#allocation8], 0
    %24 = vsyncpa [#allocation11], 0
    %25 = vsyncpa [#allocation14], 0
    // Predicated region
    $region2: #{tpu_custom_call.1} parent=1 // pred_check
      _
    $region3: #{tpu_custom_call.1} parent=1 // pred_check_branch
      %27 = sbr.rel (0) target = $region5
    $region4: #{tpu_custom_call.1} parent=1 // pred_region
      _
    $region5: #{tpu_custom_call.1} parent=1 // pred_fallthru
      _
    // Predicated region
    $region6: #{tpu_custom_call.1} parent=1 // pred_check
      _
    $region7: #{tpu_custom_call.1} parent=1 // pred_check_branch
      %29 = sbr.rel (0) target = $region9
    $region8: #{tpu_custom_call.1} parent=1 // pred_region
      %s31 = ssub.s32 32, 32
      %32 = vsyncadd [#allocation6], %s31
      %s34 = sshll.u32 [#allocation5], 4
      %s35 = int_to_ptr.vmem [resolvable:$true] %s34
      %37 = dma.hbm_to_vmem [thread:$0]  %s1, 32, %s35, [#allocation6]
    $region9: #{tpu_custom_call.1} parent=1 // pred_fallthru
      _
    // Predicated region
    $region10: #{tpu_custom_call.1} parent=1 // pred_check
      _
    $region11: #{tpu_custom_call.1} parent=1 // pred_check_branch
      %39 = sbr.rel (0) target = $region13
    $region12: #{tpu_custom_call.1} parent=1 // pred_region
      _
    $region13: #{tpu_custom_call.1} parent=1 // pred_fallthru
      _
    // Predicated region
    $region14: #{tpu_custom_call.1} parent=1 // pred_check
      _
    $region15: #{tpu_custom_call.1} parent=1 // pred_check_branch
      %41 = sbr.rel (0) target = $region17
    $region16: #{tpu_custom_call.1} parent=1 // pred_region
      %s43 = ssub.s32 4096, 4096
      %44 = vsyncadd [#allocation8], %s43
      %s45 = sshll.u32 [#allocation7], 4
      %s46 = int_to_ptr.vmem [resolvable:$true] %s45
      %51 = dma.hbm_to_vmem [thread:$0]  %s3, 4096, %s46, [#allocation8], 512, 512, 32
    $region17: #{tpu_custom_call.1} parent=1 // pred_fallthru
      _
    // Predicated region
    $region18: #{tpu_custom_call.1} parent=1 // pred_check
      _
    $region19: #{tpu_custom_call.1} parent=1 // pred_check_branch
      %53 = sbr.rel (0) target = $region21
    $region20: #{tpu_custom_call.1} parent=1 // pred_region
      _
    $region21: #{tpu_custom_call.1} parent=1 // pred_fallthru
      _
    // Predicated region
    $region22: #{tpu_custom_call.1} parent=1 // pred_check
      _
    $region23: #{tpu_custom_call.1} parent=1 // pred_check_branch
      %55 = sbr.rel (0) target = $region25
    $region24: #{tpu_custom_call.1} parent=1 // pred_region
      _
    $region25: #{tpu_custom_call.1} parent=1 // pred_fallthru
      _
    // Predicated region
    $region26: #{tpu_custom_call.1} parent=1 // pred_check
      _
    $region27: #{tpu_custom_call.1} parent=1 // pred_check_branch
      %57 = sbr.rel (0) target = $region29
    $region28: #{tpu_custom_call.1} parent=1 // pred_region
      _
    $region29: #{tpu_custom_call.1} parent=1 // pred_fallthru
      _
    // Predicated region
    $region30: #{tpu_custom_call.1} parent=1 // pred_check
      _
    $region31: #{tpu_custom_call.1} parent=1 // pred_check_branch
      %59 = sbr.rel (0) target = $region33
    $region32: #{tpu_custom_call.1} parent=1 // pred_region
      %s61 = ssub.s32 256, 256
      %62 = vsyncadd [#allocation8], %s61
      %s63 = sshll.u32 [#allocation9], 4
      %s64 = int_to_ptr.vmem [resolvable:$true] %s63
      %69 = dma.hbm_to_vmem [thread:$0]  %s7, 256, %s64, [#allocation8], 128, 128, 8
    $region33: #{tpu_custom_call.1} parent=1 // pred_fallthru
      _
    // Predicated region
    $region34: #{tpu_custom_call.1} parent=1 // pred_check
      _
    $region35: #{tpu_custom_call.1} parent=1 // pred_check_branch
      %71 = sbr.rel (0) target = $region37
    $region36: #{tpu_custom_call.1} parent=1 // pred_region
      %s73 = ssub.s32 128, 128
      %74 = vsyncadd [#allocation11], %s73
      %s76 = sshll.u32 [#allocation10], 4
      %s77 = int_to_ptr.vmem [resolvable:$true] %s76
      %79 = dma.hbm_to_vmem [thread:$0]  %s8, 128, %s77, [#allocation11]
    $region37: #{tpu_custom_call.1} parent=1 // pred_fallthru
      _
    // Predicated region
    $region38: #{tpu_custom_call.1} parent=1 // pred_check
      _
    $region39: #{tpu_custom_call.1} parent=1 // pred_check_branch
      %81 = sbr.rel (0) target = $region41
    $region40: #{tpu_custom_call.1} parent=1 // pred_region
      %s83 = ssub.s32 256, 256
      %84 = vsyncadd [#allocation11], %s83
      %s85 = sshll.u32 [#allocation12], 4
      %s86 = int_to_ptr.vmem [resolvable:$true] %s85
      %91 = dma.hbm_to_vmem [thread:$0]  %s9, 256, %s86, [#allocation11], 128, 128, 8
    $region41: #{tpu_custom_call.1} parent=1 // pred_fallthru
      _
    // Predicated region
    $region42: #{tpu_custom_call.1} parent=1 // pred_check
      _
    $region43: #{tpu_custom_call.1} parent=1 // pred_check_branch
      %93 = sbr.rel (0) target = $region45
    $region44: #{tpu_custom_call.1} parent=1 // pred_region
      %s95 = ssub.s32 256, 256
      %96 = vsyncadd [#allocation14], %s95
      %s97 = sshll.u32 [#allocation13], 4
      %s98 = int_to_ptr.vmem [resolvable:$true] %s97
      %103 = dma.hbm_to_vmem [thread:$0]  %s10, 256, %s98, [#allocation14], 128, 128, 8
    $region45: #{tpu_custom_call.1} parent=1 // pred_fallthru
      _
    // Predicated region
    $region46: #{tpu_custom_call.1} parent=1 // pred_check
      _
    $region47: #{tpu_custom_call.1} parent=1 // pred_check_branch
      %105 = sbr.rel (0) target = $region49
    $region48: #{tpu_custom_call.1} parent=1 // pred_region
      _
    $region49: #{tpu_custom_call.1} parent=1 // pred_fallthru
      _
    // Predicated region
    $region50: #{tpu_custom_call.1} parent=1 // pred_check
      _
    $region51: #{tpu_custom_call.1} parent=1 // pred_check_branch
      %107 = sbr.rel (0) target = $region53
    $region52: #{tpu_custom_call.1} parent=1 // pred_region
      _
    $region53: #{tpu_custom_call.1} parent=1 // pred_fallthru
      _
    // Predicated region
    $region54: #{tpu_custom_call.1} parent=1 // pred_check
      _
    $region55: #{tpu_custom_call.1} parent=1 // pred_check_branch
      %109 = sbr.rel (0) target = $region57
    $region56: #{tpu_custom_call.1} parent=1 // pred_region
      _
    $region57: #{tpu_custom_call.1} parent=1 // pred_fallthru
      _
    // Predicated region
    $region58: #{tpu_custom_call.1} parent=1 // pred_check
      _
    $region59: #{tpu_custom_call.1} parent=1 // pred_check_branch
      %111 = sbr.rel (0) target = $region61
    $region60: #{tpu_custom_call.1} parent=1 // pred_region
      _
    $region61: #{tpu_custom_call.1} parent=1 // pred_fallthru
      _
    // Predicated region
    $region62: #{tpu_custom_call.1} parent=1 // pred_check
      _
    $region63: #{tpu_custom_call.1} parent=1 // pred_check_branch
      %113 = sbr.rel (0) target = $region65
    $region64: #{tpu_custom_call.1} parent=1 // pred_region
      %114 = dma.done [#allocation6], 32
    $region65: #{tpu_custom_call.1} parent=1 // pred_fallthru
      _
    // Predicated region
    $region66: #{tpu_custom_call.1} parent=1 // pred_check
      _
    $region67: #{tpu_custom_call.1} parent=1 // pred_check_branch
      %116 = sbr.rel (0) target = $region69
    $region68: #{tpu_custom_call.1} parent=1 // pred_region
      %117 = dma.done [#allocation8], 4096
    $region69: #{tpu_custom_call.1} parent=1 // pred_fallthru
      _
    // Predicated region
    $region70: #{tpu_custom_call.1} parent=1 // pred_check
      _
    $region71: #{tpu_custom_call.1} parent=1 // pred_check_branch
      %119 = sbr.rel (0) target = $region73
    $region72: #{tpu_custom_call.1} parent=1 // pred_region
      %120 = dma.done [#allocation8], 256
    $region73: #{tpu_custom_call.1} parent=1 // pred_fallthru
      _
    // Predicated region
    $region74: #{tpu_custom_call.1} parent=1 // pred_check
      _
    $region75: #{tpu_custom_call.1} parent=1 // pred_check_branch
      %122 = sbr.rel (0) target = $region77
    $region76: #{tpu_custom_call.1} parent=1 // pred_region
      %123 = dma.done [#allocation11], 128
    $region77: #{tpu_custom_call.1} parent=1 // pred_fallthru
      _
    // Predicated region
    $region78: #{tpu_custom_call.1} parent=1 // pred_check
      _
    $region79: #{tpu_custom_call.1} parent=1 // pred_check_branch
      %125 = sbr.rel (0) target = $region81
    $region80: #{tpu_custom_call.1} parent=1 // pred_region
      %126 = dma.done [#allocation11], 256
    $region81: #{tpu_custom_call.1} parent=1 // pred_fallthru
      _
    // Predicated region
    $region82: #{tpu_custom_call.1} parent=1 // pred_check
      _
    $region83: #{tpu_custom_call.1} parent=1 // pred_check_branch
      %128 = sbr.rel (0) target = $region85
    $region84: #{tpu_custom_call.1} parent=1 // pred_region
      %129 = dma.done [#allocation14], 256
    $region85: #{tpu_custom_call.1} parent=1 // pred_fallthru
      _
    %v130 = vld [vmem:[%s0] sm:$0xff]
    %v131 = vld [vmem:[%s0 + $0x8] sm:$0xff]
    %v132 = vld [vmem:[#allocation7] sm:$0xff]
    %v133 = vld [vmem:[#allocation7 + $0x8] sm:$0xff]
    %v134 = vld [vmem:[#allocation7 + $0x10] sm:$0xff]
    %v135 = vld [vmem:[#allocation7 + $0x18] sm:$0xff]
    %v136 = vld [vmem:[#allocation7 + $0x20] sm:$0xff]
    %v137 = vld [vmem:[#allocation7 + $0x28] sm:$0xff]
    %v138 = vld [vmem:[#allocation7 + $0x30] sm:$0xff]
    %v139 = vld [vmem:[#allocation7 + $0x38] sm:$0xff]
    %v140 = vld [vmem:[#allocation7 + $0x40] sm:$0xff]
    %v141 = vld [vmem:[#allocation7 + $0x48] sm:$0xff]
    %v142 = vld [vmem:[#allocation7 + $0x50] sm:$0xff]
    %v143 = vld [vmem:[#allocation7 + $0x58] sm:$0xff]
    %v144 = vld [vmem:[#allocation7 + $0x60] sm:$0xff]
    %v145 = vld [vmem:[#allocation7 + $0x68] sm:$0xff]
    %v146 = vld [vmem:[#allocation7 + $0x70] sm:$0xff]
    %v147 = vld [vmem:[#allocation7 + $0x78] sm:$0xff]
    %v148 = vld [vmem:[#allocation7 + $0x80] sm:$0xff]
    %v149 = vld [vmem:[#allocation7 + $0x88] sm:$0xff]
    %v150 = vld [vmem:[#allocation7 + $0x90] sm:$0xff]
    %v151 = vld [vmem:[#allocation7 + $0x98] sm:$0xff]
    %v152 = vld [vmem:[#allocation7 + $0xa0] sm:$0xff]
    %v153 = vld [vmem:[#allocation7 + $0xa8] sm:$0xff]
    %v154 = vld [vmem:[#allocation7 + $0xb0] sm:$0xff]
    %v155 = vld [vmem:[#allocation7 + $0xb8] sm:$0xff]
    %v156 = vld [vmem:[#allocation7 + $0xc0] sm:$0xff]
    %v157 = vld [vmem:[#allocation7 + $0xc8] sm:$0xff]
    %v158 = vld [vmem:[#allocation7 + $0xd0] sm:$0xff]
    %v159 = vld [vmem:[#allocation7 + $0xd8] sm:$0xff]
    %v160 = vld [vmem:[#allocation7 + $0xe0] sm:$0xff]
    %v161 = vld [vmem:[#allocation7 + $0xe8] sm:$0xff]
    %v162 = vld [vmem:[#allocation7 + $0xf0] sm:$0xff]
    %v163 = vld [vmem:[#allocation7 + $0xf8] sm:$0xff]
    %vm164 = vcmask 523264
    %v166 = vsel %vm164, %v130, 0
    %v169 = vsel %vm164, %v131, 0
    %171 = vmatprep.subr.mxu0 0.0
    %172 = vmatpush1.msra.mxu0 0.0
    %173 = vmatprep.subr.mxu0 0.0
    %174 = vmatpush1.msra.mxu0 0.0
    %175 = vmatprep.subr.mxu0 0.0
    %176 = vmatpush1.msra.mxu0 0.0
    %177 = vmatprep.subr.mxu0 0.0
    %178 = vmatpush1.msra.mxu0 0.0
    %179 = vmatprep.subr.mxu0 0.0
    %180 = vmatpush1.msra.mxu0 0.0
    %181 = vmatprep.subr.mxu0 0.0
    %182 = vmatpush1.msra.mxu0 0.0
    %183 = vmatprep.subr.mxu0 0.0
    %184 = vmatpush1.msra.mxu0 0.0
    %185 = vmatprep.subr.mxu0 0.0
    %186 = vmatpush1.msra.mxu0 0.0
    %187 = vmatprep.subr.mxu0 %v161
    %188 = vmatpush1.msra.mxu0 %v160
    %189 = vmatprep.subr.mxu0 %v157
    %190 = vmatpush1.msra.mxu0 %v156
    %191 = vmatprep.subr.mxu0 %v153
    %192 = vmatpush1.msra.mxu0 %v152
    %193 = vmatprep.subr.mxu0 %v149
    %194 = vmatpush1.msra.mxu0 %v148
    %195 = vmatprep.subr.mxu0 %v145
    %196 = vmatpush1.msra.mxu0 %v144
    %197 = vmatprep.subr.mxu0 %v141
    %198 = vmatpush1.msra.mxu0 %v140
    %199 = vmatprep.subr.mxu0 %v137
    %200 = vmatpush1.msra.mxu0 %v136
    %201 = vmatprep.subr.mxu0 %v133
    %202 = vmatpush1.msra.mxu0 %v132
    %203 = vmatprep.subr.mxu0 0.0
    %204 = vmatpush2.msra.mxu0 0.0
    %205 = vmatprep.subr.mxu0 0.0
    %206 = vmatpush2.msra.mxu0 0.0
    %207 = vmatprep.subr.mxu0 0.0
    %208 = vmatpush2.msra.mxu0 0.0
    %209 = vmatprep.subr.mxu0 0.0
    %210 = vmatpush2.msra.mxu0 0.0
    %211 = vmatprep.subr.mxu0 0.0
    %212 = vmatpush2.msra.mxu0 0.0
    %213 = vmatprep.subr.mxu0 0.0
    %214 = vmatpush2.msra.mxu0 0.0
    %215 = vmatprep.subr.mxu0 0.0
    %216 = vmatpush2.msra.mxu0 0.0
    %217 = vmatprep.subr.mxu0 0.0
    %218 = vmatpush2.msra.mxu0 0.0
    %219 = vmatprep.subr.mxu0 0.0
    %220 = vmatpush2.msra.mxu0 0.0
    %221 = vmatprep.subr.mxu0 0.0
    %222 = vmatpush2.msra.mxu0 0.0
    %223 = vmatprep.subr.mxu0 0.0
    %224 = vmatpush2.msra.mxu0 0.0
    %225 = vmatprep.subr.mxu0 0.0
    %226 = vmatpush2.msra.mxu0 0.0
    %227 = vmatprep.subr.mxu0 0.0
    %228 = vmatpush2.msra.mxu0 0.0
    %229 = vmatprep.subr.mxu0 0.0
    %230 = vmatpush2.msra.mxu0 0.0
    %231 = vmatprep.subr.mxu0 0.0
    %232 = vmatpush2.msra.mxu0 0.0
    %233 = vmatprep.subr.mxu0 0.0
    %234 = vmatpush2.msra.mxu0 0.0
    %235 = vmatprep.mubr.f32.mxu0 0.0
    %236 = vmatmul.mubr.f32.gmra.mxu0 %v166
    %v237 = vpop.f32.mrf.mxu0
    %v238 = vadd.f32 0.0, %v237
    %v239 = vpop.f32.mrf.mxu0
    %v240 = vadd.f32 0.0, %v239
    %241 = vmatprep.mubr.f32.mxu0 0.0
    %242 = vmatmul.mubr.f32.gmra.mxu0 %v169
    %v243 = vpop.f32.mrf.mxu0
    %v244 = vadd.f32 0.0, %v243
    %v245 = vpop.f32.mrf.mxu0
    %v246 = vadd.f32 0.0, %v245
    %247 = vdwg.mxu0
    %248 = vmatprep.subr.mxu0 0.0
    %249 = vmatpush1.msra.mxu0 0.0
    %250 = vmatprep.subr.mxu0 0.0
    %251 = vmatpush1.msra.mxu0 0.0
    %252 = vmatprep.subr.mxu0 0.0
    %253 = vmatpush1.msra.mxu0 0.0
    %254 = vmatprep.subr.mxu0 0.0
    %255 = vmatpush1.msra.mxu0 0.0
    %256 = vmatprep.subr.mxu0 0.0
    %257 = vmatpush1.msra.mxu0 0.0
    %258 = vmatprep.subr.mxu0 0.0
    %259 = vmatpush1.msra.mxu0 0.0
    %260 = vmatprep.subr.mxu0 0.0
    %261 = vmatpush1.msra.mxu0 0.0
    %262 = vmatprep.subr.mxu0 0.0
    %263 = vmatpush1.msra.mxu0 0.0
    %264 = vmatprep.subr.mxu0 %v163
    %265 = vmatpush1.msra.mxu0 %v162
    %266 = vmatprep.subr.mxu0 %v159
    %267 = vmatpush1.msra.mxu0 %v158
    %268 = vmatprep.subr.mxu0 %v155
    %269 = vmatpush1.msra.mxu0 %v154
    %270 = vmatprep.subr.mxu0 %v151
    %271 = vmatpush1.msra.mxu0 %v150
    %272 = vmatprep.subr.mxu0 %v147
    %273 = vmatpush1.msra.mxu0 %v146
    %274 = vmatprep.subr.mxu0 %v143
    %275 = vmatpush1.msra.mxu0 %v142
    %276 = vmatprep.subr.mxu0 %v139
    %277 = vmatpush1.msra.mxu0 %v138
    %278 = vmatprep.subr.mxu0 %v135
    %279 = vmatpush1.msra.mxu0 %v134
    %280 = vmatprep.subr.mxu0 0.0
    %281 = vmatpush2.msra.mxu0 0.0
    %282 = vmatprep.subr.mxu0 0.0
    %283 = vmatpush2.msra.mxu0 0.0
    %284 = vmatprep.subr.mxu0 0.0
    %285 = vmatpush2.msra.mxu0 0.0
    %286 = vmatprep.subr.mxu0 0.0
    %287 = vmatpush2.msra.mxu0 0.0
    %288 = vmatprep.subr.mxu0 0.0
    %289 = vmatpush2.msra.mxu0 0.0
    %290 = vmatprep.subr.mxu0 0.0
    %291 = vmatpush2.msra.mxu0 0.0
    %292 = vmatprep.subr.mxu0 0.0
    %293 = vmatpush2.msra.mxu0 0.0
    %294 = vmatprep.subr.mxu0 0.0
    %295 = vmatpush2.msra.mxu0 0.0
    %296 = vmatprep.subr.mxu0 0.0
    %297 = vmatpush2.msra.mxu0 0.0
    %298 = vmatprep.subr.mxu0 0.0
    %299 = vmatpush2.msra.mxu0 0.0
    %300 = vmatprep.subr.mxu0 0.0
    %301 = vmatpush2.msra.mxu0 0.0
    %302 = vmatprep.subr.mxu0 0.0
    %303 = vmatpush2.msra.mxu0 0.0
    %304 = vmatprep.subr.mxu0 0.0
    %305 = vmatpush2.msra.mxu0 0.0
    %306 = vmatprep.subr.mxu0 0.0
    %307 = vmatpush2.msra.mxu0 0.0
    %308 = vmatprep.subr.mxu0 0.0
    %309 = vmatpush2.msra.mxu0 0.0
    %310 = vmatprep.subr.mxu0 0.0
    %311 = vmatpush2.msra.mxu0 0.0
    %312 = vmatprep.mubr.f32.mxu0 0.0
    %313 = vmatmul.mubr.f32.gmra.mxu0 %v166
    %v314 = vpop.f32.mrf.mxu0
    %v315 = vadd.f32 0.0, %v314
    %v316 = vpop.f32.mrf.mxu0
    %v317 = vadd.f32 0.0, %v316
    %318 = vmatprep.mubr.f32.mxu0 0.0
    %319 = vmatmul.mubr.f32.gmra.mxu0 %v169
    %v320 = vpop.f32.mrf.mxu0
    %v321 = vadd.f32 0.0, %v320
    %v322 = vpop.f32.mrf.mxu0
    %v323 = vadd.f32 0.0, %v322
    %324 = vdwg.mxu0
    %325 = vst [vmem:[#allocation2] sm:$0xff] %v238
    %326 = vst [vmem:[#allocation2 + $0x8] sm:$0xff] %v240
    %327 = vst [vmem:[#allocation2 + $0x10] sm:$0xff] %v315
    %328 = vst [vmem:[#allocation2 + $0x18] sm:$0xff] %v317
    %329 = vst [vmem:[#allocation2 + $0x20] sm:$0xff] %v244
    %330 = vst [vmem:[#allocation2 + $0x28] sm:$0xff] %v246
    %331 = vst [vmem:[#allocation2 + $0x30] sm:$0xff] %v321
    %332 = vst [vmem:[#allocation2 + $0x38] sm:$0xff] %v323
    %v333 = vld [vmem:[%s0 + $0x10] sm:$0xff]
    %v334 = vld [vmem:[%s0 + $0x18] sm:$0xff]
    %v335 = vld [vmem:[#allocation7] sm:$0xff]
    %v336 = vld [vmem:[#allocation7 + $0x8] sm:$0xff]
    %v337 = vld [vmem:[#allocation7 + $0x10] sm:$0xff]
    %v338 = vld [vmem:[#allocation7 + $0x18] sm:$0xff]
    %v339 = vld [vmem:[#allocation7 + $0x20] sm:$0xff]
    %v340 = vld [vmem:[#allocation7 + $0x28] sm:$0xff]
    %v341 = vld [vmem:[#allocation7 + $0x30] sm:$0xff]
    %v342 = vld [vmem:[#allocation7 + $0x38] sm:$0xff]
    %v343 = vld [vmem:[#allocation7 + $0x40] sm:$0xff]
    %v344 = vld [vmem:[#allocation7 + $0x48] sm:$0xff]
    %v345 = vld [vmem:[#allocation7 + $0x50] sm:$0xff]
    %v346 = vld [vmem:[#allocation7 + $0x58] sm:$0xff]
    %v347 = vld [vmem:[#allocation7 + $0x60] sm:$0xff]
    %v348 = vld [vmem:[#allocation7 + $0x68] sm:$0xff]
    %v349 = vld [vmem:[#allocation7 + $0x70] sm:$0xff]
    %v350 = vld [vmem:[#allocation7 + $0x78] sm:$0xff]
    %v351 = vld [vmem:[#allocation7 + $0x80] sm:$0xff]
    %v352 = vld [vmem:[#allocation7 + $0x88] sm:$0xff]
    %v353 = vld [vmem:[#allocation7 + $0x90] sm:$0xff]
    %v354 = vld [vmem:[#allocation7 + $0x98] sm:$0xff]
    %v355 = vld [vmem:[#allocation7 + $0xa0] sm:$0xff]
    %v356 = vld [vmem:[#allocation7 + $0xa8] sm:$0xff]
    %v357 = vld [vmem:[#allocation7 + $0xb0] sm:$0xff]
    %v358 = vld [vmem:[#allocation7 + $0xb8] sm:$0xff]
    %v359 = vld [vmem:[#allocation7 + $0xc0] sm:$0xff]
    %v360 = vld [vmem:[#allocation7 + $0xc8] sm:$0xff]
    %v361 = vld [vmem:[#allocation7 + $0xd0] sm:$0xff]
    %v362 = vld [vmem:[#allocation7 + $0xd8] sm:$0xff]
    %v363 = vld [vmem:[#allocation7 + $0xe0] sm:$0xff]
    %v364 = vld [vmem:[#allocation7 + $0xe8] sm:$0xff]
    %v365 = vld [vmem:[#allocation7 + $0xf0] sm:$0xff]
    %v366 = vld [vmem:[#allocation7 + $0xf8] sm:$0xff]
    %v368 = vsel %vm164, %v333, 0
    %v371 = vsel %vm164, %v334, 0
    %373 = vmatprep.subr.mxu0 0.0
    %374 = vmatpush1.msra.mxu0 0.0
    %375 = vmatprep.subr.mxu0 0.0
    %376 = vmatpush1.msra.mxu0 0.0
    %377 = vmatprep.subr.mxu0 0.0
    %378 = vmatpush1.msra.mxu0 0.0
    %379 = vmatprep.subr.mxu0 0.0
    %380 = vmatpush1.msra.mxu0 0.0
    %381 = vmatprep.subr.mxu0 0.0
    %382 = vmatpush1.msra.mxu0 0.0
    %383 = vmatprep.subr.mxu0 0.0
    %384 = vmatpush1.msra.mxu0 0.0
    %385 = vmatprep.subr.mxu0 0.0
    %386 = vmatpush1.msra.mxu0 0.0
    %387 = vmatprep.subr.mxu0 0.0
    %388 = vmatpush1.msra.mxu0 0.0
    %389 = vmatprep.subr.mxu0 %v364
    %390 = vmatpush1.msra.mxu0 %v363
    %391 = vmatprep.subr.mxu0 %v360
    %392 = vmatpush1.msra.mxu0 %v359
    %393 = vmatprep.subr.mxu0 %v356
    %394 = vmatpush1.msra.mxu0 %v355
    %395 = vmatprep.subr.mxu0 %v352
    %396 = vmatpush1.msra.mxu0 %v351
    %397 = vmatprep.subr.mxu0 %v348
    %398 = vmatpush1.msra.mxu0 %v347
    %399 = vmatprep.subr.mxu0 %v344
    %400 = vmatpush1.msra.mxu0 %v343
    %401 = vmatprep.subr.mxu0 %v340
    %402 = vmatpush1.msra.mxu0 %v339
    %403 = vmatprep.subr.mxu0 %v336
    %404 = vmatpush1.msra.mxu0 %v335
    %405 = vmatprep.subr.mxu0 0.0
    %406 = vmatpush2.msra.mxu0 0.0
    %407 = vmatprep.subr.mxu0 0.0
    %408 = vmatpush2.msra.mxu0 0.0
    %409 = vmatprep.subr.mxu0 0.0
    %410 = vmatpush2.msra.mxu0 0.0
    %411 = vmatprep.subr.mxu0 0.0
    %412 = vmatpush2.msra.mxu0 0.0
    %413 = vmatprep.subr.mxu0 0.0
    %414 = vmatpush2.msra.mxu0 0.0
    %415 = vmatprep.subr.mxu0 0.0
    %416 = vmatpush2.msra.mxu0 0.0
    %417 = vmatprep.subr.mxu0 0.0
    %418 = vmatpush2.msra.mxu0 0.0
    %419 = vmatprep.subr.mxu0 0.0
    %420 = vmatpush2.msra.mxu0 0.0
    %421 = vmatprep.subr.mxu0 0.0
    %422 = vmatpush2.msra.mxu0 0.0
    %423 = vmatprep.subr.mxu0 0.0
    %424 = vmatpush2.msra.mxu0 0.0
    %425 = vmatprep.subr.mxu0 0.0
    %426 = vmatpush2.msra.mxu0 0.0
    %427 = vmatprep.subr.mxu0 0.0
    %428 = vmatpush2.msra.mxu0 0.0
    %429 = vmatprep.subr.mxu0 0.0
    %430 = vmatpush2.msra.mxu0 0.0
    %431 = vmatprep.subr.mxu0 0.0
    %432 = vmatpush2.msra.mxu0 0.0
    %433 = vmatprep.subr.mxu0 0.0
    %434 = vmatpush2.msra.mxu0 0.0
    %435 = vmatprep.subr.mxu0 0.0
    %436 = vmatpush2.msra.mxu0 0.0
    %437 = vmatprep.mubr.f32.mxu0 0.0
    %438 = vmatmul.mubr.f32.gmra.mxu0 %v368
    %v439 = vpop.f32.mrf.mxu0
    %v440 = vadd.f32 0.0, %v439
    %v441 = vpop.f32.mrf.mxu0
    %v442 = vadd.f32 0.0, %v441
    %443 = vmatprep.mubr.f32.mxu0 0.0
    %444 = vmatmul.mubr.f32.gmra.mxu0 %v371
    %v445 = vpop.f32.mrf.mxu0
    %v446 = vadd.f32 0.0, %v445
    %v447 = vpop.f32.mrf.mxu0
    %v448 = vadd.f32 0.0, %v447
    %449 = vdwg.mxu0
    %450 = vmatprep.subr.mxu0 0.0
    %451 = vmatpush1.msra.mxu0 0.0
    %452 = vmatprep.subr.mxu0 0.0
    %453 = vmatpush1.msra.mxu0 0.0
    %454 = vmatprep.subr.mxu0 0.0
    %455 = vmatpush1.msra.mxu0 0.0
    %456 = vmatprep.subr.mxu0 0.0
    %457 = vmatpush1.msra.mxu0 0.0
    %458 = vmatprep.subr.mxu0 0.0
    %459 = vmatpush1.msra.mxu0 0.0
    %460 = vmatprep.subr.mxu0 0.0
    %461 = vmatpush1.msra.mxu0 0.0
    %462 = vmatprep.subr.mxu0 0.0
    %463 = vmatpush1.msra.mxu0 0.0
    %464 = vmatprep.subr.mxu0 0.0
    %465 = vmatpush1.msra.mxu0 0.0
    %466 = vmatprep.subr.mxu0 %v366
    %467 = vmatpush1.msra.mxu0 %v365
    %468 = vmatprep.subr.mxu0 %v362
    %469 = vmatpush1.msra.mxu0 %v361
    %470 = vmatprep.subr.mxu0 %v358
    %471 = vmatpush1.msra.mxu0 %v357
    %472 = vmatprep.subr.mxu0 %v354
    %473 = vmatpush1.msra.mxu0 %v353
    %474 = vmatprep.subr.mxu0 %v350
    %475 = vmatpush1.msra.mxu0 %v349
    %476 = vmatprep.subr.mxu0 %v346
    %477 = vmatpush1.msra.mxu0 %v345
    %478 = vmatprep.subr.mxu0 %v342
    %479 = vmatpush1.msra.mxu0 %v341
    %480 = vmatprep.subr.mxu0 %v338
    %481 = vmatpush1.msra.mxu0 %v337
    %482 = vmatprep.subr.mxu0 0.0
    %483 = vmatpush2.msra.mxu0 0.0
    %484 = vmatprep.subr.mxu0 0.0
    %485 = vmatpush2.msra.mxu0 0.0
    %486 = vmatprep.subr.mxu0 0.0
    %487 = vmatpush2.msra.mxu0 0.0
    %488 = vmatprep.subr.mxu0 0.0
    %489 = vmatpush2.msra.mxu0 0.0
    %490 = vmatprep.subr.mxu0 0.0
    %491 = vmatpush2.msra.mxu0 0.0
    %492 = vmatprep.subr.mxu0 0.0
    %493 = vmatpush2.msra.mxu0 0.0
    %494 = vmatprep.subr.mxu0 0.0
    %495 = vmatpush2.msra.mxu0 0.0
    %496 = vmatprep.subr.mxu0 0.0
    %497 = vmatpush2.msra.mxu0 0.0
    %498 = vmatprep.subr.mxu0 0.0
    %499 = vmatpush2.msra.mxu0 0.0
    %500 = vmatprep.subr.mxu0 0.0
    %501 = vmatpush2.msra.mxu0 0.0
    %502 = vmatprep.subr.mxu0 0.0
    %503 = vmatpush2.msra.mxu0 0.0
    %504 = vmatprep.subr.mxu0 0.0
    %505 = vmatpush2.msra.mxu0 0.0
    %506 = vmatprep.subr.mxu0 0.0
    %507 = vmatpush2.msra.mxu0 0.0
    %508 = vmatprep.subr.mxu0 0.0
    %509 = vmatpush2.msra.mxu0 0.0
    %510 = vmatprep.subr.mxu0 0.0
    %511 = vmatpush2.msra.mxu0 0.0
    %512 = vmatprep.subr.mxu0 0.0
    %513 = vmatpush2.msra.mxu0 0.0
    %514 = vmatprep.mubr.f32.mxu0 0.0
    %515 = vmatmul.mubr.f32.gmra.mxu0 %v368
    %v516 = vpop.f32.mrf.mxu0
    %v517 = vadd.f32 0.0, %v516
    %v518 = vpop.f32.mrf.mxu0
    %v519 = vadd.f32 0.0, %v518
    %520 = vmatprep.mubr.f32.mxu0 0.0
    %521 = vmatmul.mubr.f32.gmra.mxu0 %v371
    %v522 = vpop.f32.mrf.mxu0
    %v523 = vadd.f32 0.0, %v522
    %v524 = vpop.f32.mrf.mxu0
    %v525 = vadd.f32 0.0, %v524
    %526 = vdwg.mxu0
    %527 = vst [vmem:[#allocation2 + $0x40] sm:$0xff] %v440
    %528 = vst [vmem:[#allocation2 + $0x48] sm:$0xff] %v442
    %529 = vst [vmem:[#allocation2 + $0x50] sm:$0xff] %v517
    %530 = vst [vmem:[#allocation2 + $0x58] sm:$0xff] %v519
    %531 = vst [vmem:[#allocation2 + $0x60] sm:$0xff] %v446
    %532 = vst [vmem:[#allocation2 + $0x68] sm:$0xff] %v448
    %533 = vst [vmem:[#allocation2 + $0x70] sm:$0xff] %v523
    %534 = vst [vmem:[#allocation2 + $0x78] sm:$0xff] %v525
    %v535 = vld [vmem:[%s0 + $0x20] sm:$0xff]
    %v536 = vld [vmem:[%s0 + $0x28] sm:$0xff]
    %v537 = vld [vmem:[#allocation7] sm:$0xff]
    %v538 = vld [vmem:[#allocation7 + $0x8] sm:$0xff]
    %v539 = vld [vmem:[#allocation7 + $0x10] sm:$0xff]
    %v540 = vld [vmem:[#allocation7 + $0x18] sm:$0xff]
    %v541 = vld [vmem:[#allocation7 + $0x20] sm:$0xff]
    %v542 = vld [vmem:[#allocation7 + $0x28] sm:$0xff]
    %v543 = vld [vmem:[#allocation7 + $0x30] sm:$0xff]
    %v544 = vld [vmem:[#allocation7 + $0x38] sm:$0xff]
    %v545 = vld [vmem:[#allocation7 + $0x40] sm:$0xff]
    %v546 = vld [vmem:[#allocation7 + $0x48] sm:$0xff]
    %v547 = vld [vmem:[#allocation7 + $0x50] sm:$0xff]
    %v548 = vld [vmem:[#allocation7 + $0x58] sm:$0xff]
    %v549 = vld [vmem:[#allocation7 + $0x60] sm:$0xff]
    %v550 = vld [vmem:[#allocation7 + $0x68] sm:$0xff]
    %v551 = vld [vmem:[#allocation7 + $0x70] sm:$0xff]
    %v552 = vld [vmem:[#allocation7 + $0x78] sm:$0xff]
    %v553 = vld [vmem:[#allocation7 + $0x80] sm:$0xff]
    %v554 = vld [vmem:[#allocation7 + $0x88] sm:$0xff]
    %v555 = vld [vmem:[#allocation7 + $0x90] sm:$0xff]
    %v556 = vld [vmem:[#allocation7 + $0x98] sm:$0xff]
    %v557 = vld [vmem:[#allocation7 + $0xa0] sm:$0xff]
    %v558 = vld [vmem:[#allocation7 + $0xa8] sm:$0xff]
    %v559 = vld [vmem:[#allocation7 + $0xb0] sm:$0xff]
    %v560 = vld [vmem:[#allocation7 + $0xb8] sm:$0xff]
    %v561 = vld [vmem:[#allocation7 + $0xc0] sm:$0xff]
    %v562 = vld [vmem:[#allocation7 + $0xc8] sm:$0xff]
    %v563 = vld [vmem:[#allocation7 + $0xd0] sm:$0xff]
    %v564 = vld [vmem:[#allocation7 + $0xd8] sm:$0xff]
    %v565 = vld [vmem:[#allocation7 + $0xe0] sm:$0xff]
    %v566 = vld [vmem:[#allocation7 + $0xe8] sm:$0xff]
    %v567 = vld [vmem:[#allocation7 + $0xf0] sm:$0xff]
    %v568 = vld [vmem:[#allocation7 + $0xf8] sm:$0xff]
    %v570 = vsel %vm164, %v535, 0
    %v573 = vsel %vm164, %v536, 0
    %575 = vmatprep.subr.mxu0 0.0
    %576 = vmatpush1.msra.mxu0 0.0
    %577 = vmatprep.subr.mxu0 0.0
    %578 = vmatpush1.msra.mxu0 0.0
    %579 = vmatprep.subr.mxu0 0.0
    %580 = vmatpush1.msra.mxu0 0.0
    %581 = vmatprep.subr.mxu0 0.0
    %582 = vmatpush1.msra.mxu0 0.0
    %583 = vmatprep.subr.mxu0 0.0
    %584 = vmatpush1.msra.mxu0 0.0
    %585 = vmatprep.subr.mxu0 0.0
    %586 = vmatpush1.msra.mxu0 0.0
    %587 = vmatprep.subr.mxu0 0.0
    %588 = vmatpush1.msra.mxu0 0.0
    %589 = vmatprep.subr.mxu0 0.0
    %590 = vmatpush1.msra.mxu0 0.0
    %591 = vmatprep.subr.mxu0 %v566
    %592 = vmatpush1.msra.mxu0 %v565
    %593 = vmatprep.subr.mxu0 %v562
    %594 = vmatpush1.msra.mxu0 %v561
    %595 = vmatprep.subr.mxu0 %v558
    %596 = vmatpush1.msra.mxu0 %v557
    %597 = vmatprep.subr.mxu0 %v554
    %598 = vmatpush1.msra.mxu0 %v553
    %599 = vmatprep.subr.mxu0 %v550
    %600 = vmatpush1.msra.mxu0 %v549
    %601 = vmatprep.subr.mxu0 %v546
    %602 = vmatpush1.msra.mxu0 %v545
    %603 = vmatprep.subr.mxu0 %v542
    %604 = vmatpush1.msra.mxu0 %v541
    %605 = vmatprep.subr.mxu0 %v538
    %606 = vmatpush1.msra.mxu0 %v537
    %607 = vmatprep.subr.mxu0 0.0
    %608 = vmatpush2.msra.mxu0 0.0
    %609 = vmatprep.subr.mxu0 0.0
    %610 = vmatpush2.msra.mxu0 0.0
    %611 = vmatprep.subr.mxu0 0.0
    %612 = vmatpush2.msra.mxu0 0.0
    %613 = vmatprep.subr.mxu0 0.0
    %614 = vmatpush2.msra.mxu0 0.0
    %615 = vmatprep.subr.mxu0 0.0
    %616 = vmatpush2.msra.mxu0 0.0
    %617 = vmatprep.subr.mxu0 0.0
    %618 = vmatpush2.msra.mxu0 0.0
    %619 = vmatprep.subr.mxu0 0.0
    %620 = vmatpush2.msra.mxu0 0.0
    %621 = vmatprep.subr.mxu0 0.0
    %622 = vmatpush2.msra.mxu0 0.0
    %623 = vmatprep.subr.mxu0 0.0
    %624 = vmatpush2.msra.mxu0 0.0
    %625 = vmatprep.subr.mxu0 0.0
    %626 = vmatpush2.msra.mxu0 0.0
    %627 = vmatprep.subr.mxu0 0.0
    %628 = vmatpush2.msra.mxu0 0.0
    %629 = vmatprep.subr.mxu0 0.0
    %630 = vmatpush2.msra.mxu0 0.0
    %631 = vmatprep.subr.mxu0 0.0
    %632 = vmatpush2.msra.mxu0 0.0
    %633 = vmatprep.subr.mxu0 0.0
    %634 = vmatpush2.msra.mxu0 0.0
    %635 = vmatprep.subr.mxu0 0.0
    %636 = vmatpush2.msra.mxu0 0.0
    %637 = vmatprep.subr.mxu0 0.0
    %638 = vmatpush2.msra.mxu0 0.0
    %639 = vmatprep.mubr.f32.mxu0 0.0
    %640 = vmatmul.mubr.f32.gmra.mxu0 %v570
    %v641 = vpop.f32.mrf.mxu0
    %v642 = vadd.f32 0.0, %v641
    %v643 = vpop.f32.mrf.mxu0
    %v644 = vadd.f32 0.0, %v643
    %645 = vmatprep.mubr.f32.mxu0 0.0
    %646 = vmatmul.mubr.f32.gmra.mxu0 %v573
    %v647 = vpop.f32.mrf.mxu0
    %v648 = vadd.f32 0.0, %v647
    %v649 = vpop.f32.mrf.mxu0
    %v650 = vadd.f32 0.0, %v649
    %651 = vdwg.mxu0
    %652 = vmatprep.subr.mxu0 0.0
    %653 = vmatpush1.msra.mxu0 0.0
    %654 = vmatprep.subr.mxu0 0.0
    %655 = vmatpush1.msra.mxu0 0.0
    %656 = vmatprep.subr.mxu0 0.0
    %657 = vmatpush1.msra.mxu0 0.0
    %658 = vmatprep.subr.mxu0 0.0
    %659 = vmatpush1.msra.mxu0 0.0
    %660 = vmatprep.subr.mxu0 0.0
    %661 = vmatpush1.msra.mxu0 0.0
    %662 = vmatprep.subr.mxu0 0.0
    %663 = vmatpush1.msra.mxu0 0.0
    %664 = vmatprep.subr.mxu0 0.0
    %665 = vmatpush1.msra.mxu0 0.0
    %666 = vmatprep.subr.mxu0 0.0
    %667 = vmatpush1.msra.mxu0 0.0
    %668 = vmatprep.subr.mxu0 %v568
    %669 = vmatpush1.msra.mxu0 %v567
    %670 = vmatprep.subr.mxu0 %v564
    %671 = vmatpush1.msra.mxu0 %v563
    %672 = vmatprep.subr.mxu0 %v560
    %673 = vmatpush1.msra.mxu0 %v559
    %674 = vmatprep.subr.mxu0 %v556
    %675 = vmatpush1.msra.mxu0 %v555
    %676 = vmatprep.subr.mxu0 %v552
    %677 = vmatpush1.msra.mxu0 %v551
    %678 = vmatprep.subr.mxu0 %v548
    %679 = vmatpush1.msra.mxu0 %v547
    %680 = vmatprep.subr.mxu0 %v544
    %681 = vmatpush1.msra.mxu0 %v543
    %682 = vmatprep.subr.mxu0 %v540
    %683 = vmatpush1.msra.mxu0 %v539
    %684 = vmatprep.subr.mxu0 0.0
    %685 = vmatpush2.msra.mxu0 0.0
    %686 = vmatprep.subr.mxu0 0.0
    %687 = vmatpush2.msra.mxu0 0.0
    %688 = vmatprep.subr.mxu0 0.0
    %689 = vmatpush2.msra.mxu0 0.0
    %690 = vmatprep.subr.mxu0 0.0
    %691 = vmatpush2.msra.mxu0 0.0
    %692 = vmatprep.subr.mxu0 0.0
    %693 = vmatpush2.msra.mxu0 0.0
    %694 = vmatprep.subr.mxu0 0.0
    %695 = vmatpush2.msra.mxu0 0.0
    %696 = vmatprep.subr.mxu0 0.0
    %697 = vmatpush2.msra.mxu0 0.0
    %698 = vmatprep.subr.mxu0 0.0
    %699 = vmatpush2.msra.mxu0 0.0
    %700 = vmatprep.subr.mxu0 0.0
    %701 = vmatpush2.msra.mxu0 0.0
    %702 = vmatprep.subr.mxu0 0.0
    %703 = vmatpush2.msra.mxu0 0.0
    %704 = vmatprep.subr.mxu0 0.0
    %705 = vmatpush2.msra.mxu0 0.0
    %706 = vmatprep.subr.mxu0 0.0
    %707 = vmatpush2.msra.mxu0 0.0
    %708 = vmatprep.subr.mxu0 0.0
    %709 = vmatpush2.msra.mxu0 0.0
    %710 = vmatprep.subr.mxu0 0.0
    %711 = vmatpush2.msra.mxu0 0.0
    %712 = vmatprep.subr.mxu0 0.0
    %713 = vmatpush2.msra.mxu0 0.0
    %714 = vmatprep.subr.mxu0 0.0
    %715 = vmatpush2.msra.mxu0 0.0
    %716 = vmatprep.mubr.f32.mxu0 0.0
    %717 = vmatmul.mubr.f32.gmra.mxu0 %v570
    %v718 = vpop.f32.mrf.mxu0
    %v719 = vadd.f32 0.0, %v718
    %v720 = vpop.f32.mrf.mxu0
    %v721 = vadd.f32 0.0, %v720
    %722 = vmatprep.mubr.f32.mxu0 0.0
    %723 = vmatmul.mubr.f32.gmra.mxu0 %v573
    %v724 = vpop.f32.mrf.mxu0
    %v725 = vadd.f32 0.0, %v724
    %v726 = vpop.f32.mrf.mxu0
    %v727 = vadd.f32 0.0, %v726
    %728 = vdwg.mxu0
    %729 = vst [vmem:[#allocation2 + $0x80] sm:$0xff] %v642
    %730 = vst [vmem:[#allocation2 + $0x88] sm:$0xff] %v644
    %731 = vst [vmem:[#allocation2 + $0x90] sm:$0xff] %v719
    %732 = vst [vmem:[#allocation2 + $0x98] sm:$0xff] %v721
    %733 = vst [vmem:[#allocation2 + $0xa0] sm:$0xff] %v648
    %734 = vst [vmem:[#allocation2 + $0xa8] sm:$0xff] %v650
    %735 = vst [vmem:[#allocation2 + $0xb0] sm:$0xff] %v725
    %736 = vst [vmem:[#allocation2 + $0xb8] sm:$0xff] %v727
    %v737 = vld [vmem:[%s0 + $0x30] sm:$0xff]
    %v738 = vld [vmem:[%s0 + $0x38] sm:$0xff]
    %v739 = vld [vmem:[#allocation7] sm:$0xff]
    %v740 = vld [vmem:[#allocation7 + $0x8] sm:$0xff]
    %v741 = vld [vmem:[#allocation7 + $0x10] sm:$0xff]
    %v742 = vld [vmem:[#allocation7 + $0x18] sm:$0xff]
    %v743 = vld [vmem:[#allocation7 + $0x20] sm:$0xff]
    %v744 = vld [vmem:[#allocation7 + $0x28] sm:$0xff]
    %v745 = vld [vmem:[#allocation7 + $0x30] sm:$0xff]
    %v746 = vld [vmem:[#allocation7 + $0x38] sm:$0xff]
    %v747 = vld [vmem:[#allocation7 + $0x40] sm:$0xff]
    %v748 = vld [vmem:[#allocation7 + $0x48] sm:$0xff]
    %v749 = vld [vmem:[#allocation7 + $0x50] sm:$0xff]
    %v750 = vld [vmem:[#allocation7 + $0x58] sm:$0xff]
    %v751 = vld [vmem:[#allocation7 + $0x60] sm:$0xff]
    %v752 = vld [vmem:[#allocation7 + $0x68] sm:$0xff]
    %v753 = vld [vmem:[#allocation7 + $0x70] sm:$0xff]
    %v754 = vld [vmem:[#allocation7 + $0x78] sm:$0xff]
    %v755 = vld [vmem:[#allocation7 + $0x80] sm:$0xff]
    %v756 = vld [vmem:[#allocation7 + $0x88] sm:$0xff]
    %v757 = vld [vmem:[#allocation7 + $0x90] sm:$0xff]
    %v758 = vld [vmem:[#allocation7 + $0x98] sm:$0xff]
    %v759 = vld [vmem:[#allocation7 + $0xa0] sm:$0xff]
    %v760 = vld [vmem:[#allocation7 + $0xa8] sm:$0xff]
    %v761 = vld [vmem:[#allocation7 + $0xb0] sm:$0xff]
    %v762 = vld [vmem:[#allocation7 + $0xb8] sm:$0xff]
    %v763 = vld [vmem:[#allocation7 + $0xc0] sm:$0xff]
    %v764 = vld [vmem:[#allocation7 + $0xc8] sm:$0xff]
    %v765 = vld [vmem:[#allocation7 + $0xd0] sm:$0xff]
    %v766 = vld [vmem:[#allocation7 + $0xd8] sm:$0xff]
    %v767 = vld [vmem:[#allocation7 + $0xe0] sm:$0xff]
    %v768 = vld [vmem:[#allocation7 + $0xe8] sm:$0xff]
    %v769 = vld [vmem:[#allocation7 + $0xf0] sm:$0xff]
    %v770 = vld [vmem:[#allocation7 + $0xf8] sm:$0xff]
    %v772 = vsel %vm164, %v737, 0
    %v775 = vsel %vm164, %v738, 0
    %777 = vmatprep.subr.mxu0 0.0
    %778 = vmatpush1.msra.mxu0 0.0
    %779 = vmatprep.subr.mxu0 0.0
    %780 = vmatpush1.msra.mxu0 0.0
    %781 = vmatprep.subr.mxu0 0.0
    %782 = vmatpush1.msra.mxu0 0.0
    %783 = vmatprep.subr.mxu0 0.0
    %784 = vmatpush1.msra.mxu0 0.0
    %785 = vmatprep.subr.mxu0 0.0
    %786 = vmatpush1.msra.mxu0 0.0
    %787 = vmatprep.subr.mxu0 0.0
    %788 = vmatpush1.msra.mxu0 0.0
    %789 = vmatprep.subr.mxu0 0.0
    %790 = vmatpush1.msra.mxu0 0.0
    %791 = vmatprep.subr.mxu0 0.0
    %792 = vmatpush1.msra.mxu0 0.0
    %793 = vmatprep.subr.mxu0 %v768
    %794 = vmatpush1.msra.mxu0 %v767
    %795 = vmatprep.subr.mxu0 %v764
    %796 = vmatpush1.msra.mxu0 %v763
    %797 = vmatprep.subr.mxu0 %v760
    %798 = vmatpush1.msra.mxu0 %v759
    %799 = vmatprep.subr.mxu0 %v756
    %800 = vmatpush1.msra.mxu0 %v755
    %801 = vmatprep.subr.mxu0 %v752
    %802 = vmatpush1.msra.mxu0 %v751
    %803 = vmatprep.subr.mxu0 %v748
    %804 = vmatpush1.msra.mxu0 %v747
    %805 = vmatprep.subr.mxu0 %v744
    %806 = vmatpush1.msra.mxu0 %v743
    %807 = vmatprep.subr.mxu0 %v740
    %808 = vmatpush1.msra.mxu0 %v739
    %809 = vmatprep.subr.mxu0 0.0
    %810 = vmatpush2.msra.mxu0 0.0
    %811 = vmatprep.subr.mxu0 0.0
    %812 = vmatpush2.msra.mxu0 0.0
    %813 = vmatprep.subr.mxu0 0.0
    %814 = vmatpush2.msra.mxu0 0.0
    %815 = vmatprep.subr.mxu0 0.0
    %816 = vmatpush2.msra.mxu0 0.0
    %817 = vmatprep.subr.mxu0 0.0
    %818 = vmatpush2.msra.mxu0 0.0
    %819 = vmatprep.subr.mxu0 0.0
    %820 = vmatpush2.msra.mxu0 0.0
    %821 = vmatprep.subr.mxu0 0.0
    %822 = vmatpush2.msra.mxu0 0.0
    %823 = vmatprep.subr.mxu0 0.0
    %824 = vmatpush2.msra.mxu0 0.0
    %825 = vmatprep.subr.mxu0 0.0
    %826 = vmatpush2.msra.mxu0 0.0
    %827 = vmatprep.subr.mxu0 0.0
    %828 = vmatpush2.msra.mxu0 0.0
    %829 = vmatprep.subr.mxu0 0.0
    %830 = vmatpush2.msra.mxu0 0.0
    %831 = vmatprep.subr.mxu0 0.0
    %832 = vmatpush2.msra.mxu0 0.0
    %833 = vmatprep.subr.mxu0 0.0
    %834 = vmatpush2.msra.mxu0 0.0
    %835 = vmatprep.subr.mxu0 0.0
    %836 = vmatpush2.msra.mxu0 0.0
    %837 = vmatprep.subr.mxu0 0.0
    %838 = vmatpush2.msra.mxu0 0.0
    %839 = vmatprep.subr.mxu0 0.0
    %840 = vmatpush2.msra.mxu0 0.0
    %841 = vmatprep.mubr.f32.mxu0 0.0
    %842 = vmatmul.mubr.f32.gmra.mxu0 %v772
    %v843 = vpop.f32.mrf.mxu0
    %v844 = vadd.f32 0.0, %v843
    %v845 = vpop.f32.mrf.mxu0
    %v846 = vadd.f32 0.0, %v845
    %847 = vmatprep.mubr.f32.mxu0 0.0
    %848 = vmatmul.mubr.f32.gmra.mxu0 %v775
    %v849 = vpop.f32.mrf.mxu0
    %v850 = vadd.f32 0.0, %v849
    %v851 = vpop.f32.mrf.mxu0
    %v852 = vadd.f32 0.0, %v851
    %853 = vdwg.mxu0
    %854 = vmatprep.subr.mxu0 0.0
    %855 = vmatpush1.msra.mxu0 0.0
    %856 = vmatprep.subr.mxu0 0.0
    %857 = vmatpush1.msra.mxu0 0.0
    %858 = vmatprep.subr.mxu0 0.0
    %859 = vmatpush1.msra.mxu0 0.0
    %860 = vmatprep.subr.mxu0 0.0
    %861 = vmatpush1.msra.mxu0 0.0
    %862 = vmatprep.subr.mxu0 0.0
    %863 = vmatpush1.msra.mxu0 0.0
    %864 = vmatprep.subr.mxu0 0.0
    %865 = vmatpush1.msra.mxu0 0.0
    %866 = vmatprep.subr.mxu0 0.0
    %867 = vmatpush1.msra.mxu0 0.0
    %868 = vmatprep.subr.mxu0 0.0
    %869 = vmatpush1.msra.mxu0 0.0
    %870 = vmatprep.subr.mxu0 %v770
    %871 = vmatpush1.msra.mxu0 %v769
    %872 = vmatprep.subr.mxu0 %v766
    %873 = vmatpush1.msra.mxu0 %v765
    %874 = vmatprep.subr.mxu0 %v762
    %875 = vmatpush1.msra.mxu0 %v761
    %876 = vmatprep.subr.mxu0 %v758
    %877 = vmatpush1.msra.mxu0 %v757
    %878 = vmatprep.subr.mxu0 %v754
    %879 = vmatpush1.msra.mxu0 %v753
    %880 = vmatprep.subr.mxu0 %v750
    %881 = vmatpush1.msra.mxu0 %v749
    %882 = vmatprep.subr.mxu0 %v746
    %883 = vmatpush1.msra.mxu0 %v745
    %884 = vmatprep.subr.mxu0 %v742
    %885 = vmatpush1.msra.mxu0 %v741
    %886 = vmatprep.subr.mxu0 0.0
    %887 = vmatpush2.msra.mxu0 0.0
    %888 = vmatprep.subr.mxu0 0.0
    %889 = vmatpush2.msra.mxu0 0.0
    %890 = vmatprep.subr.mxu0 0.0
    %891 = vmatpush2.msra.mxu0 0.0
    %892 = vmatprep.subr.mxu0 0.0
    %893 = vmatpush2.msra.mxu0 0.0
    %894 = vmatprep.subr.mxu0 0.0
    %895 = vmatpush2.msra.mxu0 0.0
    %896 = vmatprep.subr.mxu0 0.0
    %897 = vmatpush2.msra.mxu0 0.0
    %898 = vmatprep.subr.mxu0 0.0
    %899 = vmatpush2.msra.mxu0 0.0
    %900 = vmatprep.subr.mxu0 0.0
    %901 = vmatpush2.msra.mxu0 0.0
    %902 = vmatprep.subr.mxu0 0.0
    %903 = vmatpush2.msra.mxu0 0.0
    %904 = vmatprep.subr.mxu0 0.0
    %905 = vmatpush2.msra.mxu0 0.0
    %906 = vmatprep.subr.mxu0 0.0
    %907 = vmatpush2.msra.mxu0 0.0
    %908 = vmatprep.subr.mxu0 0.0
    %909 = vmatpush2.msra.mxu0 0.0
    %910 = vmatprep.subr.mxu0 0.0
    %911 = vmatpush2.msra.mxu0 0.0
    %912 = vmatprep.subr.mxu0 0.0
    %913 = vmatpush2.msra.mxu0 0.0
    %914 = vmatprep.subr.mxu0 0.0
    %915 = vmatpush2.msra.mxu0 0.0
    %916 = vmatprep.subr.mxu0 0.0
    %917 = vmatpush2.msra.mxu0 0.0
    %918 = vmatprep.mubr.f32.mxu0 0.0
    %919 = vmatmul.mubr.f32.gmra.mxu0 %v772
    %v920 = vpop.f32.mrf.mxu0
    %v921 = vadd.f32 0.0, %v920
    %v922 = vpop.f32.mrf.mxu0
    %v923 = vadd.f32 0.0, %v922
    %924 = vmatprep.mubr.f32.mxu0 0.0
    %925 = vmatmul.mubr.f32.gmra.mxu0 %v775
    %v926 = vpop.f32.mrf.mxu0
    %v927 = vadd.f32 0.0, %v926
    %v928 = vpop.f32.mrf.mxu0
    %v929 = vadd.f32 0.0, %v928
    %930 = vdwg.mxu0
    %931 = vst [vmem:[#allocation2 + $0xc0] sm:$0xff] %v844
    %932 = vst [vmem:[#allocation2 + $0xc8] sm:$0xff] %v846
    %933 = vst [vmem:[#allocation2 + $0xd0] sm:$0xff] %v921
    %934 = vst [vmem:[#allocation2 + $0xd8] sm:$0xff] %v923
    %935 = vst [vmem:[#allocation2 + $0xe0] sm:$0xff] %v850
    %936 = vst [vmem:[#allocation2 + $0xe8] sm:$0xff] %v852
    %937 = vst [vmem:[#allocation2 + $0xf0] sm:$0xff] %v927
    %938 = vst [vmem:[#allocation2 + $0xf8] sm:$0xff] %v929
    %v939 = vld [vmem:[%s0 + $0x40] sm:$0xff]
    %v940 = vld [vmem:[%s0 + $0x48] sm:$0xff]
    %v941 = vld [vmem:[#allocation7] sm:$0xff]
    %v942 = vld [vmem:[#allocation7 + $0x8] sm:$0xff]
    %v943 = vld [vmem:[#allocation7 + $0x10] sm:$0xff]
    %v944 = vld [vmem:[#allocation7 + $0x18] sm:$0xff]
    %v945 = vld [vmem:[#allocation7 + $0x20] sm:$0xff]
    %v946 = vld [vmem:[#allocation7 + $0x28] sm:$0xff]
    %v947 = vld [vmem:[#allocation7 + $0x30] sm:$0xff]
    %v948 = vld [vmem:[#allocation7 + $0x38] sm:$0xff]
    %v949 = vld [vmem:[#allocation7 + $0x40] sm:$0xff]
    %v950 = vld [vmem:[#allocation7 + $0x48] sm:$0xff]
    %v951 = vld [vmem:[#allocation7 + $0x50] sm:$0xff]
    %v952 = vld [vmem:[#allocation7 + $0x58] sm:$0xff]
    %v953 = vld [vmem:[#allocation7 + $0x60] sm:$0xff]
    %v954 = vld [vmem:[#allocation7 + $0x68] sm:$0xff]
    %v955 = vld [vmem:[#allocation7 + $0x70] sm:$0xff]
    %v956 = vld [vmem:[#allocation7 + $0x78] sm:$0xff]
    %v957 = vld [vmem:[#allocation7 + $0x80] sm:$0xff]
    %v958 = vld [vmem:[#allocation7 + $0x88] sm:$0xff]
    %v959 = vld [vmem:[#allocation7 + $0x90] sm:$0xff]
    %v960 = vld [vmem:[#allocation7 + $0x98] sm:$0xff]
    %v961 = vld [vmem:[#allocation7 + $0xa0] sm:$0xff]
    %v962 = vld [vmem:[#allocation7 + $0xa8] sm:$0xff]
    %v963 = vld [vmem:[#allocation7 + $0xb0] sm:$0xff]
    %v964 = vld [vmem:[#allocation7 + $0xb8] sm:$0xff]
    %v965 = vld [vmem:[#allocation7 + $0xc0] sm:$0xff]
    %v966 = vld [vmem:[#allocation7 + $0xc8] sm:$0xff]
    %v967 = vld [vmem:[#allocation7 + $0xd0] sm:$0xff]
    %v968 = vld [vmem:[#allocation7 + $0xd8] sm:$0xff]
    %v969 = vld [vmem:[#allocation7 + $0xe0] sm:$0xff]
    %v970 = vld [vmem:[#allocation7 + $0xe8] sm:$0xff]
    %v971 = vld [vmem:[#allocation7 + $0xf0] sm:$0xff]
    %v972 = vld [vmem:[#allocation7 + $0xf8] sm:$0xff]
    %v974 = vsel %vm164, %v939, 0
    %v977 = vsel %vm164, %v940, 0
    %979 = vmatprep.subr.mxu0 0.0
    %980 = vmatpush1.msra.mxu0 0.0
    %981 = vmatprep.subr.mxu0 0.0
    %982 = vmatpush1.msra.mxu0 0.0
    %983 = vmatprep.subr.mxu0 0.0
    %984 = vmatpush1.msra.mxu0 0.0
    %985 = vmatprep.subr.mxu0 0.0
    %986 = vmatpush1.msra.mxu0 0.0
    %987 = vmatprep.subr.mxu0 0.0
    %988 = vmatpush1.msra.mxu0 0.0
    %989 = vmatprep.subr.mxu0 0.0
    %990 = vmatpush1.msra.mxu0 0.0
    %991 = vmatprep.subr.mxu0 0.0
    %992 = vmatpush1.msra.mxu0 0.0
    %993 = vmatprep.subr.mxu0 0.0
    %994 = vmatpush1.msra.mxu0 0.0
    %995 = vmatprep.subr.mxu0 %v970
    %996 = vmatpush1.msra.mxu0 %v969
    %997 = vmatprep.subr.mxu0 %v966
    %998 = vmatpush1.msra.mxu0 %v965
    %999 = vmatprep.subr.mxu0 %v962
    %1000 = vmatpush1.msra.mxu0 %v961
    %1001 = vmatprep.subr.mxu0 %v958
    %1002 = vmatpush1.msra.mxu0 %v957
    %1003 = vmatprep.subr.mxu0 %v954
    %1004 = vmatpush1.msra.mxu0 %v953
    %1005 = vmatprep.subr.mxu0 %v950
    %1006 = vmatpush1.msra.mxu0 %v949
    %1007 = vmatprep.subr.mxu0 %v946
    %1008 = vmatpush1.msra.mxu0 %v945
    %1009 = vmatprep.subr.mxu0 %v942
    %1010 = vmatpush1.msra.mxu0 %v941
    %1011 = vmatprep.subr.mxu0 0.0
    %1012 = vmatpush2.msra.mxu0 0.0
    %1013 = vmatprep.subr.mxu0 0.0
    %1014 = vmatpush2.msra.mxu0 0.0
    %1015 = vmatprep.subr.mxu0 0.0
    %1016 = vmatpush2.msra.mxu0 0.0
    %1017 = vmatprep.subr.mxu0 0.0
    %1018 = vmatpush2.msra.mxu0 0.0
    %1019 = vmatprep.subr.mxu0 0.0
    %1020 = vmatpush2.msra.mxu0 0.0
    %1021 = vmatprep.subr.mxu0 0.0
    %1022 = vmatpush2.msra.mxu0 0.0
    %1023 = vmatprep.subr.mxu0 0.0
    %1024 = vmatpush2.msra.mxu0 0.0
    %1025 = vmatprep.subr.mxu0 0.0
    %1026 = vmatpush2.msra.mxu0 0.0
    %1027 = vmatprep.subr.mxu0 0.0
    %1028 = vmatpush2.msra.mxu0 0.0
    %1029 = vmatprep.subr.mxu0 0.0
    %1030 = vmatpush2.msra.mxu0 0.0
    %1031 = vmatprep.subr.mxu0 0.0
    %1032 = vmatpush2.msra.mxu0 0.0
    %1033 = vmatprep.subr.mxu0 0.0
    %1034 = vmatpush2.msra.mxu0 0.0
    %1035 = vmatprep.subr.mxu0 0.0
    %1036 = vmatpush2.msra.mxu0 0.0
    %1037 = vmatprep.subr.mxu0 0.0
    %1038 = vmatpush2.msra.mxu0 0.0
    %1039 = vmatprep.subr.mxu0 0.0
    %1040 = vmatpush2.msra.mxu0 0.0
    %1041 = vmatprep.subr.mxu0 0.0
    %1042 = vmatpush2.msra.mxu0 0.0
    %1043 = vmatprep.mubr.f32.mxu0 0.0
    %1044 = vmatmul.mubr.f32.gmra.mxu0 %v974
    %v1045 = vpop.f32.mrf.mxu0
    %v1046 = vadd.f32 0.0, %v1045
    %v1047 = vpop.f32.mrf.mxu0
    %v1048 = vadd.f32 0.0, %v1047
    %1049 = vmatprep.mubr.f32.mxu0 0.0
    %1050 = vmatmul.mubr.f32.gmra.mxu0 %v977
    %v1051 = vpop.f32.mrf.mxu0
    %v1052 = vadd.f32 0.0, %v1051
    %v1053 = vpop.f32.mrf.mxu0
    %v1054 = vadd.f32 0.0, %v1053
    %1055 = vdwg.mxu0
    %1056 = vmatprep.subr.mxu0 0.0
    %1057 = vmatpush1.msra.mxu0 0.0
    %1058 = vmatprep.subr.mxu0 0.0
    %1059 = vmatpush1.msra.mxu0 0.0
    %1060 = vmatprep.subr.mxu0 0.0
    %1061 = vmatpush1.msra.mxu0 0.0
    %1062 = vmatprep.subr.mxu0 0.0
    %1063 = vmatpush1.msra.mxu0 0.0
    %1064 = vmatprep.subr.mxu0 0.0
    %1065 = vmatpush1.msra.mxu0 0.0
    %1066 = vmatprep.subr.mxu0 0.0
    %1067 = vmatpush1.msra.mxu0 0.0
    %1068 = vmatprep.subr.mxu0 0.0
    %1069 = vmatpush1.msra.mxu0 0.0
    %1070 = vmatprep.subr.mxu0 0.0
    %1071 = vmatpush1.msra.mxu0 0.0
    %1072 = vmatprep.subr.mxu0 %v972
    %1073 = vmatpush1.msra.mxu0 %v971
    %1074 = vmatprep.subr.mxu0 %v968
    %1075 = vmatpush1.msra.mxu0 %v967
    %1076 = vmatprep.subr.mxu0 %v964
    %1077 = vmatpush1.msra.mxu0 %v963
    %1078 = vmatprep.subr.mxu0 %v960
    %1079 = vmatpush1.msra.mxu0 %v959
    %1080 = vmatprep.subr.mxu0 %v956
    %1081 = vmatpush1.msra.mxu0 %v955
    %1082 = vmatprep.subr.mxu0 %v952
    %1083 = vmatpush1.msra.mxu0 %v951
    %1084 = vmatprep.subr.mxu0 %v948
    %1085 = vmatpush1.msra.mxu0 %v947
    %1086 = vmatprep.subr.mxu0 %v944
    %1087 = vmatpush1.msra.mxu0 %v943
    %1088 = vmatprep.subr.mxu0 0.0
    %1089 = vmatpush2.msra.mxu0 0.0
    %1090 = vmatprep.subr.mxu0 0.0
    %1091 = vmatpush2.msra.mxu0 0.0
    %1092 = vmatprep.subr.mxu0 0.0
    %1093 = vmatpush2.msra.mxu0 0.0
    %1094 = vmatprep.subr.mxu0 0.0
    %1095 = vmatpush2.msra.mxu0 0.0
    %1096 = vmatprep.subr.mxu0 0.0
    %1097 = vmatpush2.msra.mxu0 0.0
    %1098 = vmatprep.subr.mxu0 0.0
    %1099 = vmatpush2.msra.mxu0 0.0
    %1100 = vmatprep.subr.mxu0 0.0
    %1101 = vmatpush2.msra.mxu0 0.0
    %1102 = vmatprep.subr.mxu0 0.0
    %1103 = vmatpush2.msra.mxu0 0.0
    %1104 = vmatprep.subr.mxu0 0.0
    %1105 = vmatpush2.msra.mxu0 0.0
    %1106 = vmatprep.subr.mxu0 0.0
    %1107 = vmatpush2.msra.mxu0 0.0
    %1108 = vmatprep.subr.mxu0 0.0
    %1109 = vmatpush2.msra.mxu0 0.0
    %1110 = vmatprep.subr.mxu0 0.0
    %1111 = vmatpush2.msra.mxu0 0.0
    %1112 = vmatprep.subr.mxu0 0.0
    %1113 = vmatpush2.msra.mxu0 0.0
    %1114 = vmatprep.subr.mxu0 0.0
    %1115 = vmatpush2.msra.mxu0 0.0
    %1116 = vmatprep.subr.mxu0 0.0
    %1117 = vmatpush2.msra.mxu0 0.0
    %1118 = vmatprep.subr.mxu0 0.0
    %1119 = vmatpush2.msra.mxu0 0.0
    %1120 = vmatprep.mubr.f32.mxu0 0.0
    %1121 = vmatmul.mubr.f32.gmra.mxu0 %v974
    %v1122 = vpop.f32.mrf.mxu0
    %v1123 = vadd.f32 0.0, %v1122
    %v1124 = vpop.f32.mrf.mxu0
    %v1125 = vadd.f32 0.0, %v1124
    %1126 = vmatprep.mubr.f32.mxu0 0.0
    %1127 = vmatmul.mubr.f32.gmra.mxu0 %v977
    %v1128 = vpop.f32.mrf.mxu0
    %v1129 = vadd.f32 0.0, %v1128
    %v1130 = vpop.f32.mrf.mxu0
    %v1131 = vadd.f32 0.0, %v1130
    %1132 = vdwg.mxu0
    %1133 = vst [vmem:[#allocation2 + $0x100] sm:$0xff] %v1046
    %1134 = vst [vmem:[#allocation2 + $0x108] sm:$0xff] %v1048
    %1135 = vst [vmem:[#allocation2 + $0x110] sm:$0xff] %v1123
    %1136 = vst [vmem:[#allocation2 + $0x118] sm:$0xff] %v1125
    %1137 = vst [vmem:[#allocation2 + $0x120] sm:$0xff] %v1052
    %1138 = vst [vmem:[#allocation2 + $0x128] sm:$0xff] %v1054
    %1139 = vst [vmem:[#allocation2 + $0x130] sm:$0xff] %v1129
    %1140 = vst [vmem:[#allocation2 + $0x138] sm:$0xff] %v1131
    %v1141 = vld [vmem:[%s0 + $0x50] sm:$0xff]
    %v1142 = vld [vmem:[%s0 + $0x58] sm:$0xff]
    %v1143 = vld [vmem:[#allocation7] sm:$0xff]
    %v1144 = vld [vmem:[#allocation7 + $0x8] sm:$0xff]
    %v1145 = vld [vmem:[#allocation7 + $0x10] sm:$0xff]
    %v1146 = vld [vmem:[#allocation7 + $0x18] sm:$0xff]
    %v1147 = vld [vmem:[#allocation7 + $0x20] sm:$0xff]
    %v1148 = vld [vmem:[#allocation7 + $0x28] sm:$0xff]
    %v1149 = vld [vmem:[#allocation7 + $0x30] sm:$0xff]
    %v1150 = vld [vmem:[#allocation7 + $0x38] sm:$0xff]
    %v1151 = vld [vmem:[#allocation7 + $0x40] sm:$0xff]
    %v1152 = vld [vmem:[#allocation7 + $0x48] sm:$0xff]
    %v1153 = vld [vmem:[#allocation7 + $0x50] sm:$0xff]
    %v1154 = vld [vmem:[#allocation7 + $0x58] sm:$0xff]
    %v1155 = vld [vmem:[#allocation7 + $0x60] sm:$0xff]
    %v1156 = vld [vmem:[#allocation7 + $0x68] sm:$0xff]
    %v1157 = vld [vmem:[#allocation7 + $0x70] sm:$0xff]
    %v1158 = vld [vmem:[#allocation7 + $0x78] sm:$0xff]
    %v1159 = vld [vmem:[#allocation7 + $0x80] sm:$0xff]
    %v1160 = vld [vmem:[#allocation7 + $0x88] sm:$0xff]
    %v1161 = vld [vmem:[#allocation7 + $0x90] sm:$0xff]
    %v1162 = vld [vmem:[#allocation7 + $0x98] sm:$0xff]
    %v1163 = vld [vmem:[#allocation7 + $0xa0] sm:$0xff]
    %v1164 = vld [vmem:[#allocation7 + $0xa8] sm:$0xff]
    %v1165 = vld [vmem:[#allocation7 + $0xb0] sm:$0xff]
    %v1166 = vld [vmem:[#allocation7 + $0xb8] sm:$0xff]
    %v1167 = vld [vmem:[#allocation7 + $0xc0] sm:$0xff]
    %v1168 = vld [vmem:[#allocation7 + $0xc8] sm:$0xff]
    %v1169 = vld [vmem:[#allocation7 + $0xd0] sm:$0xff]
    %v1170 = vld [vmem:[#allocation7 + $0xd8] sm:$0xff]
    %v1171 = vld [vmem:[#allocation7 + $0xe0] sm:$0xff]
    %v1172 = vld [vmem:[#allocation7 + $0xe8] sm:$0xff]
    %v1173 = vld [vmem:[#allocation7 + $0xf0] sm:$0xff]
    %v1174 = vld [vmem:[#allocation7 + $0xf8] sm:$0xff]
    %v1176 = vsel %vm164, %v1141, 0
    %v1179 = vsel %vm164, %v1142, 0
    %1181 = vmatprep.subr.mxu0 0.0
    %1182 = vmatpush1.msra.mxu0 0.0
    %1183 = vmatprep.subr.mxu0 0.0
    %1184 = vmatpush1.msra.mxu0 0.0
    %1185 = vmatprep.subr.mxu0 0.0
    %1186 = vmatpush1.msra.mxu0 0.0
    %1187 = vmatprep.subr.mxu0 0.0
    %1188 = vmatpush1.msra.mxu0 0.0
    %1189 = vmatprep.subr.mxu0 0.0
    %1190 = vmatpush1.msra.mxu0 0.0
    %1191 = vmatprep.subr.mxu0 0.0
    %1192 = vmatpush1.msra.mxu0 0.0
    %1193 = vmatprep.subr.mxu0 0.0
    %1194 = vmatpush1.msra.mxu0 0.0
    %1195 = vmatprep.subr.mxu0 0.0
    %1196 = vmatpush1.msra.mxu0 0.0
    %1197 = vmatprep.subr.mxu0 %v1172
    %1198 = vmatpush1.msra.mxu0 %v1171
    %1199 = vmatprep.subr.mxu0 %v1168
    %1200 = vmatpush1.msra.mxu0 %v1167
    %1201 = vmatprep.subr.mxu0 %v1164
    %1202 = vmatpush1.msra.mxu0 %v1163
    %1203 = vmatprep.subr.mxu0 %v1160
    %1204 = vmatpush1.msra.mxu0 %v1159
    %1205 = vmatprep.subr.mxu0 %v1156
    %1206 = vmatpush1.msra.mxu0 %v1155
    %1207 = vmatprep.subr.mxu0 %v1152
    %1208 = vmatpush1.msra.mxu0 %v1151
    %1209 = vmatprep.subr.mxu0 %v1148
    %1210 = vmatpush1.msra.mxu0 %v1147
    %1211 = vmatprep.subr.mxu0 %v1144
    %1212 = vmatpush1.msra.mxu0 %v1143
    %1213 = vmatprep.subr.mxu0 0.0
    %1214 = vmatpush2.msra.mxu0 0.0
    %1215 = vmatprep.subr.mxu0 0.0
    %1216 = vmatpush2.msra.mxu0 0.0
    %1217 = vmatprep.subr.mxu0 0.0
    %1218 = vmatpush2.msra.mxu0 0.0
    %1219 = vmatprep.subr.mxu0 0.0
    %1220 = vmatpush2.msra.mxu0 0.0
    %1221 = vmatprep.subr.mxu0 0.0
    %1222 = vmatpush2.msra.mxu0 0.0
    %1223 = vmatprep.subr.mxu0 0.0
    %1224 = vmatpush2.msra.mxu0 0.0
    %1225 = vmatprep.subr.mxu0 0.0
    %1226 = vmatpush2.msra.mxu0 0.0
    %1227 = vmatprep.subr.mxu0 0.0
    %1228 = vmatpush2.msra.mxu0 0.0
    %1229 = vmatprep.subr.mxu0 0.0
    %1230 = vmatpush2.msra.mxu0 0.0
    %1231 = vmatprep.subr.mxu0 0.0
    %1232 = vmatpush2.msra.mxu0 0.0
    %1233 = vmatprep.subr.mxu0 0.0
    %1234 = vmatpush2.msra.mxu0 0.0
    %1235 = vmatprep.subr.mxu0 0.0
    %1236 = vmatpush2.msra.mxu0 0.0
    %1237 = vmatprep.subr.mxu0 0.0
    %1238 = vmatpush2.msra.mxu0 0.0
    %1239 = vmatprep.subr.mxu0 0.0
    %1240 = vmatpush2.msra.mxu0 0.0
    %1241 = vmatprep.subr.mxu0 0.0
    %1242 = vmatpush2.msra.mxu0 0.0
    %1243 = vmatprep.subr.mxu0 0.0
    %1244 = vmatpush2.msra.mxu0 0.0
    %1245 = vmatprep.mubr.f32.mxu0 0.0
    %1246 = vmatmul.mubr.f32.gmra.mxu0 %v1176
    %v1247 = vpop.f32.mrf.mxu0
    %v1248 = vadd.f32 0.0, %v1247
    %v1249 = vpop.f32.mrf.mxu0
    %v1250 = vadd.f32 0.0, %v1249
    %1251 = vmatprep.mubr.f32.mxu0 0.0
    %1252 = vmatmul.mubr.f32.gmra.mxu0 %v1179
    %v1253 = vpop.f32.mrf.mxu0
    %v1254 = vadd.f32 0.0, %v1253
    %v1255 = vpop.f32.mrf.mxu0
    %v1256 = vadd.f32 0.0, %v1255
    %1257 = vdwg.mxu0
    %1258 = vmatprep.subr.mxu0 0.0
    %1259 = vmatpush1.msra.mxu0 0.0
    %1260 = vmatprep.subr.mxu0 0.0
    %1261 = vmatpush1.msra.mxu0 0.0
    %1262 = vmatprep.subr.mxu0 0.0
    %1263 = vmatpush1.msra.mxu0 0.0
    %1264 = vmatprep.subr.mxu0 0.0
    %1265 = vmatpush1.msra.mxu0 0.0
    %1266 = vmatprep.subr.mxu0 0.0
    %1267 = vmatpush1.msra.mxu0 0.0
    %1268 = vmatprep.subr.mxu0 0.0
    %1269 = vmatpush1.msra.mxu0 0.0
    %1270 = vmatprep.subr.mxu0 0.0
    %1271 = vmatpush1.msra.mxu0 0.0
    %1272 = vmatprep.subr.mxu0 0.0
    %1273 = vmatpush1.msra.mxu0 0.0
    %1274 = vmatprep.subr.mxu0 %v1174
    %1275 = vmatpush1.msra.mxu0 %v1173
    %1276 = vmatprep.subr.mxu0 %v1170
    %1277 = vmatpush1.msra.mxu0 %v1169
    %1278 = vmatprep.subr.mxu0 %v1166
    %1279 = vmatpush1.msra.mxu0 %v1165
    %1280 = vmatprep.subr.mxu0 %v1162
    %1281 = vmatpush1.msra.mxu0 %v1161
    %1282 = vmatprep.subr.mxu0 %v1158
    %1283 = vmatpush1.msra.mxu0 %v1157
    %1284 = vmatprep.subr.mxu0 %v1154
    %1285 = vmatpush1.msra.mxu0 %v1153
    %1286 = vmatprep.subr.mxu0 %v1150
    %1287 = vmatpush1.msra.mxu0 %v1149
    %1288 = vmatprep.subr.mxu0 %v1146
    %1289 = vmatpush1.msra.mxu0 %v1145
    %1290 = vmatprep.subr.mxu0 0.0
    %1291 = vmatpush2.msra.mxu0 0.0
    %1292 = vmatprep.subr.mxu0 0.0
    %1293 = vmatpush2.msra.mxu0 0.0
    %1294 = vmatprep.subr.mxu0 0.0
    %1295 = vmatpush2.msra.mxu0 0.0
    %1296 = vmatprep.subr.mxu0 0.0
    %1297 = vmatpush2.msra.mxu0 0.0
    %1298 = vmatprep.subr.mxu0 0.0
    %1299 = vmatpush2.msra.mxu0 0.0
    %1300 = vmatprep.subr.mxu0 0.0
    %1301 = vmatpush2.msra.mxu0 0.0
    %1302 = vmatprep.subr.mxu0 0.0
    %1303 = vmatpush2.msra.mxu0 0.0
    %1304 = vmatprep.subr.mxu0 0.0
    %1305 = vmatpush2.msra.mxu0 0.0
    %1306 = vmatprep.subr.mxu0 0.0
    %1307 = vmatpush2.msra.mxu0 0.0
    %1308 = vmatprep.subr.mxu0 0.0
    %1309 = vmatpush2.msra.mxu0 0.0
    %1310 = vmatprep.subr.mxu0 0.0
    %1311 = vmatpush2.msra.mxu0 0.0
    %1312 = vmatprep.subr.mxu0 0.0
    %1313 = vmatpush2.msra.mxu0 0.0
    %1314 = vmatprep.subr.mxu0 0.0
    %1315 = vmatpush2.msra.mxu0 0.0
    %1316 = vmatprep.subr.mxu0 0.0
    %1317 = vmatpush2.msra.mxu0 0.0
    %1318 = vmatprep.subr.mxu0 0.0
    %1319 = vmatpush2.msra.mxu0 0.0
    %1320 = vmatprep.subr.mxu0 0.0
    %1321 = vmatpush2.msra.mxu0 0.0
    %1322 = vmatprep.mubr.f32.mxu0 0.0
    %1323 = vmatmul.mubr.f32.gmra.mxu0 %v1176
    %v1324 = vpop.f32.mrf.mxu0
    %v1325 = vadd.f32 0.0, %v1324
    %v1326 = vpop.f32.mrf.mxu0
    %v1327 = vadd.f32 0.0, %v1326
    %1328 = vmatprep.mubr.f32.mxu0 0.0
    %1329 = vmatmul.mubr.f32.gmra.mxu0 %v1179
    %v1330 = vpop.f32.mrf.mxu0
    %v1331 = vadd.f32 0.0, %v1330
    %v1332 = vpop.f32.mrf.mxu0
    %v1333 = vadd.f32 0.0, %v1332
    %1334 = vdwg.mxu0
    %1335 = vst [vmem:[#allocation2 + $0x140] sm:$0xff] %v1248
    %1336 = vst [vmem:[#allocation2 + $0x148] sm:$0xff] %v1250
    %1337 = vst [vmem:[#allocation2 + $0x150] sm:$0xff] %v1325
    %1338 = vst [vmem:[#allocation2 + $0x158] sm:$0xff] %v1327
    %1339 = vst [vmem:[#allocation2 + $0x160] sm:$0xff] %v1254
    %1340 = vst [vmem:[#allocation2 + $0x168] sm:$0xff] %v1256
    %1341 = vst [vmem:[#allocation2 + $0x170] sm:$0xff] %v1331
    %1342 = vst [vmem:[#allocation2 + $0x178] sm:$0xff] %v1333
    %v1343 = vld [vmem:[%s0 + $0x60] sm:$0xff]
    %v1344 = vld [vmem:[%s0 + $0x68] sm:$0xff]
    %v1345 = vld [vmem:[#allocation7] sm:$0xff]
    %v1346 = vld [vmem:[#allocation7 + $0x8] sm:$0xff]
    %v1347 = vld [vmem:[#allocation7 + $0x10] sm:$0xff]
    %v1348 = vld [vmem:[#allocation7 + $0x18] sm:$0xff]
    %v1349 = vld [vmem:[#allocation7 + $0x20] sm:$0xff]
    %v1350 = vld [vmem:[#allocation7 + $0x28] sm:$0xff]
    %v1351 = vld [vmem:[#allocation7 + $0x30] sm:$0xff]
    %v1352 = vld [vmem:[#allocation7 + $0x38] sm:$0xff]
    %v1353 = vld [vmem:[#allocation7 + $0x40] sm:$0xff]
    %v1354 = vld [vmem:[#allocation7 + $0x48] sm:$0xff]
    %v1355 = vld [vmem:[#allocation7 + $0x50] sm:$0xff]
    %v1356 = vld [vmem:[#allocation7 + $0x58] sm:$0xff]
    %v1357 = vld [vmem:[#allocation7 + $0x60] sm:$0xff]
    %v1358 = vld [vmem:[#allocation7 + $0x68] sm:$0xff]
    %v1359 = vld [vmem:[#allocation7 + $0x70] sm:$0xff]
    %v1360 = vld [vmem:[#allocation7 + $0x78] sm:$0xff]
    %v1361 = vld [vmem:[#allocation7 + $0x80] sm:$0xff]
    %v1362 = vld [vmem:[#allocation7 + $0x88] sm:$0xff]
    %v1363 = vld [vmem:[#allocation7 + $0x90] sm:$0xff]
    %v1364 = vld [vmem:[#allocation7 + $0x98] sm:$0xff]
    %v1365 = vld [vmem:[#allocation7 + $0xa0] sm:$0xff]
    %v1366 = vld [vmem:[#allocation7 + $0xa8] sm:$0xff]
    %v1367 = vld [vmem:[#allocation7 + $0xb0] sm:$0xff]
    %v1368 = vld [vmem:[#allocation7 + $0xb8] sm:$0xff]
    %v1369 = vld [vmem:[#allocation7 + $0xc0] sm:$0xff]
    %v1370 = vld [vmem:[#allocation7 + $0xc8] sm:$0xff]
    %v1371 = vld [vmem:[#allocation7 + $0xd0] sm:$0xff]
    %v1372 = vld [vmem:[#allocation7 + $0xd8] sm:$0xff]
    %v1373 = vld [vmem:[#allocation7 + $0xe0] sm:$0xff]
    %v1374 = vld [vmem:[#allocation7 + $0xe8] sm:$0xff]
    %v1375 = vld [vmem:[#allocation7 + $0xf0] sm:$0xff]
    %v1376 = vld [vmem:[#allocation7 + $0xf8] sm:$0xff]
    %v1378 = vsel %vm164, %v1343, 0
    %v1381 = vsel %vm164, %v1344, 0
    %1383 = vmatprep.subr.mxu0 0.0
    %1384 = vmatpush1.msra.mxu0 0.0
    %1385 = vmatprep.subr.mxu0 0.0
    %1386 = vmatpush1.msra.mxu0 0.0
    %1387 = vmatprep.subr.mxu0 0.0
    %1388 = vmatpush1.msra.mxu0 0.0
    %1389 = vmatprep.subr.mxu0 0.0
    %1390 = vmatpush1.msra.mxu0 0.0
    %1391 = vmatprep.subr.mxu0 0.0
    %1392 = vmatpush1.msra.mxu0 0.0
    %1393 = vmatprep.subr.mxu0 0.0
    %1394 = vmatpush1.msra.mxu0 0.0
    %1395 = vmatprep.subr.mxu0 0.0
    %1396 = vmatpush1.msra.mxu0 0.0
    %1397 = vmatprep.subr.mxu0 0.0
    %1398 = vmatpush1.msra.mxu0 0.0
    %1399 = vmatprep.subr.mxu0 %v1374
    %1400 = vmatpush1.msra.mxu0 %v1373
    %1401 = vmatprep.subr.mxu0 %v1370
    %1402 = vmatpush1.msra.mxu0 %v1369
    %1403 = vmatprep.subr.mxu0 %v1366
    %1404 = vmatpush1.msra.mxu0 %v1365
    %1405 = vmatprep.subr.mxu0 %v1362
    %1406 = vmatpush1.msra.mxu0 %v1361
    %1407 = vmatprep.subr.mxu0 %v1358
    %1408 = vmatpush1.msra.mxu0 %v1357
    %1409 = vmatprep.subr.mxu0 %v1354
    %1410 = vmatpush1.msra.mxu0 %v1353
    %1411 = vmatprep.subr.mxu0 %v1350
    %1412 = vmatpush1.msra.mxu0 %v1349
    %1413 = vmatprep.subr.mxu0 %v1346
    %1414 = vmatpush1.msra.mxu0 %v1345
    %1415 = vmatprep.subr.mxu0 0.0
    %1416 = vmatpush2.msra.mxu0 0.0
    %1417 = vmatprep.subr.mxu0 0.0
    %1418 = vmatpush2.msra.mxu0 0.0
    %1419 = vmatprep.subr.mxu0 0.0
    %1420 = vmatpush2.msra.mxu0 0.0
    %1421 = vmatprep.subr.mxu0 0.0
    %1422 = vmatpush2.msra.mxu0 0.0
    %1423 = vmatprep.subr.mxu0 0.0
    %1424 = vmatpush2.msra.mxu0 0.0
    %1425 = vmatprep.subr.mxu0 0.0
    %1426 = vmatpush2.msra.mxu0 0.0
    %1427 = vmatprep.subr.mxu0 0.0
    %1428 = vmatpush2.msra.mxu0 0.0
    %1429 = vmatprep.subr.mxu0 0.0
    %1430 = vmatpush2.msra.mxu0 0.0
    %1431 = vmatprep.subr.mxu0 0.0
    %1432 = vmatpush2.msra.mxu0 0.0
    %1433 = vmatprep.subr.mxu0 0.0
    %1434 = vmatpush2.msra.mxu0 0.0
    %1435 = vmatprep.subr.mxu0 0.0
    %1436 = vmatpush2.msra.mxu0 0.0
    %1437 = vmatprep.subr.mxu0 0.0
    %1438 = vmatpush2.msra.mxu0 0.0
    %1439 = vmatprep.subr.mxu0 0.0
    %1440 = vmatpush2.msra.mxu0 0.0
    %1441 = vmatprep.subr.mxu0 0.0
    %1442 = vmatpush2.msra.mxu0 0.0
    %1443 = vmatprep.subr.mxu0 0.0
    %1444 = vmatpush2.msra.mxu0 0.0
    %1445 = vmatprep.subr.mxu0 0.0
    %1446 = vmatpush2.msra.mxu0 0.0
    %1447 = vmatprep.mubr.f32.mxu0 0.0
    %1448 = vmatmul.mubr.f32.gmra.mxu0 %v1378
    %v1449 = vpop.f32.mrf.mxu0
    %v1450 = vadd.f32 0.0, %v1449
    %v1451 = vpop.f32.mrf.mxu0
    %v1452 = vadd.f32 0.0, %v1451
    %1453 = vmatprep.mubr.f32.mxu0 0.0
    %1454 = vmatmul.mubr.f32.gmra.mxu0 %v1381
    %v1455 = vpop.f32.mrf.mxu0
    %v1456 = vadd.f32 0.0, %v1455
    %v1457 = vpop.f32.mrf.mxu0
    %v1458 = vadd.f32 0.0, %v1457
    %1459 = vdwg.mxu0
    %1460 = vmatprep.subr.mxu0 0.0
    %1461 = vmatpush1.msra.mxu0 0.0
    %1462 = vmatprep.subr.mxu0 0.0
    %1463 = vmatpush1.msra.mxu0 0.0
    %1464 = vmatprep.subr.mxu0 0.0
    %1465 = vmatpush1.msra.mxu0 0.0
    %1466 = vmatprep.subr.mxu0 0.0
    %1467 = vmatpush1.msra.mxu0 0.0
    %1468 = vmatprep.subr.mxu0 0.0
    %1469 = vmatpush1.msra.mxu0 0.0
    %1470 = vmatprep.subr.mxu0 0.0
    %1471 = vmatpush1.msra.mxu0 0.0
    %1472 = vmatprep.subr.mxu0 0.0
    %1473 = vmatpush1.msra.mxu0 0.0
    %1474 = vmatprep.subr.mxu0 0.0
    %1475 = vmatpush1.msra.mxu0 0.0
    %1476 = vmatprep.subr.mxu0 %v1376
    %1477 = vmatpush1.msra.mxu0 %v1375
    %1478 = vmatprep.subr.mxu0 %v1372
    %1479 = vmatpush1.msra.mxu0 %v1371
    %1480 = vmatprep.subr.mxu0 %v1368
    %1481 = vmatpush1.msra.mxu0 %v1367
    %1482 = vmatprep.subr.mxu0 %v1364
    %1483 = vmatpush1.msra.mxu0 %v1363
    %1484 = vmatprep.subr.mxu0 %v1360
    %1485 = vmatpush1.msra.mxu0 %v1359
    %1486 = vmatprep.subr.mxu0 %v1356
    %1487 = vmatpush1.msra.mxu0 %v1355
    %1488 = vmatprep.subr.mxu0 %v1352
    %1489 = vmatpush1.msra.mxu0 %v1351
    %1490 = vmatprep.subr.mxu0 %v1348
    %1491 = vmatpush1.msra.mxu0 %v1347
    %1492 = vmatprep.subr.mxu0 0.0
    %1493 = vmatpush2.msra.mxu0 0.0
    %1494 = vmatprep.subr.mxu0 0.0
    %1495 = vmatpush2.msra.mxu0 0.0
    %1496 = vmatprep.subr.mxu0 0.0
    %1497 = vmatpush2.msra.mxu0 0.0
    %1498 = vmatprep.subr.mxu0 0.0
    %1499 = vmatpush2.msra.mxu0 0.0
    %1500 = vmatprep.subr.mxu0 0.0
    %1501 = vmatpush2.msra.mxu0 0.0
    %1502 = vmatprep.subr.mxu0 0.0
    %1503 = vmatpush2.msra.mxu0 0.0
    %1504 = vmatprep.subr.mxu0 0.0
    %1505 = vmatpush2.msra.mxu0 0.0
    %1506 = vmatprep.subr.mxu0 0.0
    %1507 = vmatpush2.msra.mxu0 0.0
    %1508 = vmatprep.subr.mxu0 0.0
    %1509 = vmatpush2.msra.mxu0 0.0
    %1510 = vmatprep.subr.mxu0 0.0
    %1511 = vmatpush2.msra.mxu0 0.0
    %1512 = vmatprep.subr.mxu0 0.0
    %1513 = vmatpush2.msra.mxu0 0.0
    %1514 = vmatprep.subr.mxu0 0.0
    %1515 = vmatpush2.msra.mxu0 0.0
    %1516 = vmatprep.subr.mxu0 0.0
    %1517 = vmatpush2.msra.mxu0 0.0
    %1518 = vmatprep.subr.mxu0 0.0
    %1519 = vmatpush2.msra.mxu0 0.0
    %1520 = vmatprep.subr.mxu0 0.0
    %1521 = vmatpush2.msra.mxu0 0.0
    %1522 = vmatprep.subr.mxu0 0.0
    %1523 = vmatpush2.msra.mxu0 0.0
    %1524 = vmatprep.mubr.f32.mxu0 0.0
    %1525 = vmatmul.mubr.f32.gmra.mxu0 %v1378
    %v1526 = vpop.f32.mrf.mxu0
    %v1527 = vadd.f32 0.0, %v1526
    %v1528 = vpop.f32.mrf.mxu0
    %v1529 = vadd.f32 0.0, %v1528
    %1530 = vmatprep.mubr.f32.mxu0 0.0
    %1531 = vmatmul.mubr.f32.gmra.mxu0 %v1381
    %v1532 = vpop.f32.mrf.mxu0
    %v1533 = vadd.f32 0.0, %v1532
    %v1534 = vpop.f32.mrf.mxu0
    %v1535 = vadd.f32 0.0, %v1534
    %1536 = vdwg.mxu0
    %1537 = vst [vmem:[#allocation2 + $0x180] sm:$0xff] %v1450
    %1538 = vst [vmem:[#allocation2 + $0x188] sm:$0xff] %v1452
    %1539 = vst [vmem:[#allocation2 + $0x190] sm:$0xff] %v1527
    %1540 = vst [vmem:[#allocation2 + $0x198] sm:$0xff] %v1529
    %1541 = vst [vmem:[#allocation2 + $0x1a0] sm:$0xff] %v1456
    %1542 = vst [vmem:[#allocation2 + $0x1a8] sm:$0xff] %v1458
    %1543 = vst [vmem:[#allocation2 + $0x1b0] sm:$0xff] %v1533
    %1544 = vst [vmem:[#allocation2 + $0x1b8] sm:$0xff] %v1535
    %v1545 = vld [vmem:[%s0 + $0x70] sm:$0xff]
    %v1546 = vld [vmem:[%s0 + $0x78] sm:$0xff]
    %v1547 = vld [vmem:[#allocation7] sm:$0xff]
    %v1548 = vld [vmem:[#allocation7 + $0x8] sm:$0xff]
    %v1549 = vld [vmem:[#allocation7 + $0x10] sm:$0xff]
    %v1550 = vld [vmem:[#allocation7 + $0x18] sm:$0xff]
    %v1551 = vld [vmem:[#allocation7 + $0x20] sm:$0xff]
    %v1552 = vld [vmem:[#allocation7 + $0x28] sm:$0xff]
    %v1553 = vld [vmem:[#allocation7 + $0x30] sm:$0xff]
    %v1554 = vld [vmem:[#allocation7 + $0x38] sm:$0xff]
    %v1555 = vld [vmem:[#allocation7 + $0x40] sm:$0xff]
    %v1556 = vld [vmem:[#allocation7 + $0x48] sm:$0xff]
    %v1557 = vld [vmem:[#allocation7 + $0x50] sm:$0xff]
    %v1558 = vld [vmem:[#allocation7 + $0x58] sm:$0xff]
    %v1559 = vld [vmem:[#allocation7 + $0x60] sm:$0xff]
    %v1560 = vld [vmem:[#allocation7 + $0x68] sm:$0xff]
    %v1561 = vld [vmem:[#allocation7 + $0x70] sm:$0xff]
    %v1562 = vld [vmem:[#allocation7 + $0x78] sm:$0xff]
    %v1563 = vld [vmem:[#allocation7 + $0x80] sm:$0xff]
    %v1564 = vld [vmem:[#allocation7 + $0x88] sm:$0xff]
    %v1565 = vld [vmem:[#allocation7 + $0x90] sm:$0xff]
    %v1566 = vld [vmem:[#allocation7 + $0x98] sm:$0xff]
    %v1567 = vld [vmem:[#allocation7 + $0xa0] sm:$0xff]
    %v1568 = vld [vmem:[#allocation7 + $0xa8] sm:$0xff]
    %v1569 = vld [vmem:[#allocation7 + $0xb0] sm:$0xff]
    %v1570 = vld [vmem:[#allocation7 + $0xb8] sm:$0xff]
    %v1571 = vld [vmem:[#allocation7 + $0xc0] sm:$0xff]
    %v1572 = vld [vmem:[#allocation7 + $0xc8] sm:$0xff]
    %v1573 = vld [vmem:[#allocation7 + $0xd0] sm:$0xff]
    %v1574 = vld [vmem:[#allocation7 + $0xd8] sm:$0xff]
    %v1575 = vld [vmem:[#allocation7 + $0xe0] sm:$0xff]
    %v1576 = vld [vmem:[#allocation7 + $0xe8] sm:$0xff]
    %v1577 = vld [vmem:[#allocation7 + $0xf0] sm:$0xff]
    %v1578 = vld [vmem:[#allocation7 + $0xf8] sm:$0xff]
    %v1580 = vsel %vm164, %v1545, 0
    %v1583 = vsel %vm164, %v1546, 0
    %1585 = vmatprep.subr.mxu0 0.0
    %1586 = vmatpush1.msra.mxu0 0.0
    %1587 = vmatprep.subr.mxu0 0.0
    %1588 = vmatpush1.msra.mxu0 0.0
    %1589 = vmatprep.subr.mxu0 0.0
    %1590 = vmatpush1.msra.mxu0 0.0
    %1591 = vmatprep.subr.mxu0 0.0
    %1592 = vmatpush1.msra.mxu0 0.0
    %1593 = vmatprep.subr.mxu0 0.0
    %1594 = vmatpush1.msra.mxu0 0.0
    %1595 = vmatprep.subr.mxu0 0.0
    %1596 = vmatpush1.msra.mxu0 0.0
    %1597 = vmatprep.subr.mxu0 0.0
    %1598 = vmatpush1.msra.mxu0 0.0
    %1599 = vmatprep.subr.mxu0 0.0
    %1600 = vmatpush1.msra.mxu0 0.0
    %1601 = vmatprep.subr.mxu0 %v1576
    %1602 = vmatpush1.msra.mxu0 %v1575
    %1603 = vmatprep.subr.mxu0 %v1572
    %1604 = vmatpush1.msra.mxu0 %v1571
    %1605 = vmatprep.subr.mxu0 %v1568
    %1606 = vmatpush1.msra.mxu0 %v1567
    %1607 = vmatprep.subr.mxu0 %v1564
    %1608 = vmatpush1.msra.mxu0 %v1563
    %1609 = vmatprep.subr.mxu0 %v1560
    %1610 = vmatpush1.msra.mxu0 %v1559
    %1611 = vmatprep.subr.mxu0 %v1556
    %1612 = vmatpush1.msra.mxu0 %v1555
    %1613 = vmatprep.subr.mxu0 %v1552
    %1614 = vmatpush1.msra.mxu0 %v1551
    %1615 = vmatprep.subr.mxu0 %v1548
    %1616 = vmatpush1.msra.mxu0 %v1547
    %1617 = vmatprep.subr.mxu0 0.0
    %1618 = vmatpush2.msra.mxu0 0.0
    %1619 = vmatprep.subr.mxu0 0.0
    %1620 = vmatpush2.msra.mxu0 0.0
    %1621 = vmatprep.subr.mxu0 0.0
    %1622 = vmatpush2.msra.mxu0 0.0
    %1623 = vmatprep.subr.mxu0 0.0
    %1624 = vmatpush2.msra.mxu0 0.0
    %1625 = vmatprep.subr.mxu0 0.0
    %1626 = vmatpush2.msra.mxu0 0.0
    %1627 = vmatprep.subr.mxu0 0.0
    %1628 = vmatpush2.msra.mxu0 0.0
    %1629 = vmatprep.subr.mxu0 0.0
    %1630 = vmatpush2.msra.mxu0 0.0
    %1631 = vmatprep.subr.mxu0 0.0
    %1632 = vmatpush2.msra.mxu0 0.0
    %1633 = vmatprep.subr.mxu0 0.0
    %1634 = vmatpush2.msra.mxu0 0.0
    %1635 = vmatprep.subr.mxu0 0.0
    %1636 = vmatpush2.msra.mxu0 0.0
    %1637 = vmatprep.subr.mxu0 0.0
    %1638 = vmatpush2.msra.mxu0 0.0
    %1639 = vmatprep.subr.mxu0 0.0
    %1640 = vmatpush2.msra.mxu0 0.0
    %1641 = vmatprep.subr.mxu0 0.0
    %1642 = vmatpush2.msra.mxu0 0.0
    %1643 = vmatprep.subr.mxu0 0.0
    %1644 = vmatpush2.msra.mxu0 0.0
    %1645 = vmatprep.subr.mxu0 0.0
    %1646 = vmatpush2.msra.mxu0 0.0
    %1647 = vmatprep.subr.mxu0 0.0
    %1648 = vmatpush2.msra.mxu0 0.0
    %1649 = vmatprep.mubr.f32.mxu0 0.0
    %1650 = vmatmul.mubr.f32.gmra.mxu0 %v1580
    %v1651 = vpop.f32.mrf.mxu0
    %v1652 = vadd.f32 0.0, %v1651
    %v1653 = vpop.f32.mrf.mxu0
    %v1654 = vadd.f32 0.0, %v1653
    %1655 = vmatprep.mubr.f32.mxu0 0.0
    %1656 = vmatmul.mubr.f32.gmra.mxu0 %v1583
    %v1657 = vpop.f32.mrf.mxu0
    %v1658 = vadd.f32 0.0, %v1657
    %v1659 = vpop.f32.mrf.mxu0
    %v1660 = vadd.f32 0.0, %v1659
    %1661 = vdwg.mxu0
    %1662 = vmatprep.subr.mxu0 0.0
    %1663 = vmatpush1.msra.mxu0 0.0
    %1664 = vmatprep.subr.mxu0 0.0
    %1665 = vmatpush1.msra.mxu0 0.0
    %1666 = vmatprep.subr.mxu0 0.0
    %1667 = vmatpush1.msra.mxu0 0.0
    %1668 = vmatprep.subr.mxu0 0.0
    %1669 = vmatpush1.msra.mxu0 0.0
    %1670 = vmatprep.subr.mxu0 0.0
    %1671 = vmatpush1.msra.mxu0 0.0
    %1672 = vmatprep.subr.mxu0 0.0
    %1673 = vmatpush1.msra.mxu0 0.0
    %1674 = vmatprep.subr.mxu0 0.0
    %1675 = vmatpush1.msra.mxu0 0.0
    %1676 = vmatprep.subr.mxu0 0.0
    %1677 = vmatpush1.msra.mxu0 0.0
    %1678 = vmatprep.subr.mxu0 %v1578
    %1679 = vmatpush1.msra.mxu0 %v1577
    %1680 = vmatprep.subr.mxu0 %v1574
    %1681 = vmatpush1.msra.mxu0 %v1573
    %1682 = vmatprep.subr.mxu0 %v1570
    %1683 = vmatpush1.msra.mxu0 %v1569
    %1684 = vmatprep.subr.mxu0 %v1566
    %1685 = vmatpush1.msra.mxu0 %v1565
    %1686 = vmatprep.subr.mxu0 %v1562
    %1687 = vmatpush1.msra.mxu0 %v1561
    %1688 = vmatprep.subr.mxu0 %v1558
    %1689 = vmatpush1.msra.mxu0 %v1557
    %1690 = vmatprep.subr.mxu0 %v1554
    %1691 = vmatpush1.msra.mxu0 %v1553
    %1692 = vmatprep.subr.mxu0 %v1550
    %1693 = vmatpush1.msra.mxu0 %v1549
    %1694 = vmatprep.subr.mxu0 0.0
    %1695 = vmatpush2.msra.mxu0 0.0
    %1696 = vmatprep.subr.mxu0 0.0
    %1697 = vmatpush2.msra.mxu0 0.0
    %1698 = vmatprep.subr.mxu0 0.0
    %1699 = vmatpush2.msra.mxu0 0.0
    %1700 = vmatprep.subr.mxu0 0.0
    %1701 = vmatpush2.msra.mxu0 0.0
    %1702 = vmatprep.subr.mxu0 0.0
    %1703 = vmatpush2.msra.mxu0 0.0
    %1704 = vmatprep.subr.mxu0 0.0
    %1705 = vmatpush2.msra.mxu0 0.0
    %1706 = vmatprep.subr.mxu0 0.0
    %1707 = vmatpush2.msra.mxu0 0.0
    %1708 = vmatprep.subr.mxu0 0.0
    %1709 = vmatpush2.msra.mxu0 0.0
    %1710 = vmatprep.subr.mxu0 0.0
    %1711 = vmatpush2.msra.mxu0 0.0
    %1712 = vmatprep.subr.mxu0 0.0
    %1713 = vmatpush2.msra.mxu0 0.0
    %1714 = vmatprep.subr.mxu0 0.0
    %1715 = vmatpush2.msra.mxu0 0.0
    %1716 = vmatprep.subr.mxu0 0.0
    %1717 = vmatpush2.msra.mxu0 0.0
    %1718 = vmatprep.subr.mxu0 0.0
    %1719 = vmatpush2.msra.mxu0 0.0
    %1720 = vmatprep.subr.mxu0 0.0
    %1721 = vmatpush2.msra.mxu0 0.0
    %1722 = vmatprep.subr.mxu0 0.0
    %1723 = vmatpush2.msra.mxu0 0.0
    %1724 = vmatprep.subr.mxu0 0.0
    %1725 = vmatpush2.msra.mxu0 0.0
    %1726 = vmatprep.mubr.f32.mxu0 0.0
    %1727 = vmatmul.mubr.f32.gmra.mxu0 %v1580
    %v1728 = vpop.f32.mrf.mxu0
    %v1729 = vadd.f32 0.0, %v1728
    %v1730 = vpop.f32.mrf.mxu0
    %v1731 = vadd.f32 0.0, %v1730
    %1732 = vmatprep.mubr.f32.mxu0 0.0
    %1733 = vmatmul.mubr.f32.gmra.mxu0 %v1583
    %v1734 = vpop.f32.mrf.mxu0
    %v1735 = vadd.f32 0.0, %v1734
    %v1736 = vpop.f32.mrf.mxu0
    %v1737 = vadd.f32 0.0, %v1736
    %1738 = vdwg.mxu0
    %1739 = vst [vmem:[#allocation2 + $0x1c0] sm:$0xff] %v1652
    %1740 = vst [vmem:[#allocation2 + $0x1c8] sm:$0xff] %v1654
    %1741 = vst [vmem:[#allocation2 + $0x1d0] sm:$0xff] %v1729
    %1742 = vst [vmem:[#allocation2 + $0x1d8] sm:$0xff] %v1731
    %1743 = vst [vmem:[#allocation2 + $0x1e0] sm:$0xff] %v1658
    %1744 = vst [vmem:[#allocation2 + $0x1e8] sm:$0xff] %v1660
    %1745 = vst [vmem:[#allocation2 + $0x1f0] sm:$0xff] %v1735
    %1746 = vst [vmem:[#allocation2 + $0x1f8] sm:$0xff] %v1737
    %v1747 = vld [vmem:[#allocation9] sm:$0xff]
    %v1748 = vld [vmem:[#allocation9 + $0x8] sm:$0x3]
    %v1749 = vlaneseq
    %v1750 = vand.u32 %v1749, 127
    %v1751 = vadd.s32 %v1750, 128
    %v1752 = vadd.s32 %v1750, 256
    %v1753 = vadd.s32 %v1750, 384
    %vm1754 = vcmp.ge.s32.totalorder %v1750, 256
    %vm1755 = vcmp.ge.s32.totalorder %v1751, 256
    %vm1756 = vcmp.ge.s32.totalorder %v1752, 256
    %vm1757 = vcmp.ge.s32.totalorder %v1753, 256
    %vm1758 = vcmp.lt.s32.totalorder %v1750, 384
    %vm1759 = vcmp.lt.s32.totalorder %v1751, 384
    %vm1760 = vcmp.lt.s32.totalorder %v1752, 384
    %vm1761 = vcmp.lt.s32.totalorder %v1753, 384
    %vm1762 = vmand %vm1754, %vm1758
    %vm1763 = vmand %vm1755, %vm1759
    %vm1764 = vmand %vm1756, %vm1760
    %vm1765 = vmand %vm1757, %vm1761
    %v1766 = vsel %vm1762, 1.0, 0.5
    %v1767 = vsel %vm1763, 1.0, 0.5
    %v1768 = vsel %vm1764, 1.0, 0.5
    %v1769 = vsel %vm1765, 1.0, 0.5
    %v1770 = vsel %vm1762, 0.0, 0.5
    %v1771 = vsel %vm1763, 0.0, 0.5
    %v1772 = vsel %vm1764, 0.0, 0.5
    %v1773 = vsel %vm1765, 0.0, 0.5
    %v1774 = vlaneseq
    %v1775 = vshrl.u32 %v1774, 7
    %v1776 = vadd.s32 %v1775, 8
    %v1777 = vld [vmem:[%s4] sm:$0xff]
    %v1778 = vld [vmem:[%s4 + $0x8] sm:$0xff]
    %v1779 = vld [vmem:[%s4 + $0x10] sm:$0xff]
    %v1780 = vld [vmem:[%s4 + $0x18] sm:$0xff]
    %v1781 = vld [vmem:[%s4 + $0x20] sm:$0x3]
    %v1782 = vld [vmem:[%s4 + $0x28] sm:$0x3]
    %v1783 = vld [vmem:[%s4 + $0x30] sm:$0x3]
    %v1784 = vld [vmem:[%s4 + $0x38] sm:$0x3]
    %1786 = vset.pattern.permute.xlu0 0
    %1787 = vperm.xlu0 %1786, 0.0
    %v1788 = vpop.permute.xlu0 %1787
    %v1790 = vmul.f32 %v1788, %v1777
    %v1791 = vmul.f32 %v1788, %v1778
    %v1792 = vmul.f32 %v1788, %v1779
    %v1793 = vmul.f32 %v1788, %v1780
    %v1794 = vmul.f32 %v1788, %v1781
    %v1795 = vmul.f32 %v1788, %v1782
    %v1796 = vmul.f32 %v1788, %v1783
    %v1797 = vmul.f32 %v1788, %v1784
    %v1798 = vld [vmem:[%s6] sm:$0xff]
    %v1799 = vld [vmem:[%s6 + $0x8] sm:$0xff]
    %v1800 = vld [vmem:[%s6 + $0x10] sm:$0xff]
    %v1801 = vld [vmem:[%s6 + $0x18] sm:$0xff]
    %v1802 = vld [vmem:[%s6 + $0x20] sm:$0x3]
    %v1803 = vld [vmem:[%s6 + $0x28] sm:$0x3]
    %v1804 = vld [vmem:[%s6 + $0x30] sm:$0x3]
    %v1805 = vld [vmem:[%s6 + $0x38] sm:$0x3]
    %v1806 = vadd.f32 %v1790, %v1798
    %v1807 = vadd.f32 %v1791, %v1799
    %v1808 = vadd.f32 %v1792, %v1800
    %v1809 = vadd.f32 %v1793, %v1801
    %v1810 = vadd.f32 %v1794, %v1802
    %v1811 = vadd.f32 %v1795, %v1803
    %v1812 = vadd.f32 %v1796, %v1804
    %v1813 = vadd.f32 %v1797, %v1805
    %v1814 = vld [vmem:[#allocation2] sm:$0xff]
    %v1815 = vld [vmem:[#allocation2 + $0x8] sm:$0xff]
    %v1816 = vld [vmem:[#allocation2 + $0x10] sm:$0xff]
    %v1817 = vld [vmem:[#allocation2 + $0x18] sm:$0xff]
    %v1818 = vld [vmem:[#allocation2 + $0x20] sm:$0x3]
    %v1819 = vld [vmem:[#allocation2 + $0x28] sm:$0x3]
    %v1820 = vld [vmem:[#allocation2 + $0x30] sm:$0x3]
    %v1821 = vld [vmem:[#allocation2 + $0x38] sm:$0x3]
    %v1822 = vadd.f32 %v1806, %v1814
    %v1823 = vadd.f32 %v1807, %v1815
    %v1824 = vadd.f32 %v1808, %v1816
    %v1825 = vadd.f32 %v1809, %v1817
    %v1826 = vadd.f32 %v1810, %v1818
    %v1827 = vadd.f32 %v1811, %v1819
    %v1828 = vadd.f32 %v1812, %v1820
    %v1829 = vadd.f32 %v1813, %v1821
    %v1830 = vld [vmem:[%s5] sm:$0xff]
    %v1831 = vld [vmem:[%s5 + $0x8] sm:$0xff]
    %v1832 = vld [vmem:[%s5 + $0x10] sm:$0xff]
    %v1833 = vld [vmem:[%s5 + $0x18] sm:$0xff]
    %v1834 = vld [vmem:[%s5 + $0x20] sm:$0x3]
    %v1835 = vld [vmem:[%s5 + $0x28] sm:$0x3]
    %v1836 = vld [vmem:[%s5 + $0x30] sm:$0x3]
    %v1837 = vld [vmem:[%s5 + $0x38] sm:$0x3]
    %v1838 = vmul.f32 %v1830, 0.0
    %v1839 = vmul.f32 %v1831, 0.0
    %v1840 = vmul.f32 %v1832, 0.0
    %v1841 = vmul.f32 %v1833, 0.0
    %v1842 = vmul.f32 %v1834, 0.0
    %v1843 = vmul.f32 %v1835, 0.0
    %v1844 = vmul.f32 %v1836, 0.0
    %v1845 = vmul.f32 %v1837, 0.0
    %v1846 = vadd.f32 %v1822, %v1838
    %v1847 = vadd.f32 %v1823, %v1839
    %v1848 = vadd.f32 %v1824, %v1840
    %v1849 = vadd.f32 %v1825, %v1841
    %v1850 = vadd.f32 %v1826, %v1842
    %v1851 = vadd.f32 %v1827, %v1843
    %v1852 = vadd.f32 %v1828, %v1844
    %v1853 = vadd.f32 %v1829, %v1845
    %v1854 = vtanh.pop %v1846
    %v1855 = vtanh.pop %v1847
    %v1856 = vtanh.pop %v1848
    %v1857 = vtanh.pop %v1849
    %v1858 = vtanh.pop %v1850
    %v1859 = vtanh.pop %v1851
    %v1860 = vtanh.pop %v1852
    %v1861 = vtanh.pop %v1853
    %v1862 = vmul.f32 %v1854, %v1766
    %v1863 = vmul.f32 %v1855, %v1767
    %v1864 = vmul.f32 %v1856, %v1768
    %v1865 = vmul.f32 %v1857, %v1769
    %v1866 = vmul.f32 %v1858, %v1766
    %v1867 = vmul.f32 %v1859, %v1767
    %v1868 = vmul.f32 %v1860, %v1768
    %v1869 = vmul.f32 %v1861, %v1769
    %v1870 = vadd.f32 %v1862, %v1770
    %v1871 = vadd.f32 %v1863, %v1771
    %v1872 = vadd.f32 %v1864, %v1772
    %v1873 = vadd.f32 %v1865, %v1773
    %v1874 = vadd.f32 %v1866, %v1770
    %v1875 = vadd.f32 %v1867, %v1771
    %v1876 = vadd.f32 %v1868, %v1772
    %v1877 = vadd.f32 %v1869, %v1773
    %v1878 = vmul.f32 %v1871, 0.0
    %v1879 = vmul.f32 %v1875, 0.0
    %v1880 = vmul.f32 %v1870, %v1872
    %v1881 = vmul.f32 %v1874, %v1876
    %v1882 = vadd.f32 %v1878, %v1880
    %v1883 = vadd.f32 %v1879, %v1881
    %v1884 = vtanh.pop %v1882
    %v1885 = vtanh.pop %v1883
    %v1886 = vmul.f32 %v1873, %v1884
    %v1887 = vmul.f32 %v1877, %v1885
    %v1888 = vmul.f32 %v1886, %v1747
    %v1889 = vmul.f32 %v1887, %v1748
    %1890 = vadd.xlane.f32.xlu0 %v1888
    %v1891 = vpop.xlane.xlu0 %1890
    %vm1892 = vcmask 1041408
    %v1893 = vsel %vm1892, %v1889, 0.0
    %1894 = vadd.xlane.f32.xlu0 %v1893
    %v1895 = vpop.xlane.xlu0 %1894
    %vm1896 = vcmp.lt.s32.totalorder %v1775, 2
    %vm1897 = vcmp.lt.s32.totalorder %v1776, 2
    %v1898 = vsel %vm1896, 1, 0
    %v1899 = vsel %vm1897, 1, 0
    %vm1900 = vcmp.eq.s32.totalorder %v1898, 1
    %vm1901 = vcmp.eq.s32.totalorder %v1899, 1
    %v1902 = vsel %vm1900, %v1882, 0.0
    %v1903 = vsel %vm1901, %v1883, 0.0
    %v1904 = vsel %vm1896, %v1891, 0.0
    %v1905 = vsel %vm1897, %v1895, 0.0
    %v1907 = vrot.slane %v1904, 6
    %v1909 = vsel %vm1892, 0.0, %v1907
    %1911 = vset.pattern.permute.xlu0 0
    %1912 = vperm.xlu0 %1911, %v1909
    %v1913 = vpop.permute.xlu0 %1912
    %1915 = vset.pattern.permute.xlu0 0
    %1916 = vperm.xlu0 %1915, %v1907
    %v1917 = vpop.permute.xlu0 %1916
    %v1919 = vmul.f32 %v1913, %v1777
    %v1920 = vmul.f32 %v1913, %v1778
    %v1921 = vmul.f32 %v1913, %v1779
    %v1922 = vmul.f32 %v1913, %v1780
    %v1923 = vmul.f32 %v1917, %v1781
    %v1924 = vmul.f32 %v1917, %v1782
    %v1925 = vmul.f32 %v1917, %v1783
    %v1926 = vmul.f32 %v1917, %v1784
    %v1927 = vadd.f32 %v1919, %v1798
    %v1928 = vadd.f32 %v1920, %v1799
    %v1929 = vadd.f32 %v1921, %v1800
    %v1930 = vadd.f32 %v1922, %v1801
    %v1931 = vadd.f32 %v1923, %v1802
    %v1932 = vadd.f32 %v1924, %v1803
    %v1933 = vadd.f32 %v1925, %v1804
    %v1934 = vadd.f32 %v1926, %v1805
    %v1935 = vld [vmem:[#allocation2 + $0x40] sm:$0xff]
    %v1936 = vld [vmem:[#allocation2 + $0x48] sm:$0xff]
    %v1937 = vld [vmem:[#allocation2 + $0x50] sm:$0xff]
    %v1938 = vld [vmem:[#allocation2 + $0x58] sm:$0xff]
    %v1939 = vld [vmem:[#allocation2 + $0x60] sm:$0x3]
    %v1940 = vld [vmem:[#allocation2 + $0x68] sm:$0x3]
    %v1941 = vld [vmem:[#allocation2 + $0x70] sm:$0x3]
    %v1942 = vld [vmem:[#allocation2 + $0x78] sm:$0x3]
    %v1943 = vadd.f32 %v1927, %v1935
    %v1944 = vadd.f32 %v1928, %v1936
    %v1945 = vadd.f32 %v1929, %v1937
    %v1946 = vadd.f32 %v1930, %v1938
    %v1947 = vadd.f32 %v1931, %v1939
    %v1948 = vadd.f32 %v1932, %v1940
    %v1949 = vadd.f32 %v1933, %v1941
    %v1950 = vadd.f32 %v1934, %v1942
    %v1951 = vmul.f32 %v1904, %v1830
    %v1952 = vmul.f32 %v1904, %v1831
    %v1953 = vmul.f32 %v1904, %v1832
    %v1954 = vmul.f32 %v1904, %v1833
    %v1955 = vmul.f32 %v1905, %v1834
    %v1956 = vmul.f32 %v1905, %v1835
    %v1957 = vmul.f32 %v1905, %v1836
    %v1958 = vmul.f32 %v1905, %v1837
    %v1959 = vadd.f32 %v1943, %v1951
    %v1960 = vadd.f32 %v1944, %v1952
    %v1961 = vadd.f32 %v1945, %v1953
    %v1962 = vadd.f32 %v1946, %v1954
    %v1963 = vadd.f32 %v1947, %v1955
    %v1964 = vadd.f32 %v1948, %v1956
    %v1965 = vadd.f32 %v1949, %v1957
    %v1966 = vadd.f32 %v1950, %v1958
    %v1967 = vtanh.pop %v1959
    %v1968 = vtanh.pop %v1960
    %v1969 = vtanh.pop %v1961
    %v1970 = vtanh.pop %v1962
    %v1971 = vtanh.pop %v1963
    %v1972 = vtanh.pop %v1964
    %v1973 = vtanh.pop %v1965
    %v1974 = vtanh.pop %v1966
    %v1975 = vmul.f32 %v1967, %v1766
    %v1976 = vmul.f32 %v1968, %v1767
    %v1977 = vmul.f32 %v1969, %v1768
    %v1978 = vmul.f32 %v1970, %v1769
    %v1979 = vmul.f32 %v1971, %v1766
    %v1980 = vmul.f32 %v1972, %v1767
    %v1981 = vmul.f32 %v1973, %v1768
    %v1982 = vmul.f32 %v1974, %v1769
    %v1983 = vadd.f32 %v1975, %v1770
    %v1984 = vadd.f32 %v1976, %v1771
    %v1985 = vadd.f32 %v1977, %v1772
    %v1986 = vadd.f32 %v1978, %v1773
    %v1987 = vadd.f32 %v1979, %v1770
    %v1988 = vadd.f32 %v1980, %v1771
    %v1989 = vadd.f32 %v1981, %v1772
    %v1990 = vadd.f32 %v1982, %v1773
    %v1991 = vmul.f32 %v1984, %v1902
    %v1992 = vmul.f32 %v1988, %v1903
    %v1993 = vmul.f32 %v1983, %v1985
    %v1994 = vmul.f32 %v1987, %v1989
    %v1995 = vadd.f32 %v1991, %v1993
    %v1996 = vadd.f32 %v1992, %v1994
    %v1997 = vtanh.pop %v1995
    %v1998 = vtanh.pop %v1996
    %v1999 = vmul.f32 %v1986, %v1997
    %v2000 = vmul.f32 %v1990, %v1998
    %v2001 = vmul.f32 %v1999, %v1747
    %v2002 = vmul.f32 %v2000, %v1748
    %2003 = vadd.xlane.f32.xlu0 %v2001
    %v2004 = vpop.xlane.xlu0 %2003
    %v2005 = vsel %vm1892, %v2002, 0.0
    %2006 = vadd.xlane.f32.xlu0 %v2005
    %v2007 = vpop.xlane.xlu0 %2006
    %vm2008 = vcmp.lt.s32.totalorder %v1775, 4
    %vm2009 = vcmp.lt.s32.totalorder %v1776, 4
    %v2010 = vsel %vm2008, 1, 0
    %v2011 = vsel %vm2009, 1, 0
    %vm2012 = vcmp.eq.s32.totalorder %v2010, 1
    %vm2013 = vcmp.eq.s32.totalorder %v2011, 1
    %v2014 = vsel %vm2012, %v1995, %v1902
    %v2015 = vsel %vm2013, %v1996, %v1903
    %v2016 = vsel %vm2008, %v2004, %v1904
    %v2017 = vsel %vm2009, %v2007, %v1905
    %v2019 = vrot.slane %v2016, 6
    %v2021 = vsel %vm1892, 0.0, %v2019
    %2023 = vset.pattern.permute.xlu0 0
    %2024 = vperm.xlu0 %2023, %v2021
    %v2025 = vpop.permute.xlu0 %2024
    %2027 = vset.pattern.permute.xlu0 0
    %2028 = vperm.xlu0 %2027, %v2019
    %v2029 = vpop.permute.xlu0 %2028
    %v2031 = vmul.f32 %v2025, %v1777
    %v2032 = vmul.f32 %v2025, %v1778
    %v2033 = vmul.f32 %v2025, %v1779
    %v2034 = vmul.f32 %v2025, %v1780
    %v2035 = vmul.f32 %v2029, %v1781
    %v2036 = vmul.f32 %v2029, %v1782
    %v2037 = vmul.f32 %v2029, %v1783
    %v2038 = vmul.f32 %v2029, %v1784
    %v2039 = vadd.f32 %v2031, %v1798
    %v2040 = vadd.f32 %v2032, %v1799
    %v2041 = vadd.f32 %v2033, %v1800
    %v2042 = vadd.f32 %v2034, %v1801
    %v2043 = vadd.f32 %v2035, %v1802
    %v2044 = vadd.f32 %v2036, %v1803
    %v2045 = vadd.f32 %v2037, %v1804
    %v2046 = vadd.f32 %v2038, %v1805
    %v2047 = vld [vmem:[#allocation2 + $0x80] sm:$0xff]
    %v2048 = vld [vmem:[#allocation2 + $0x88] sm:$0xff]
    %v2049 = vld [vmem:[#allocation2 + $0x90] sm:$0xff]
    %v2050 = vld [vmem:[#allocation2 + $0x98] sm:$0xff]
    %v2051 = vld [vmem:[#allocation2 + $0xa0] sm:$0x3]
    %v2052 = vld [vmem:[#allocation2 + $0xa8] sm:$0x3]
    %v2053 = vld [vmem:[#allocation2 + $0xb0] sm:$0x3]
    %v2054 = vld [vmem:[#allocation2 + $0xb8] sm:$0x3]
    %v2055 = vadd.f32 %v2039, %v2047
    %v2056 = vadd.f32 %v2040, %v2048
    %v2057 = vadd.f32 %v2041, %v2049
    %v2058 = vadd.f32 %v2042, %v2050
    %v2059 = vadd.f32 %v2043, %v2051
    %v2060 = vadd.f32 %v2044, %v2052
    %v2061 = vadd.f32 %v2045, %v2053
    %v2062 = vadd.f32 %v2046, %v2054
    %v2063 = vmul.f32 %v2016, %v1830
    %v2064 = vmul.f32 %v2016, %v1831
    %v2065 = vmul.f32 %v2016, %v1832
    %v2066 = vmul.f32 %v2016, %v1833
    %v2067 = vmul.f32 %v2017, %v1834
    %v2068 = vmul.f32 %v2017, %v1835
    %v2069 = vmul.f32 %v2017, %v1836
    %v2070 = vmul.f32 %v2017, %v1837
    %v2071 = vadd.f32 %v2055, %v2063
    %v2072 = vadd.f32 %v2056, %v2064
    %v2073 = vadd.f32 %v2057, %v2065
    %v2074 = vadd.f32 %v2058, %v2066
    %v2075 = vadd.f32 %v2059, %v2067
    %v2076 = vadd.f32 %v2060, %v2068
    %v2077 = vadd.f32 %v2061, %v2069
    %v2078 = vadd.f32 %v2062, %v2070
    %v2079 = vtanh.pop %v2071
    %v2080 = vtanh.pop %v2072
    %v2081 = vtanh.pop %v2073
    %v2082 = vtanh.pop %v2074
    %v2083 = vtanh.pop %v2075
    %v2084 = vtanh.pop %v2076
    %v2085 = vtanh.pop %v2077
    %v2086 = vtanh.pop %v2078
    %v2087 = vmul.f32 %v2079, %v1766
    %v2088 = vmul.f32 %v2080, %v1767
    %v2089 = vmul.f32 %v2081, %v1768
    %v2090 = vmul.f32 %v2082, %v1769
    %v2091 = vmul.f32 %v2083, %v1766
    %v2092 = vmul.f32 %v2084, %v1767
    %v2093 = vmul.f32 %v2085, %v1768
    %v2094 = vmul.f32 %v2086, %v1769
    %v2095 = vadd.f32 %v2087, %v1770
    %v2096 = vadd.f32 %v2088, %v1771
    %v2097 = vadd.f32 %v2089, %v1772
    %v2098 = vadd.f32 %v2090, %v1773
    %v2099 = vadd.f32 %v2091, %v1770
    %v2100 = vadd.f32 %v2092, %v1771
    %v2101 = vadd.f32 %v2093, %v1772
    %v2102 = vadd.f32 %v2094, %v1773
    %v2103 = vmul.f32 %v2096, %v2014
    %v2104 = vmul.f32 %v2100, %v2015
    %v2105 = vmul.f32 %v2095, %v2097
    %v2106 = vmul.f32 %v2099, %v2101
    %v2107 = vadd.f32 %v2103, %v2105
    %v2108 = vadd.f32 %v2104, %v2106
    %v2109 = vtanh.pop %v2107
    %v2110 = vtanh.pop %v2108
    %v2111 = vmul.f32 %v2098, %v2109
    %v2112 = vmul.f32 %v2102, %v2110
    %v2113 = vmul.f32 %v2111, %v1747
    %v2114 = vmul.f32 %v2112, %v1748
    %2115 = vadd.xlane.f32.xlu0 %v2113
    %v2116 = vpop.xlane.xlu0 %2115
    %v2117 = vsel %vm1892, %v2114, 0.0
    %2118 = vadd.xlane.f32.xlu0 %v2117
    %v2119 = vpop.xlane.xlu0 %2118
    %vm2120 = vcmp.lt.s32.totalorder %v1775, 6
    %vm2121 = vcmp.lt.s32.totalorder %v1776, 6
    %v2122 = vsel %vm2120, 1, 0
    %v2123 = vsel %vm2121, 1, 0
    %vm2124 = vcmp.eq.s32.totalorder %v2122, 1
    %vm2125 = vcmp.eq.s32.totalorder %v2123, 1
    %v2126 = vsel %vm2124, %v2107, %v2014
    %v2127 = vsel %vm2125, %v2108, %v2015
    %v2128 = vsel %vm2120, %v2116, %v2016
    %v2129 = vsel %vm2121, %v2119, %v2017
    %v2131 = vrot.slane %v2128, 6
    %v2133 = vsel %vm1892, 0.0, %v2131
    %2135 = vset.pattern.permute.xlu0 0
    %2136 = vperm.xlu0 %2135, %v2133
    %v2137 = vpop.permute.xlu0 %2136
    %2139 = vset.pattern.permute.xlu0 0
    %2140 = vperm.xlu0 %2139, %v2131
    %v2141 = vpop.permute.xlu0 %2140
    %v2143 = vmul.f32 %v2137, %v1777
    %v2144 = vmul.f32 %v2137, %v1778
    %v2145 = vmul.f32 %v2137, %v1779
    %v2146 = vmul.f32 %v2137, %v1780
    %v2147 = vmul.f32 %v2141, %v1781
    %v2148 = vmul.f32 %v2141, %v1782
    %v2149 = vmul.f32 %v2141, %v1783
    %v2150 = vmul.f32 %v2141, %v1784
    %v2151 = vadd.f32 %v2143, %v1798
    %v2152 = vadd.f32 %v2144, %v1799
    %v2153 = vadd.f32 %v2145, %v1800
    %v2154 = vadd.f32 %v2146, %v1801
    %v2155 = vadd.f32 %v2147, %v1802
    %v2156 = vadd.f32 %v2148, %v1803
    %v2157 = vadd.f32 %v2149, %v1804
    %v2158 = vadd.f32 %v2150, %v1805
    %v2159 = vld [vmem:[#allocation2 + $0xc0] sm:$0xff]
    %v2160 = vld [vmem:[#allocation2 + $0xc8] sm:$0xff]
    %v2161 = vld [vmem:[#allocation2 + $0xd0] sm:$0xff]
    %v2162 = vld [vmem:[#allocation2 + $0xd8] sm:$0xff]
    %v2163 = vld [vmem:[#allocation2 + $0xe0] sm:$0x3]
    %v2164 = vld [vmem:[#allocation2 + $0xe8] sm:$0x3]
    %v2165 = vld [vmem:[#allocation2 + $0xf0] sm:$0x3]
    %v2166 = vld [vmem:[#allocation2 + $0xf8] sm:$0x3]
    %v2167 = vadd.f32 %v2151, %v2159
    %v2168 = vadd.f32 %v2152, %v2160
    %v2169 = vadd.f32 %v2153, %v2161
    %v2170 = vadd.f32 %v2154, %v2162
    %v2171 = vadd.f32 %v2155, %v2163
    %v2172 = vadd.f32 %v2156, %v2164
    %v2173 = vadd.f32 %v2157, %v2165
    %v2174 = vadd.f32 %v2158, %v2166
    %v2175 = vmul.f32 %v2128, %v1830
    %v2176 = vmul.f32 %v2128, %v1831
    %v2177 = vmul.f32 %v2128, %v1832
    %v2178 = vmul.f32 %v2128, %v1833
    %v2179 = vmul.f32 %v2129, %v1834
    %v2180 = vmul.f32 %v2129, %v1835
    %v2181 = vmul.f32 %v2129, %v1836
    %v2182 = vmul.f32 %v2129, %v1837
    %v2183 = vadd.f32 %v2167, %v2175
    %v2184 = vadd.f32 %v2168, %v2176
    %v2185 = vadd.f32 %v2169, %v2177
    %v2186 = vadd.f32 %v2170, %v2178
    %v2187 = vadd.f32 %v2171, %v2179
    %v2188 = vadd.f32 %v2172, %v2180
    %v2189 = vadd.f32 %v2173, %v2181
    %v2190 = vadd.f32 %v2174, %v2182
    %v2191 = vtanh.pop %v2183
    %v2192 = vtanh.pop %v2184
    %v2193 = vtanh.pop %v2185
    %v2194 = vtanh.pop %v2186
    %v2195 = vtanh.pop %v2187
    %v2196 = vtanh.pop %v2188
    %v2197 = vtanh.pop %v2189
    %v2198 = vtanh.pop %v2190
    %v2199 = vmul.f32 %v2191, %v1766
    %v2200 = vmul.f32 %v2192, %v1767
    %v2201 = vmul.f32 %v2193, %v1768
    %v2202 = vmul.f32 %v2194, %v1769
    %v2203 = vmul.f32 %v2195, %v1766
    %v2204 = vmul.f32 %v2196, %v1767
    %v2205 = vmul.f32 %v2197, %v1768
    %v2206 = vmul.f32 %v2198, %v1769
    %v2207 = vadd.f32 %v2199, %v1770
    %v2208 = vadd.f32 %v2200, %v1771
    %v2209 = vadd.f32 %v2201, %v1772
    %v2210 = vadd.f32 %v2202, %v1773
    %v2211 = vadd.f32 %v2203, %v1770
    %v2212 = vadd.f32 %v2204, %v1771
    %v2213 = vadd.f32 %v2205, %v1772
    %v2214 = vadd.f32 %v2206, %v1773
    %v2215 = vmul.f32 %v2208, %v2126
    %v2216 = vmul.f32 %v2212, %v2127
    %v2217 = vmul.f32 %v2207, %v2209
    %v2218 = vmul.f32 %v2211, %v2213
    %v2219 = vadd.f32 %v2215, %v2217
    %v2220 = vadd.f32 %v2216, %v2218
    %v2221 = vtanh.pop %v2219
    %v2222 = vtanh.pop %v2220
    %v2223 = vmul.f32 %v2210, %v2221
    %v2224 = vmul.f32 %v2214, %v2222
    %v2225 = vmul.f32 %v2223, %v1747
    %v2226 = vmul.f32 %v2224, %v1748
    %2227 = vadd.xlane.f32.xlu0 %v2225
    %v2228 = vpop.xlane.xlu0 %2227
    %v2229 = vsel %vm1892, %v2226, 0.0
    %2230 = vadd.xlane.f32.xlu0 %v2229
    %v2231 = vpop.xlane.xlu0 %2230
    %vm2232 = vcmp.lt.s32.totalorder %v1775, 8
    %vm2233 = vcmp.lt.s32.totalorder %v1776, 8
    %v2234 = vsel %vm2232, 1, 0
    %v2235 = vsel %vm2233, 1, 0
    %vm2236 = vcmp.eq.s32.totalorder %v2234, 1
    %vm2237 = vcmp.eq.s32.totalorder %v2235, 1
    %v2238 = vsel %vm2236, %v2219, %v2126
    %v2239 = vsel %vm2237, %v2220, %v2127
    %v2240 = vsel %vm2232, %v2228, %v2128
    %v2241 = vsel %vm2233, %v2231, %v2129
    %v2243 = vrot.slane %v2240, 6
    %v2245 = vsel %vm1892, 0.0, %v2243
    %2247 = vset.pattern.permute.xlu0 0
    %2248 = vperm.xlu0 %2247, %v2245
    %v2249 = vpop.permute.xlu0 %2248
    %2251 = vset.pattern.permute.xlu0 0
    %2252 = vperm.xlu0 %2251, %v2243
    %v2253 = vpop.permute.xlu0 %2252
    %v2255 = vmul.f32 %v2249, %v1777
    %v2256 = vmul.f32 %v2249, %v1778
    %v2257 = vmul.f32 %v2249, %v1779
    %v2258 = vmul.f32 %v2249, %v1780
    %v2259 = vmul.f32 %v2253, %v1781
    %v2260 = vmul.f32 %v2253, %v1782
    %v2261 = vmul.f32 %v2253, %v1783
    %v2262 = vmul.f32 %v2253, %v1784
    %v2263 = vadd.f32 %v2255, %v1798
    %v2264 = vadd.f32 %v2256, %v1799
    %v2265 = vadd.f32 %v2257, %v1800
    %v2266 = vadd.f32 %v2258, %v1801
    %v2267 = vadd.f32 %v2259, %v1802
    %v2268 = vadd.f32 %v2260, %v1803
    %v2269 = vadd.f32 %v2261, %v1804
    %v2270 = vadd.f32 %v2262, %v1805
    %v2271 = vld [vmem:[#allocation2 + $0x100] sm:$0xff]
    %v2272 = vld [vmem:[#allocation2 + $0x108] sm:$0xff]
    %v2273 = vld [vmem:[#allocation2 + $0x110] sm:$0xff]
    %v2274 = vld [vmem:[#allocation2 + $0x118] sm:$0xff]
    %v2275 = vld [vmem:[#allocation2 + $0x120] sm:$0x3]
    %v2276 = vld [vmem:[#allocation2 + $0x128] sm:$0x3]
    %v2277 = vld [vmem:[#allocation2 + $0x130] sm:$0x3]
    %v2278 = vld [vmem:[#allocation2 + $0x138] sm:$0x3]
    %v2279 = vadd.f32 %v2263, %v2271
    %v2280 = vadd.f32 %v2264, %v2272
    %v2281 = vadd.f32 %v2265, %v2273
    %v2282 = vadd.f32 %v2266, %v2274
    %v2283 = vadd.f32 %v2267, %v2275
    %v2284 = vadd.f32 %v2268, %v2276
    %v2285 = vadd.f32 %v2269, %v2277
    %v2286 = vadd.f32 %v2270, %v2278
    %v2287 = vmul.f32 %v2240, %v1830
    %v2288 = vmul.f32 %v2240, %v1831
    %v2289 = vmul.f32 %v2240, %v1832
    %v2290 = vmul.f32 %v2240, %v1833
    %v2291 = vmul.f32 %v2241, %v1834
    %v2292 = vmul.f32 %v2241, %v1835
    %v2293 = vmul.f32 %v2241, %v1836
    %v2294 = vmul.f32 %v2241, %v1837
    %v2295 = vadd.f32 %v2279, %v2287
    %v2296 = vadd.f32 %v2280, %v2288
    %v2297 = vadd.f32 %v2281, %v2289
    %v2298 = vadd.f32 %v2282, %v2290
    %v2299 = vadd.f32 %v2283, %v2291
    %v2300 = vadd.f32 %v2284, %v2292
    %v2301 = vadd.f32 %v2285, %v2293
    %v2302 = vadd.f32 %v2286, %v2294
    %v2303 = vtanh.pop %v2295
    %v2304 = vtanh.pop %v2296
    %v2305 = vtanh.pop %v2297
    %v2306 = vtanh.pop %v2298
    %v2307 = vtanh.pop %v2299
    %v2308 = vtanh.pop %v2300
    %v2309 = vtanh.pop %v2301
    %v2310 = vtanh.pop %v2302
    %v2311 = vmul.f32 %v2303, %v1766
    %v2312 = vmul.f32 %v2304, %v1767
    %v2313 = vmul.f32 %v2305, %v1768
    %v2314 = vmul.f32 %v2306, %v1769
    %v2315 = vmul.f32 %v2307, %v1766
    %v2316 = vmul.f32 %v2308, %v1767
    %v2317 = vmul.f32 %v2309, %v1768
    %v2318 = vmul.f32 %v2310, %v1769
    %v2319 = vadd.f32 %v2311, %v1770
    %v2320 = vadd.f32 %v2312, %v1771
    %v2321 = vadd.f32 %v2313, %v1772
    %v2322 = vadd.f32 %v2314, %v1773
    %v2323 = vadd.f32 %v2315, %v1770
    %v2324 = vadd.f32 %v2316, %v1771
    %v2325 = vadd.f32 %v2317, %v1772
    %v2326 = vadd.f32 %v2318, %v1773
    %v2327 = vmul.f32 %v2320, %v2238
    %v2328 = vmul.f32 %v2324, %v2239
    %v2329 = vmul.f32 %v2319, %v2321
    %v2330 = vmul.f32 %v2323, %v2325
    %v2331 = vadd.f32 %v2327, %v2329
    %v2332 = vadd.f32 %v2328, %v2330
    %v2333 = vtanh.pop %v2331
    %v2334 = vtanh.pop %v2332
    %v2335 = vmul.f32 %v2322, %v2333
    %v2336 = vmul.f32 %v2326, %v2334
    %v2337 = vmul.f32 %v2335, %v1747
    %v2338 = vmul.f32 %v2336, %v1748
    %2339 = vadd.xlane.f32.xlu0 %v2337
    %v2340 = vpop.xlane.xlu0 %2339
    %v2341 = vsel %vm1892, %v2338, 0.0
    %2342 = vadd.xlane.f32.xlu0 %v2341
    %v2343 = vpop.xlane.xlu0 %2342
    %vm2344 = vcmask 1024
    %2345 = vst.msk [vmem:[#allocation3] sm:$0x3] %vm2344, %v2343
    %v2347 = vrot.slane %v2340, 6
    %v2349 = vsel %vm1892, 0.0, %v2347
    %v2350 = vld [vmem:[%s4] sm:$0xff]
    %v2351 = vld [vmem:[%s4 + $0x8] sm:$0xff]
    %v2352 = vld [vmem:[%s4 + $0x10] sm:$0xff]
    %v2353 = vld [vmem:[%s4 + $0x18] sm:$0xff]
    %v2354 = vld [vmem:[%s4 + $0x20] sm:$0x3]
    %v2355 = vld [vmem:[%s4 + $0x28] sm:$0x3]
    %v2356 = vld [vmem:[%s4 + $0x30] sm:$0x3]
    %v2357 = vld [vmem:[%s4 + $0x38] sm:$0x3]
    %2359 = vset.pattern.permute.xlu0 0
    %2360 = vperm.xlu0 %2359, %v2349
    %v2361 = vpop.permute.xlu0 %2360
    %2363 = vset.pattern.permute.xlu0 0
    %2364 = vperm.xlu0 %2363, %v2347
    %v2365 = vpop.permute.xlu0 %2364
    %v2367 = vmul.f32 %v2361, %v2350
    %v2368 = vmul.f32 %v2361, %v2351
    %v2369 = vmul.f32 %v2361, %v2352
    %v2370 = vmul.f32 %v2361, %v2353
    %v2371 = vmul.f32 %v2365, %v2354
    %v2372 = vmul.f32 %v2365, %v2355
    %v2373 = vmul.f32 %v2365, %v2356
    %v2374 = vmul.f32 %v2365, %v2357
    %v2375 = vld [vmem:[%s6] sm:$0xff]
    %v2376 = vld [vmem:[%s6 + $0x8] sm:$0xff]
    %v2377 = vld [vmem:[%s6 + $0x10] sm:$0xff]
    %v2378 = vld [vmem:[%s6 + $0x18] sm:$0xff]
    %v2379 = vld [vmem:[%s6 + $0x20] sm:$0x3]
    %v2380 = vld [vmem:[%s6 + $0x28] sm:$0x3]
    %v2381 = vld [vmem:[%s6 + $0x30] sm:$0x3]
    %v2382 = vld [vmem:[%s6 + $0x38] sm:$0x3]
    %v2383 = vadd.f32 %v2367, %v2375
    %v2384 = vadd.f32 %v2368, %v2376
    %v2385 = vadd.f32 %v2369, %v2377
    %v2386 = vadd.f32 %v2370, %v2378
    %v2387 = vadd.f32 %v2371, %v2379
    %v2388 = vadd.f32 %v2372, %v2380
    %v2389 = vadd.f32 %v2373, %v2381
    %v2390 = vadd.f32 %v2374, %v2382
    %v2391 = vld [vmem:[#allocation2 + $0x140] sm:$0xff]
    %v2392 = vld [vmem:[#allocation2 + $0x148] sm:$0xff]
    %v2393 = vld [vmem:[#allocation2 + $0x150] sm:$0xff]
    %v2394 = vld [vmem:[#allocation2 + $0x158] sm:$0xff]
    %v2395 = vld [vmem:[#allocation2 + $0x160] sm:$0x3]
    %v2396 = vld [vmem:[#allocation2 + $0x168] sm:$0x3]
    %v2397 = vld [vmem:[#allocation2 + $0x170] sm:$0x3]
    %v2398 = vld [vmem:[#allocation2 + $0x178] sm:$0x3]
    %v2399 = vadd.f32 %v2383, %v2391
    %v2400 = vadd.f32 %v2384, %v2392
    %v2401 = vadd.f32 %v2385, %v2393
    %v2402 = vadd.f32 %v2386, %v2394
    %v2403 = vadd.f32 %v2387, %v2395
    %v2404 = vadd.f32 %v2388, %v2396
    %v2405 = vadd.f32 %v2389, %v2397
    %v2406 = vadd.f32 %v2390, %v2398
    %v2407 = vld [vmem:[%s5] sm:$0xff]
    %v2408 = vld [vmem:[%s5 + $0x8] sm:$0xff]
    %v2409 = vld [vmem:[%s5 + $0x10] sm:$0xff]
    %v2410 = vld [vmem:[%s5 + $0x18] sm:$0xff]
    %v2411 = vld [vmem:[%s5 + $0x20] sm:$0x3]
    %v2412 = vld [vmem:[%s5 + $0x28] sm:$0x3]
    %v2413 = vld [vmem:[%s5 + $0x30] sm:$0x3]
    %v2414 = vld [vmem:[%s5 + $0x38] sm:$0x3]
    %v2415 = vmul.f32 %v2340, %v2407
    %v2416 = vmul.f32 %v2340, %v2408
    %v2417 = vmul.f32 %v2340, %v2409
    %v2418 = vmul.f32 %v2340, %v2410
    %v2419 = vmul.f32 %v2343, %v2411
    %v2420 = vmul.f32 %v2343, %v2412
    %v2421 = vmul.f32 %v2343, %v2413
    %v2422 = vmul.f32 %v2343, %v2414
    %v2423 = vadd.f32 %v2399, %v2415
    %v2424 = vadd.f32 %v2400, %v2416
    %v2425 = vadd.f32 %v2401, %v2417
    %v2426 = vadd.f32 %v2402, %v2418
    %v2427 = vadd.f32 %v2403, %v2419
    %v2428 = vadd.f32 %v2404, %v2420
    %v2429 = vadd.f32 %v2405, %v2421
    %v2430 = vadd.f32 %v2406, %v2422
    %v2431 = vtanh.pop %v2423
    %v2432 = vtanh.pop %v2424
    %v2433 = vtanh.pop %v2425
    %v2434 = vtanh.pop %v2426
    %v2435 = vtanh.pop %v2427
    %v2436 = vtanh.pop %v2428
    %v2437 = vtanh.pop %v2429
    %v2438 = vtanh.pop %v2430
    %v2439 = vmul.f32 %v2431, %v1766
    %v2440 = vmul.f32 %v2432, %v1767
    %v2441 = vmul.f32 %v2433, %v1768
    %v2442 = vmul.f32 %v2434, %v1769
    %v2443 = vmul.f32 %v2435, %v1766
    %v2444 = vmul.f32 %v2436, %v1767
    %v2445 = vmul.f32 %v2437, %v1768
    %v2446 = vmul.f32 %v2438, %v1769
    %v2447 = vadd.f32 %v2439, %v1770
    %v2448 = vadd.f32 %v2440, %v1771
    %v2449 = vadd.f32 %v2441, %v1772
    %v2450 = vadd.f32 %v2442, %v1773
    %v2451 = vadd.f32 %v2443, %v1770
    %v2452 = vadd.f32 %v2444, %v1771
    %v2453 = vadd.f32 %v2445, %v1772
    %v2454 = vadd.f32 %v2446, %v1773
    %v2455 = vmul.f32 %v2448, %v2331
    %v2456 = vmul.f32 %v2452, %v2332
    %v2457 = vmul.f32 %v2447, %v2449
    %v2458 = vmul.f32 %v2451, %v2453
    %v2459 = vadd.f32 %v2455, %v2457
    %v2460 = vadd.f32 %v2456, %v2458
    %v2461 = vtanh.pop %v2459
    %v2462 = vtanh.pop %v2460
    %v2463 = vmul.f32 %v2450, %v2461
    %v2464 = vmul.f32 %v2454, %v2462
    %v2465 = vmul.f32 %v2463, %v1747
    %v2466 = vmul.f32 %v2464, %v1748
    %2467 = vadd.xlane.f32.xlu0 %v2465
    %v2468 = vpop.xlane.xlu0 %2467
    %v2469 = vsel %vm1892, %v2466, 0.0
    %2470 = vadd.xlane.f32.xlu0 %v2469
    %v2471 = vpop.xlane.xlu0 %2470
    %vm2472 = vcmask 9224
    %2473 = vst.msk [vmem:[#allocation3] sm:$0x3] %vm2472, %v2471
    %v2475 = vrot.slane %v2468, 6
    %v2477 = vsel %vm1892, 0.0, %v2475
    %v2478 = vld [vmem:[%s4] sm:$0xff]
    %v2479 = vld [vmem:[%s4 + $0x8] sm:$0xff]
    %v2480 = vld [vmem:[%s4 + $0x10] sm:$0xff]
    %v2481 = vld [vmem:[%s4 + $0x18] sm:$0xff]
    %v2482 = vld [vmem:[%s4 + $0x20] sm:$0x3]
    %v2483 = vld [vmem:[%s4 + $0x28] sm:$0x3]
    %v2484 = vld [vmem:[%s4 + $0x30] sm:$0x3]
    %v2485 = vld [vmem:[%s4 + $0x38] sm:$0x3]
    %2487 = vset.pattern.permute.xlu0 0
    %2488 = vperm.xlu0 %2487, %v2477
    %v2489 = vpop.permute.xlu0 %2488
    %2491 = vset.pattern.permute.xlu0 0
    %2492 = vperm.xlu0 %2491, %v2475
    %v2493 = vpop.permute.xlu0 %2492
    %v2495 = vmul.f32 %v2489, %v2478
    %v2496 = vmul.f32 %v2489, %v2479
    %v2497 = vmul.f32 %v2489, %v2480
    %v2498 = vmul.f32 %v2489, %v2481
    %v2499 = vmul.f32 %v2493, %v2482
    %v2500 = vmul.f32 %v2493, %v2483
    %v2501 = vmul.f32 %v2493, %v2484
    %v2502 = vmul.f32 %v2493, %v2485
    %v2503 = vld [vmem:[%s6] sm:$0xff]
    %v2504 = vld [vmem:[%s6 + $0x8] sm:$0xff]
    %v2505 = vld [vmem:[%s6 + $0x10] sm:$0xff]
    %v2506 = vld [vmem:[%s6 + $0x18] sm:$0xff]
    %v2507 = vld [vmem:[%s6 + $0x20] sm:$0x3]
    %v2508 = vld [vmem:[%s6 + $0x28] sm:$0x3]
    %v2509 = vld [vmem:[%s6 + $0x30] sm:$0x3]
    %v2510 = vld [vmem:[%s6 + $0x38] sm:$0x3]
    %v2511 = vadd.f32 %v2495, %v2503
    %v2512 = vadd.f32 %v2496, %v2504
    %v2513 = vadd.f32 %v2497, %v2505
    %v2514 = vadd.f32 %v2498, %v2506
    %v2515 = vadd.f32 %v2499, %v2507
    %v2516 = vadd.f32 %v2500, %v2508
    %v2517 = vadd.f32 %v2501, %v2509
    %v2518 = vadd.f32 %v2502, %v2510
    %v2519 = vld [vmem:[#allocation2 + $0x180] sm:$0xff]
    %v2520 = vld [vmem:[#allocation2 + $0x188] sm:$0xff]
    %v2521 = vld [vmem:[#allocation2 + $0x190] sm:$0xff]
    %v2522 = vld [vmem:[#allocation2 + $0x198] sm:$0xff]
    %v2523 = vld [vmem:[#allocation2 + $0x1a0] sm:$0x3]
    %v2524 = vld [vmem:[#allocation2 + $0x1a8] sm:$0x3]
    %v2525 = vld [vmem:[#allocation2 + $0x1b0] sm:$0x3]
    %v2526 = vld [vmem:[#allocation2 + $0x1b8] sm:$0x3]
    %v2527 = vadd.f32 %v2511, %v2519
    %v2528 = vadd.f32 %v2512, %v2520
    %v2529 = vadd.f32 %v2513, %v2521
    %v2530 = vadd.f32 %v2514, %v2522
    %v2531 = vadd.f32 %v2515, %v2523
    %v2532 = vadd.f32 %v2516, %v2524
    %v2533 = vadd.f32 %v2517, %v2525
    %v2534 = vadd.f32 %v2518, %v2526
    %v2535 = vld [vmem:[%s5] sm:$0xff]
    %v2536 = vld [vmem:[%s5 + $0x8] sm:$0xff]
    %v2537 = vld [vmem:[%s5 + $0x10] sm:$0xff]
    %v2538 = vld [vmem:[%s5 + $0x18] sm:$0xff]
    %v2539 = vld [vmem:[%s5 + $0x20] sm:$0x3]
    %v2540 = vld [vmem:[%s5 + $0x28] sm:$0x3]
    %v2541 = vld [vmem:[%s5 + $0x30] sm:$0x3]
    %v2542 = vld [vmem:[%s5 + $0x38] sm:$0x3]
    %v2543 = vmul.f32 %v2468, %v2535
    %v2544 = vmul.f32 %v2468, %v2536
    %v2545 = vmul.f32 %v2468, %v2537
    %v2546 = vmul.f32 %v2468, %v2538
    %v2547 = vmul.f32 %v2471, %v2539
    %v2548 = vmul.f32 %v2471, %v2540
    %v2549 = vmul.f32 %v2471, %v2541
    %v2550 = vmul.f32 %v2471, %v2542
    %v2551 = vadd.f32 %v2527, %v2543
    %v2552 = vadd.f32 %v2528, %v2544
    %v2553 = vadd.f32 %v2529, %v2545
    %v2554 = vadd.f32 %v2530, %v2546
    %v2555 = vadd.f32 %v2531, %v2547
    %v2556 = vadd.f32 %v2532, %v2548
    %v2557 = vadd.f32 %v2533, %v2549
    %v2558 = vadd.f32 %v2534, %v2550
    %v2559 = vtanh.pop %v2551
    %v2560 = vtanh.pop %v2552
    %v2561 = vtanh.pop %v2553
    %v2562 = vtanh.pop %v2554
    %v2563 = vtanh.pop %v2555
    %v2564 = vtanh.pop %v2556
    %v2565 = vtanh.pop %v2557
    %v2566 = vtanh.pop %v2558
    %v2567 = vmul.f32 %v2559, %v1766
    %v2568 = vmul.f32 %v2560, %v1767
    %v2569 = vmul.f32 %v2561, %v1768
    %v2570 = vmul.f32 %v2562, %v1769
    %v2571 = vmul.f32 %v2563, %v1766
    %v2572 = vmul.f32 %v2564, %v1767
    %v2573 = vmul.f32 %v2565, %v1768
    %v2574 = vmul.f32 %v2566, %v1769
    %v2575 = vadd.f32 %v2567, %v1770
    %v2576 = vadd.f32 %v2568, %v1771
    %v2577 = vadd.f32 %v2569, %v1772
    %v2578 = vadd.f32 %v2570, %v1773
    %v2579 = vadd.f32 %v2571, %v1770
    %v2580 = vadd.f32 %v2572, %v1771
    %v2581 = vadd.f32 %v2573, %v1772
    %v2582 = vadd.f32 %v2574, %v1773
    %v2583 = vmul.f32 %v2576, %v2459
    %v2584 = vmul.f32 %v2580, %v2460
    %v2585 = vmul.f32 %v2575, %v2577
    %v2586 = vmul.f32 %v2579, %v2581
    %v2587 = vadd.f32 %v2583, %v2585
    %v2588 = vadd.f32 %v2584, %v2586
    %v2589 = vtanh.pop %v2587
    %v2590 = vtanh.pop %v2588
    %v2591 = vmul.f32 %v2578, %v2589
    %v2592 = vmul.f32 %v2582, %v2590
    %v2593 = vmul.f32 %v2591, %v1747
    %v2594 = vmul.f32 %v2592, %v1748
    %2595 = vadd.xlane.f32.xlu0 %v2593
    %v2596 = vpop.xlane.xlu0 %2595
    %v2597 = vsel %vm1892, %v2594, 0.0
    %2598 = vadd.xlane.f32.xlu0 %v2597
    %v2599 = vpop.xlane.xlu0 %2598
    %vm2600 = vcmask 17424
    %2601 = vst.msk [vmem:[#allocation3] sm:$0x3] %vm2600, %v2599
    %v2603 = vrot.slane %v2596, 6
    %v2605 = vsel %vm1892, 0.0, %v2603
    %v2606 = vld [vmem:[%s4] sm:$0xff]
    %v2607 = vld [vmem:[%s4 + $0x8] sm:$0xff]
    %v2608 = vld [vmem:[%s4 + $0x10] sm:$0xff]
    %v2609 = vld [vmem:[%s4 + $0x18] sm:$0xff]
    %v2610 = vld [vmem:[%s4 + $0x20] sm:$0x3]
    %v2611 = vld [vmem:[%s4 + $0x28] sm:$0x3]
    %v2612 = vld [vmem:[%s4 + $0x30] sm:$0x3]
    %v2613 = vld [vmem:[%s4 + $0x38] sm:$0x3]
    %2615 = vset.pattern.permute.xlu0 0
    %2616 = vperm.xlu0 %2615, %v2605
    %v2617 = vpop.permute.xlu0 %2616
    %2619 = vset.pattern.permute.xlu0 0
    %2620 = vperm.xlu0 %2619, %v2603
    %v2621 = vpop.permute.xlu0 %2620
    %v2623 = vmul.f32 %v2617, %v2606
    %v2624 = vmul.f32 %v2617, %v2607
    %v2625 = vmul.f32 %v2617, %v2608
    %v2626 = vmul.f32 %v2617, %v2609
    %v2627 = vmul.f32 %v2621, %v2610
    %v2628 = vmul.f32 %v2621, %v2611
    %v2629 = vmul.f32 %v2621, %v2612
    %v2630 = vmul.f32 %v2621, %v2613
    %v2631 = vld [vmem:[%s6] sm:$0xff]
    %v2632 = vld [vmem:[%s6 + $0x8] sm:$0xff]
    %v2633 = vld [vmem:[%s6 + $0x10] sm:$0xff]
    %v2634 = vld [vmem:[%s6 + $0x18] sm:$0xff]
    %v2635 = vld [vmem:[%s6 + $0x20] sm:$0x3]
    %v2636 = vld [vmem:[%s6 + $0x28] sm:$0x3]
    %v2637 = vld [vmem:[%s6 + $0x30] sm:$0x3]
    %v2638 = vld [vmem:[%s6 + $0x38] sm:$0x3]
    %v2639 = vadd.f32 %v2623, %v2631
    %v2640 = vadd.f32 %v2624, %v2632
    %v2641 = vadd.f32 %v2625, %v2633
    %v2642 = vadd.f32 %v2626, %v2634
    %v2643 = vadd.f32 %v2627, %v2635
    %v2644 = vadd.f32 %v2628, %v2636
    %v2645 = vadd.f32 %v2629, %v2637
    %v2646 = vadd.f32 %v2630, %v2638
    %v2647 = vld [vmem:[#allocation2 + $0x1c0] sm:$0xff]
    %v2648 = vld [vmem:[#allocation2 + $0x1c8] sm:$0xff]
    %v2649 = vld [vmem:[#allocation2 + $0x1d0] sm:$0xff]
    %v2650 = vld [vmem:[#allocation2 + $0x1d8] sm:$0xff]
    %v2651 = vld [vmem:[#allocation2 + $0x1e0] sm:$0x3]
    %v2652 = vld [vmem:[#allocation2 + $0x1e8] sm:$0x3]
    %v2653 = vld [vmem:[#allocation2 + $0x1f0] sm:$0x3]
    %v2654 = vld [vmem:[#allocation2 + $0x1f8] sm:$0x3]
    %v2655 = vadd.f32 %v2639, %v2647
    %v2656 = vadd.f32 %v2640, %v2648
    %v2657 = vadd.f32 %v2641, %v2649
    %v2658 = vadd.f32 %v2642, %v2650
    %v2659 = vadd.f32 %v2643, %v2651
    %v2660 = vadd.f32 %v2644, %v2652
    %v2661 = vadd.f32 %v2645, %v2653
    %v2662 = vadd.f32 %v2646, %v2654
    %v2663 = vld [vmem:[%s5] sm:$0xff]
    %v2664 = vld [vmem:[%s5 + $0x8] sm:$0xff]
    %v2665 = vld [vmem:[%s5 + $0x10] sm:$0xff]
    %v2666 = vld [vmem:[%s5 + $0x18] sm:$0xff]
    %v2667 = vld [vmem:[%s5 + $0x20] sm:$0x3]
    %v2668 = vld [vmem:[%s5 + $0x28] sm:$0x3]
    %v2669 = vld [vmem:[%s5 + $0x30] sm:$0x3]
    %v2670 = vld [vmem:[%s5 + $0x38] sm:$0x3]
    %v2671 = vmul.f32 %v2596, %v2663
    %v2672 = vmul.f32 %v2596, %v2664
    %v2673 = vmul.f32 %v2596, %v2665
    %v2674 = vmul.f32 %v2596, %v2666
    %v2675 = vmul.f32 %v2599, %v2667
    %v2676 = vmul.f32 %v2599, %v2668
    %v2677 = vmul.f32 %v2599, %v2669
    %v2678 = vmul.f32 %v2599, %v2670
    %v2679 = vadd.f32 %v2655, %v2671
    %v2680 = vadd.f32 %v2656, %v2672
    %v2681 = vadd.f32 %v2657, %v2673
    %v2682 = vadd.f32 %v2658, %v2674
    %v2683 = vadd.f32 %v2659, %v2675
    %v2684 = vadd.f32 %v2660, %v2676
    %v2685 = vadd.f32 %v2661, %v2677
    %v2686 = vadd.f32 %v2662, %v2678
    %v2687 = vtanh.pop %v2679
    %v2688 = vtanh.pop %v2680
    %v2689 = vtanh.pop %v2681
    %v2690 = vtanh.pop %v2682
    %v2691 = vtanh.pop %v2683
    %v2692 = vtanh.pop %v2684
    %v2693 = vtanh.pop %v2685
    %v2694 = vtanh.pop %v2686
    %v2695 = vmul.f32 %v2687, %v1766
    %v2696 = vmul.f32 %v2688, %v1767
    %v2697 = vmul.f32 %v2689, %v1768
    %v2698 = vmul.f32 %v2690, %v1769
    %v2699 = vmul.f32 %v2691, %v1766
    %v2700 = vmul.f32 %v2692, %v1767
    %v2701 = vmul.f32 %v2693, %v1768
    %v2702 = vmul.f32 %v2694, %v1769
    %v2703 = vadd.f32 %v2695, %v1770
    %v2704 = vadd.f32 %v2696, %v1771
    %v2705 = vadd.f32 %v2697, %v1772
    %v2706 = vadd.f32 %v2698, %v1773
    %v2707 = vadd.f32 %v2699, %v1770
    %v2708 = vadd.f32 %v2700, %v1771
    %v2709 = vadd.f32 %v2701, %v1772
    %v2710 = vadd.f32 %v2702, %v1773
    %v2711 = vmul.f32 %v2704, %v2587
    %v2712 = vmul.f32 %v2708, %v2588
    %v2713 = vmul.f32 %v2703, %v2705
    %v2714 = vmul.f32 %v2707, %v2709
    %v2715 = vadd.f32 %v2711, %v2713
    %v2716 = vadd.f32 %v2712, %v2714
    %v2717 = vtanh.pop %v2715
    %v2718 = vtanh.pop %v2716
    %v2719 = vmul.f32 %v2706, %v2717
    %v2720 = vmul.f32 %v2710, %v2718
    %v2721 = vmul.f32 %v2719, %v1747
    %v2722 = vmul.f32 %v2720, %v1748
    %2723 = vadd.xlane.f32.xlu0 %v2721
    %v2724 = vpop.xlane.xlu0 %2723
    %v2725 = vsel %vm1892, %v2722, 0.0
    %2726 = vadd.xlane.f32.xlu0 %v2725
    %v2727 = vpop.xlane.xlu0 %2726
    %vm2728 = vcmask 25624
    %2729 = vst.msk [vmem:[#allocation3] sm:$0x3] %vm2728, %v2727
    %v2731 = vrot.slane %v2724, 6
    %v2733 = vsel %vm1892, 0.0, %v2731
    %v2734 = vld [vmem:[%s4] sm:$0xff]
    %v2735 = vld [vmem:[%s4 + $0x8] sm:$0xff]
    %v2736 = vld [vmem:[%s4 + $0x10] sm:$0xff]
    %v2737 = vld [vmem:[%s4 + $0x18] sm:$0xff]
    %v2738 = vld [vmem:[%s4 + $0x20] sm:$0x3]
    %v2739 = vld [vmem:[%s4 + $0x28] sm:$0x3]
    %v2740 = vld [vmem:[%s4 + $0x30] sm:$0x3]
    %v2741 = vld [vmem:[%s4 + $0x38] sm:$0x3]
    %2743 = vset.pattern.permute.xlu0 0
    %2744 = vperm.xlu0 %2743, %v2733
    %v2745 = vpop.permute.xlu0 %2744
    %2747 = vset.pattern.permute.xlu0 0
    %2748 = vperm.xlu0 %2747, %v2731
    %v2749 = vpop.permute.xlu0 %2748
    %v2751 = vmul.f32 %v2745, %v2734
    %v2752 = vmul.f32 %v2745, %v2735
    %v2753 = vmul.f32 %v2745, %v2736
    %v2754 = vmul.f32 %v2745, %v2737
    %v2755 = vmul.f32 %v2749, %v2738
    %v2756 = vmul.f32 %v2749, %v2739
    %v2757 = vmul.f32 %v2749, %v2740
    %v2758 = vmul.f32 %v2749, %v2741
    %v2759 = vld [vmem:[%s6] sm:$0xff]
    %v2760 = vld [vmem:[%s6 + $0x8] sm:$0xff]
    %v2761 = vld [vmem:[%s6 + $0x10] sm:$0xff]
    %v2762 = vld [vmem:[%s6 + $0x18] sm:$0xff]
    %v2763 = vld [vmem:[%s6 + $0x20] sm:$0x3]
    %v2764 = vld [vmem:[%s6 + $0x28] sm:$0x3]
    %v2765 = vld [vmem:[%s6 + $0x30] sm:$0x3]
    %v2766 = vld [vmem:[%s6 + $0x38] sm:$0x3]
    %v2767 = vadd.f32 %v2751, %v2759
    %v2768 = vadd.f32 %v2752, %v2760
    %v2769 = vadd.f32 %v2753, %v2761
    %v2770 = vadd.f32 %v2754, %v2762
    %v2771 = vadd.f32 %v2755, %v2763
    %v2772 = vadd.f32 %v2756, %v2764
    %v2773 = vadd.f32 %v2757, %v2765
    %v2774 = vadd.f32 %v2758, %v2766
    %v2775 = vld [vmem:[%s5] sm:$0xff]
    %v2776 = vld [vmem:[%s5 + $0x8] sm:$0xff]
    %v2777 = vld [vmem:[%s5 + $0x10] sm:$0xff]
    %v2778 = vld [vmem:[%s5 + $0x18] sm:$0xff]
    %v2779 = vld [vmem:[%s5 + $0x20] sm:$0x3]
    %v2780 = vld [vmem:[%s5 + $0x28] sm:$0x3]
    %v2781 = vld [vmem:[%s5 + $0x30] sm:$0x3]
    %v2782 = vld [vmem:[%s5 + $0x38] sm:$0x3]
    %v2783 = vmul.f32 %v2724, %v2775
    %v2784 = vmul.f32 %v2724, %v2776
    %v2785 = vmul.f32 %v2724, %v2777
    %v2786 = vmul.f32 %v2724, %v2778
    %v2787 = vmul.f32 %v2727, %v2779
    %v2788 = vmul.f32 %v2727, %v2780
    %v2789 = vmul.f32 %v2727, %v2781
    %v2790 = vmul.f32 %v2727, %v2782
    %v2791 = vadd.f32 %v2767, %v2783
    %v2792 = vadd.f32 %v2768, %v2784
    %v2793 = vadd.f32 %v2769, %v2785
    %v2794 = vadd.f32 %v2770, %v2786
    %v2795 = vadd.f32 %v2771, %v2787
    %v2796 = vadd.f32 %v2772, %v2788
    %v2797 = vadd.f32 %v2773, %v2789
    %v2798 = vadd.f32 %v2774, %v2790
    %v2799 = vtanh.pop %v2791
    %v2800 = vtanh.pop %v2792
    %v2801 = vtanh.pop %v2793
    %v2802 = vtanh.pop %v2794
    %v2803 = vtanh.pop %v2795
    %v2804 = vtanh.pop %v2796
    %v2805 = vtanh.pop %v2797
    %v2806 = vtanh.pop %v2798
    %v2807 = vmul.f32 %v2799, %v1766
    %v2808 = vmul.f32 %v2800, %v1767
    %v2809 = vmul.f32 %v2801, %v1768
    %v2810 = vmul.f32 %v2802, %v1769
    %v2811 = vmul.f32 %v2803, %v1766
    %v2812 = vmul.f32 %v2804, %v1767
    %v2813 = vmul.f32 %v2805, %v1768
    %v2814 = vmul.f32 %v2806, %v1769
    %v2815 = vadd.f32 %v2807, %v1770
    %v2816 = vadd.f32 %v2808, %v1771
    %v2817 = vadd.f32 %v2809, %v1772
    %v2818 = vadd.f32 %v2810, %v1773
    %v2819 = vadd.f32 %v2811, %v1770
    %v2820 = vadd.f32 %v2812, %v1771
    %v2821 = vadd.f32 %v2813, %v1772
    %v2822 = vadd.f32 %v2814, %v1773
    %v2823 = vmul.f32 %v2816, %v2715
    %v2824 = vmul.f32 %v2820, %v2716
    %v2825 = vmul.f32 %v2815, %v2817
    %v2826 = vmul.f32 %v2819, %v2821
    %v2827 = vadd.f32 %v2823, %v2825
    %v2828 = vadd.f32 %v2824, %v2826
    %v2829 = vtanh.pop %v2827
    %v2830 = vtanh.pop %v2828
    %v2831 = vmul.f32 %v2818, %v2829
    %v2832 = vmul.f32 %v2822, %v2830
    %v2833 = vmul.f32 %v2831, %v1747
    %v2834 = vmul.f32 %v2832, %v1748
    %2835 = vadd.xlane.f32.xlu0 %v2833
    %v2836 = vpop.xlane.xlu0 %2835
    %v2837 = vsel %vm1892, %v2834, 0.0
    %2838 = vadd.xlane.f32.xlu0 %v2837
    %v2839 = vpop.xlane.xlu0 %2838
    %vm2840 = vcmask 33824
    %2841 = vst.msk [vmem:[#allocation3] sm:$0x3] %vm2840, %v2839
    %v2843 = vrot.slane %v2836, 6
    %v2845 = vsel %vm1892, 0.0, %v2843
    %v2846 = vld [vmem:[%s4] sm:$0xff]
    %v2847 = vld [vmem:[%s4 + $0x8] sm:$0xff]
    %v2848 = vld [vmem:[%s4 + $0x10] sm:$0xff]
    %v2849 = vld [vmem:[%s4 + $0x18] sm:$0xff]
    %v2850 = vld [vmem:[%s4 + $0x20] sm:$0x3]
    %v2851 = vld [vmem:[%s4 + $0x28] sm:$0x3]
    %v2852 = vld [vmem:[%s4 + $0x30] sm:$0x3]
    %v2853 = vld [vmem:[%s4 + $0x38] sm:$0x3]
    %2855 = vset.pattern.permute.xlu0 0
    %2856 = vperm.xlu0 %2855, %v2845
    %v2857 = vpop.permute.xlu0 %2856
    %2859 = vset.pattern.permute.xlu0 0
    %2860 = vperm.xlu0 %2859, %v2843
    %v2861 = vpop.permute.xlu0 %2860
    %v2863 = vmul.f32 %v2857, %v2846
    %v2864 = vmul.f32 %v2857, %v2847
    %v2865 = vmul.f32 %v2857, %v2848
    %v2866 = vmul.f32 %v2857, %v2849
    %v2867 = vmul.f32 %v2861, %v2850
    %v2868 = vmul.f32 %v2861, %v2851
    %v2869 = vmul.f32 %v2861, %v2852
    %v2870 = vmul.f32 %v2861, %v2853
    %v2871 = vld [vmem:[%s6] sm:$0xff]
    %v2872 = vld [vmem:[%s6 + $0x8] sm:$0xff]
    %v2873 = vld [vmem:[%s6 + $0x10] sm:$0xff]
    %v2874 = vld [vmem:[%s6 + $0x18] sm:$0xff]
    %v2875 = vld [vmem:[%s6 + $0x20] sm:$0x3]
    %v2876 = vld [vmem:[%s6 + $0x28] sm:$0x3]
    %v2877 = vld [vmem:[%s6 + $0x30] sm:$0x3]
    %v2878 = vld [vmem:[%s6 + $0x38] sm:$0x3]
    %v2879 = vadd.f32 %v2863, %v2871
    %v2880 = vadd.f32 %v2864, %v2872
    %v2881 = vadd.f32 %v2865, %v2873
    %v2882 = vadd.f32 %v2866, %v2874
    %v2883 = vadd.f32 %v2867, %v2875
    %v2884 = vadd.f32 %v2868, %v2876
    %v2885 = vadd.f32 %v2869, %v2877
    %v2886 = vadd.f32 %v2870, %v2878
    %v2887 = vld [vmem:[%s5] sm:$0xff]
    %v2888 = vld [vmem:[%s5 + $0x8] sm:$0xff]
    %v2889 = vld [vmem:[%s5 + $0x10] sm:$0xff]
    %v2890 = vld [vmem:[%s5 + $0x18] sm:$0xff]
    %v2891 = vld [vmem:[%s5 + $0x20] sm:$0x3]
    %v2892 = vld [vmem:[%s5 + $0x28] sm:$0x3]
    %v2893 = vld [vmem:[%s5 + $0x30] sm:$0x3]
    %v2894 = vld [vmem:[%s5 + $0x38] sm:$0x3]
    %v2895 = vmul.f32 %v2836, %v2887
    %v2896 = vmul.f32 %v2836, %v2888
    %v2897 = vmul.f32 %v2836, %v2889
    %v2898 = vmul.f32 %v2836, %v2890
    %v2899 = vmul.f32 %v2839, %v2891
    %v2900 = vmul.f32 %v2839, %v2892
    %v2901 = vmul.f32 %v2839, %v2893
    %v2902 = vmul.f32 %v2839, %v2894
    %v2903 = vadd.f32 %v2879, %v2895
    %v2904 = vadd.f32 %v2880, %v2896
    %v2905 = vadd.f32 %v2881, %v2897
    %v2906 = vadd.f32 %v2882, %v2898
    %v2907 = vadd.f32 %v2883, %v2899
    %v2908 = vadd.f32 %v2884, %v2900
    %v2909 = vadd.f32 %v2885, %v2901
    %v2910 = vadd.f32 %v2886, %v2902
    %v2911 = vtanh.pop %v2903
    %v2912 = vtanh.pop %v2904
    %v2913 = vtanh.pop %v2905
    %v2914 = vtanh.pop %v2906
    %v2915 = vtanh.pop %v2907
    %v2916 = vtanh.pop %v2908
    %v2917 = vtanh.pop %v2909
    %v2918 = vtanh.pop %v2910
    %v2919 = vmul.f32 %v2911, %v1766
    %v2920 = vmul.f32 %v2912, %v1767
    %v2921 = vmul.f32 %v2913, %v1768
    %v2922 = vmul.f32 %v2914, %v1769
    %v2923 = vmul.f32 %v2915, %v1766
    %v2924 = vmul.f32 %v2916, %v1767
    %v2925 = vmul.f32 %v2917, %v1768
    %v2926 = vmul.f32 %v2918, %v1769
    %v2927 = vadd.f32 %v2919, %v1770
    %v2928 = vadd.f32 %v2920, %v1771
    %v2929 = vadd.f32 %v2921, %v1772
    %v2930 = vadd.f32 %v2922, %v1773
    %v2931 = vadd.f32 %v2923, %v1770
    %v2932 = vadd.f32 %v2924, %v1771
    %v2933 = vadd.f32 %v2925, %v1772
    %v2934 = vadd.f32 %v2926, %v1773
    %v2935 = vmul.f32 %v2928, %v2827
    %v2936 = vmul.f32 %v2932, %v2828
    %v2937 = vmul.f32 %v2927, %v2929
    %v2938 = vmul.f32 %v2931, %v2933
    %v2939 = vadd.f32 %v2935, %v2937
    %v2940 = vadd.f32 %v2936, %v2938
    %v2941 = vtanh.pop %v2939
    %v2942 = vtanh.pop %v2940
    %v2943 = vmul.f32 %v2930, %v2941
    %v2944 = vmul.f32 %v2934, %v2942
    %v2945 = vmul.f32 %v2943, %v1747
    %v2946 = vmul.f32 %v2944, %v1748
    %2947 = vadd.xlane.f32.xlu0 %v2945
    %v2948 = vpop.xlane.xlu0 %2947
    %v2949 = vsel %vm1892, %v2946, 0.0
    %2950 = vadd.xlane.f32.xlu0 %v2949
    %v2951 = vpop.xlane.xlu0 %2950
    %vm2952 = vcmask 42024
    %2953 = vst.msk [vmem:[#allocation3] sm:$0x3] %vm2952, %v2951
    %v2955 = vrot.slane %v2948, 6
    %v2957 = vsel %vm1892, 0.0, %v2955
    %v2958 = vld [vmem:[%s4] sm:$0xff]
    %v2959 = vld [vmem:[%s4 + $0x8] sm:$0xff]
    %v2960 = vld [vmem:[%s4 + $0x10] sm:$0xff]
    %v2961 = vld [vmem:[%s4 + $0x18] sm:$0xff]
    %v2962 = vld [vmem:[%s4 + $0x20] sm:$0x3]
    %v2963 = vld [vmem:[%s4 + $0x28] sm:$0x3]
    %v2964 = vld [vmem:[%s4 + $0x30] sm:$0x3]
    %v2965 = vld [vmem:[%s4 + $0x38] sm:$0x3]
    %2967 = vset.pattern.permute.xlu0 0
    %2968 = vperm.xlu0 %2967, %v2957
    %v2969 = vpop.permute.xlu0 %2968
    %2971 = vset.pattern.permute.xlu0 0
    %2972 = vperm.xlu0 %2971, %v2955
    %v2973 = vpop.permute.xlu0 %2972
    %v2975 = vmul.f32 %v2969, %v2958
    %v2976 = vmul.f32 %v2969, %v2959
    %v2977 = vmul.f32 %v2969, %v2960
    %v2978 = vmul.f32 %v2969, %v2961
    %v2979 = vmul.f32 %v2973, %v2962
    %v2980 = vmul.f32 %v2973, %v2963
    %v2981 = vmul.f32 %v2973, %v2964
    %v2982 = vmul.f32 %v2973, %v2965
    %v2983 = vld [vmem:[%s6] sm:$0xff]
    %v2984 = vld [vmem:[%s6 + $0x8] sm:$0xff]
    %v2985 = vld [vmem:[%s6 + $0x10] sm:$0xff]
    %v2986 = vld [vmem:[%s6 + $0x18] sm:$0xff]
    %v2987 = vld [vmem:[%s6 + $0x20] sm:$0x3]
    %v2988 = vld [vmem:[%s6 + $0x28] sm:$0x3]
    %v2989 = vld [vmem:[%s6 + $0x30] sm:$0x3]
    %v2990 = vld [vmem:[%s6 + $0x38] sm:$0x3]
    %v2991 = vadd.f32 %v2975, %v2983
    %v2992 = vadd.f32 %v2976, %v2984
    %v2993 = vadd.f32 %v2977, %v2985
    %v2994 = vadd.f32 %v2978, %v2986
    %v2995 = vadd.f32 %v2979, %v2987
    %v2996 = vadd.f32 %v2980, %v2988
    %v2997 = vadd.f32 %v2981, %v2989
    %v2998 = vadd.f32 %v2982, %v2990
    %v2999 = vld [vmem:[%s5] sm:$0xff]
    %v3000 = vld [vmem:[%s5 + $0x8] sm:$0xff]
    %v3001 = vld [vmem:[%s5 + $0x10] sm:$0xff]
    %v3002 = vld [vmem:[%s5 + $0x18] sm:$0xff]
    %v3003 = vld [vmem:[%s5 + $0x20] sm:$0x3]
    %v3004 = vld [vmem:[%s5 + $0x28] sm:$0x3]
    %v3005 = vld [vmem:[%s5 + $0x30] sm:$0x3]
    %v3006 = vld [vmem:[%s5 + $0x38] sm:$0x3]
    %v3007 = vmul.f32 %v2948, %v2999
    %v3008 = vmul.f32 %v2948, %v3000
    %v3009 = vmul.f32 %v2948, %v3001
    %v3010 = vmul.f32 %v2948, %v3002
    %v3011 = vmul.f32 %v2951, %v3003
    %v3012 = vmul.f32 %v2951, %v3004
    %v3013 = vmul.f32 %v2951, %v3005
    %v3014 = vmul.f32 %v2951, %v3006
    %v3015 = vadd.f32 %v2991, %v3007
    %v3016 = vadd.f32 %v2992, %v3008
    %v3017 = vadd.f32 %v2993, %v3009
    %v3018 = vadd.f32 %v2994, %v3010
    %v3019 = vadd.f32 %v2995, %v3011
    %v3020 = vadd.f32 %v2996, %v3012
    %v3021 = vadd.f32 %v2997, %v3013
    %v3022 = vadd.f32 %v2998, %v3014
    %v3023 = vtanh.pop %v3015
    %v3024 = vtanh.pop %v3016
    %v3025 = vtanh.pop %v3017
    %v3026 = vtanh.pop %v3018
    %v3027 = vtanh.pop %v3019
    %v3028 = vtanh.pop %v3020
    %v3029 = vtanh.pop %v3021
    %v3030 = vtanh.pop %v3022
    %v3031 = vmul.f32 %v3023, %v1766
    %v3032 = vmul.f32 %v3024, %v1767
    %v3033 = vmul.f32 %v3025, %v1768
    %v3034 = vmul.f32 %v3026, %v1769
    %v3035 = vmul.f32 %v3027, %v1766
    %v3036 = vmul.f32 %v3028, %v1767
    %v3037 = vmul.f32 %v3029, %v1768
    %v3038 = vmul.f32 %v3030, %v1769
    %v3039 = vadd.f32 %v3031, %v1770
    %v3040 = vadd.f32 %v3032, %v1771
    %v3041 = vadd.f32 %v3033, %v1772
    %v3042 = vadd.f32 %v3034, %v1773
    %v3043 = vadd.f32 %v3035, %v1770
    %v3044 = vadd.f32 %v3036, %v1771
    %v3045 = vadd.f32 %v3037, %v1772
    %v3046 = vadd.f32 %v3038, %v1773
    %v3047 = vmul.f32 %v3040, %v2939
    %v3048 = vmul.f32 %v3044, %v2940
    %v3049 = vmul.f32 %v3039, %v3041
    %v3050 = vmul.f32 %v3043, %v3045
    %v3051 = vadd.f32 %v3047, %v3049
    %v3052 = vadd.f32 %v3048, %v3050
    %v3053 = vtanh.pop %v3051
    %v3054 = vtanh.pop %v3052
    %v3055 = vmul.f32 %v3042, %v3053
    %v3056 = vmul.f32 %v3046, %v3054
    %v3057 = vmul.f32 %v3055, %v1747
    %v3058 = vmul.f32 %v3056, %v1748
    %3059 = vadd.xlane.f32.xlu0 %v3057
    %v3060 = vpop.xlane.xlu0 %3059
    %v3061 = vsel %vm1892, %v3058, 0.0
    %3062 = vadd.xlane.f32.xlu0 %v3061
    %v3063 = vpop.xlane.xlu0 %3062
    %vm3064 = vcmask 50224
    %3065 = vst.msk [vmem:[#allocation3] sm:$0x3] %vm3064, %v3063
    %v3067 = vrot.slane %v3060, 6
    %v3068 = vld [vmem:[%s4 + $0x20] sm:$0x3]
    %v3069 = vld [vmem:[%s4 + $0x28] sm:$0x3]
    %v3070 = vld [vmem:[%s4 + $0x30] sm:$0x3]
    %v3071 = vld [vmem:[%s4 + $0x38] sm:$0x3]
    %3072 = vset.pattern.permute.xlu0 0
    %3073 = vperm.xlu0 %3072, %v3067
    %v3074 = vpop.permute.xlu0 %3073
    %v3076 = vmul.f32 %v3074, %v3068
    %v3077 = vmul.f32 %v3074, %v3069
    %v3078 = vmul.f32 %v3074, %v3070
    %v3079 = vmul.f32 %v3074, %v3071
    %v3080 = vld [vmem:[%s6 + $0x20] sm:$0x3]
    %v3081 = vld [vmem:[%s6 + $0x28] sm:$0x3]
    %v3082 = vld [vmem:[%s6 + $0x30] sm:$0x3]
    %v3083 = vld [vmem:[%s6 + $0x38] sm:$0x3]
    %v3084 = vadd.f32 %v3076, %v3080
    %v3085 = vadd.f32 %v3077, %v3081
    %v3086 = vadd.f32 %v3078, %v3082
    %v3087 = vadd.f32 %v3079, %v3083
    %v3088 = vld [vmem:[%s5 + $0x20] sm:$0x3]
    %v3089 = vld [vmem:[%s5 + $0x28] sm:$0x3]
    %v3090 = vld [vmem:[%s5 + $0x30] sm:$0x3]
    %v3091 = vld [vmem:[%s5 + $0x38] sm:$0x3]
    %v3092 = vmul.f32 %v3063, %v3088
    %v3093 = vmul.f32 %v3063, %v3089
    %v3094 = vmul.f32 %v3063, %v3090
    %v3095 = vmul.f32 %v3063, %v3091
    %v3096 = vadd.f32 %v3084, %v3092
    %v3097 = vadd.f32 %v3085, %v3093
    %v3098 = vadd.f32 %v3086, %v3094
    %v3099 = vadd.f32 %v3087, %v3095
    %v3100 = vtanh.pop %v3096
    %v3101 = vtanh.pop %v3097
    %v3102 = vtanh.pop %v3098
    %v3103 = vtanh.pop %v3099
    %v3104 = vmul.f32 %v3100, %v1766
    %v3105 = vmul.f32 %v3101, %v1767
    %v3106 = vmul.f32 %v3102, %v1768
    %v3107 = vmul.f32 %v3103, %v1769
    %v3108 = vadd.f32 %v3104, %v1770
    %v3109 = vadd.f32 %v3105, %v1771
    %v3110 = vadd.f32 %v3106, %v1772
    %v3111 = vadd.f32 %v3107, %v1773
    %v3112 = vmul.f32 %v3109, %v3052
    %v3113 = vmul.f32 %v3108, %v3110
    %v3114 = vadd.f32 %v3112, %v3113
    %v3115 = vtanh.pop %v3114
    %v3116 = vmul.f32 %v3111, %v3115
    %v3117 = vmul.f32 %v3116, %v1748
    %v3118 = vsel %vm1892, %v3117, 0.0
    %3119 = vadd.xlane.f32.xlu0 %v3118
    %v3120 = vpop.xlane.xlu0 %3119
    %vm3121 = vcmask 58424
    %3122 = vst.msk [vmem:[#allocation3] sm:$0x3] %vm3121, %v3120
    %v3123 = vld [vmem:[#allocation3] sm:$0x3]
    %v3124 = vld [vmem:[#allocation5] sm:$0x3]
    %v3125 = vld [vmem:[%s2] sm:$0x3]
    %3126 = vset.pattern.permute.xlu0 0
    %3127 = vperm.xlu0 %3126, %v3124
    %v3128 = vpop.permute.xlu0 %3127
    %vm3129 = vcmp.eq.s32.totalorder %v1750, %v3128
    %v3130 = vsel %vm3129, 1, 0
    %v3131 = vcvt.s32.f32 %v3130
    %3132 = vset.pattern.permute.xlu0 1
    %3133 = vperm.xlu0 %3132, %v3124
    %v3134 = vpop.permute.xlu0 %3133
    %vm3135 = vcmp.eq.s32.totalorder %v1750, %v3134
    %v3136 = vsel %vm3135, 1, 0
    %v3137 = vcvt.s32.f32 %v3136
    %3138 = vset.pattern.permute.xlu0 0
    %3139 = vperm.xlu0 %3138, %v3125
    %v3140 = vpop.permute.xlu0 %3139
    %vm3141 = vcmp.eq.s32.totalorder %v1750, %v3140
    %v3142 = vsel %vm3141, 1, 0
    %v3143 = vcvt.s32.f32 %v3142
    %v3144 = vld [vmem:[#allocation10] sm:$0xff]
    %v3145 = vld [vmem:[#allocation12] sm:$0xff]
    %v3146 = vld [vmem:[#allocation12 + $0x8] sm:$0x3]
    %vm3147 = vcmask 80896
    %v3149 = vsel %vm3147, %v3131, 0
    %v3152 = vsel %vm1892, %v3146, 0
    %3154 = vmatprep.subr.mxu0 0.0
    %3155 = vmatpush1.msra.mxu0 0.0
    %3156 = vmatprep.subr.mxu0 0.0
    %3157 = vmatpush1.msra.mxu0 0.0
    %3158 = vmatprep.subr.mxu0 0.0
    %3159 = vmatpush1.msra.mxu0 0.0
    %3160 = vmatprep.subr.mxu0 0.0
    %3161 = vmatpush1.msra.mxu0 0.0
    %3162 = vmatprep.subr.mxu0 0.0
    %3163 = vmatpush1.msra.mxu0 0.0
    %3164 = vmatprep.subr.mxu0 0.0
    %3165 = vmatpush1.msra.mxu0 0.0
    %3166 = vmatprep.subr.mxu0 0.0
    %3167 = vmatpush1.msra.mxu0 0.0
    %3168 = vmatprep.subr.mxu0 0.0
    %3169 = vmatpush1.msra.mxu0 0.0
    %3170 = vmatprep.subr.mxu0 0.0
    %3171 = vmatpush1.msra.mxu0 0.0
    %3172 = vmatprep.subr.mxu0 0.0
    %3173 = vmatpush1.msra.mxu0 0.0
    %3174 = vmatprep.subr.mxu0 0.0
    %3175 = vmatpush1.msra.mxu0 0.0
    %3176 = vmatprep.subr.mxu0 0.0
    %3177 = vmatpush1.msra.mxu0 0.0
    %3178 = vmatprep.subr.mxu0 0.0
    %3179 = vmatpush1.msra.mxu0 0.0
    %3180 = vmatprep.subr.mxu0 0.0
    %3181 = vmatpush1.msra.mxu0 0.0
    %3182 = vmatprep.subr.mxu0 0.0
    %3183 = vmatpush1.msra.mxu0 %v3152
    %3184 = vmatprep.subr.mxu0 0.0
    %3185 = vmatpush1.msra.mxu0 %v3145
    %3186 = vmatprep.subr.mxu0 0.0
    %3187 = vmatpush2.msra.mxu0 0.0
    %3188 = vmatprep.subr.mxu0 0.0
    %3189 = vmatpush2.msra.mxu0 0.0
    %3190 = vmatprep.subr.mxu0 0.0
    %3191 = vmatpush2.msra.mxu0 0.0
    %3192 = vmatprep.subr.mxu0 0.0
    %3193 = vmatpush2.msra.mxu0 0.0
    %3194 = vmatprep.subr.mxu0 0.0
    %3195 = vmatpush2.msra.mxu0 0.0
    %3196 = vmatprep.subr.mxu0 0.0
    %3197 = vmatpush2.msra.mxu0 0.0
    %3198 = vmatprep.subr.mxu0 0.0
    %3199 = vmatpush2.msra.mxu0 0.0
    %3200 = vmatprep.subr.mxu0 0.0
    %3201 = vmatpush2.msra.mxu0 0.0
    %3202 = vmatprep.subr.mxu0 0.0
    %3203 = vmatpush2.msra.mxu0 0.0
    %3204 = vmatprep.subr.mxu0 0.0
    %3205 = vmatpush2.msra.mxu0 0.0
    %3206 = vmatprep.subr.mxu0 0.0
    %3207 = vmatpush2.msra.mxu0 0.0
    %3208 = vmatprep.subr.mxu0 0.0
    %3209 = vmatpush2.msra.mxu0 0.0
    %3210 = vmatprep.subr.mxu0 0.0
    %3211 = vmatpush2.msra.mxu0 0.0
    %3212 = vmatprep.subr.mxu0 0.0
    %3213 = vmatpush2.msra.mxu0 0.0
    %3214 = vmatprep.subr.mxu0 0.0
    %3215 = vmatpush2.msra.mxu0 0.0
    %3216 = vmatprep.subr.mxu0 0.0
    %3217 = vmatpush2.msra.mxu0 0.0
    %3218 = vmatprep.mubr.f32.mxu0 0.0
    %3219 = vmatmul.mubr.f32.gmra.mxu0 %v3149
    %v3220 = vpop.f32.mrf.mxu0
    %v3221 = vadd.f32 0.0, %v3220
    %v3222 = vpop.f32.mrf.mxu0
    %3223 = vdwg.mxu0
    %vm3224 = vcmask 64512
    %v3226 = vsel %vm3224, %v3123, 0
    %3228 = vmatprep.subr.mxu0 0.0
    %3229 = vmatpush1.msra.mxu0 0.0
    %3230 = vmatprep.subr.mxu0 0.0
    %3231 = vmatpush1.msra.mxu0 0.0
    %3232 = vmatprep.subr.mxu0 0.0
    %3233 = vmatpush1.msra.mxu0 0.0
    %3234 = vmatprep.subr.mxu0 0.0
    %3235 = vmatpush1.msra.mxu0 0.0
    %3236 = vmatprep.subr.mxu0 0.0
    %3237 = vmatpush1.msra.mxu0 0.0
    %3238 = vmatprep.subr.mxu0 0.0
    %3239 = vmatpush1.msra.mxu0 0.0
    %3240 = vmatprep.subr.mxu0 0.0
    %3241 = vmatpush1.msra.mxu0 0.0
    %3242 = vmatprep.subr.mxu0 0.0
    %3243 = vmatpush1.msra.mxu0 0.0
    %3244 = vmatprep.subr.mxu0 0.0
    %3245 = vmatpush1.msra.mxu0 0.0
    %3246 = vmatprep.subr.mxu0 0.0
    %3247 = vmatpush1.msra.mxu0 0.0
    %3248 = vmatprep.subr.mxu0 0.0
    %3249 = vmatpush1.msra.mxu0 0.0
    %3250 = vmatprep.subr.mxu0 0.0
    %3251 = vmatpush1.msra.mxu0 0.0
    %3252 = vmatprep.subr.mxu0 0.0
    %3253 = vmatpush1.msra.mxu0 0.0
    %3254 = vmatprep.subr.mxu0 0.0
    %3255 = vmatpush1.msra.mxu0 0.0
    %3256 = vmatprep.subr.mxu0 0.0
    %3257 = vmatpush1.msra.mxu0 0.0
    %3258 = vmatprep.subr.mxu0 0.0
    %3259 = vmatpush1.msra.mxu0 %v3144
    %3260 = vmatprep.subr.mxu0 0.0
    %3261 = vmatpush2.msra.mxu0 0.0
    %3262 = vmatprep.subr.mxu0 0.0
    %3263 = vmatpush2.msra.mxu0 0.0
    %3264 = vmatprep.subr.mxu0 0.0
    %3265 = vmatpush2.msra.mxu0 0.0
    %3266 = vmatprep.subr.mxu0 0.0
    %3267 = vmatpush2.msra.mxu0 0.0
    %3268 = vmatprep.subr.mxu0 0.0
    %3269 = vmatpush2.msra.mxu0 0.0
    %3270 = vmatprep.subr.mxu0 0.0
    %3271 = vmatpush2.msra.mxu0 0.0
    %3272 = vmatprep.subr.mxu0 0.0
    %3273 = vmatpush2.msra.mxu0 0.0
    %3274 = vmatprep.subr.mxu0 0.0
    %3275 = vmatpush2.msra.mxu0 0.0
    %3276 = vmatprep.subr.mxu0 0.0
    %3277 = vmatpush2.msra.mxu0 0.0
    %3278 = vmatprep.subr.mxu0 0.0
    %3279 = vmatpush2.msra.mxu0 0.0
    %3280 = vmatprep.subr.mxu0 0.0
    %3281 = vmatpush2.msra.mxu0 0.0
    %3282 = vmatprep.subr.mxu0 0.0
    %3283 = vmatpush2.msra.mxu0 0.0
    %3284 = vmatprep.subr.mxu0 0.0
    %3285 = vmatpush2.msra.mxu0 0.0
    %3286 = vmatprep.subr.mxu0 0.0
    %3287 = vmatpush2.msra.mxu0 0.0
    %3288 = vmatprep.subr.mxu0 0.0
    %3289 = vmatpush2.msra.mxu0 0.0
    %3290 = vmatprep.subr.mxu0 0.0
    %3291 = vmatpush2.msra.mxu0 0.0
    %3292 = vmatprep.mubr.f32.mxu0 0.0
    %3293 = vmatmul.mubr.f32.gmra.mxu0 %v3226
    %v3294 = vpop.f32.mrf.mxu0
    %v3295 = vadd.f32 %v3221, %v3294
    %v3296 = vpop.f32.mrf.mxu0
    %3297 = vdwg.mxu0
    %v3298 = vld [vmem:[#allocation13] sm:$0xff]
    %v3299 = vld [vmem:[#allocation13 + $0x8] sm:$0x3]
    %v3301 = vsel %vm3147, %v3137, 0
    %v3304 = vsel %vm1892, %v3299, 0
    %3306 = vmatprep.subr.mxu0 0.0
    %3307 = vmatpush1.msra.mxu0 0.0
    %3308 = vmatprep.subr.mxu0 0.0
    %3309 = vmatpush1.msra.mxu0 0.0
    %3310 = vmatprep.subr.mxu0 0.0
    %3311 = vmatpush1.msra.mxu0 0.0
    %3312 = vmatprep.subr.mxu0 0.0
    %3313 = vmatpush1.msra.mxu0 0.0
    %3314 = vmatprep.subr.mxu0 0.0
    %3315 = vmatpush1.msra.mxu0 0.0
    %3316 = vmatprep.subr.mxu0 0.0
    %3317 = vmatpush1.msra.mxu0 0.0
    %3318 = vmatprep.subr.mxu0 0.0
    %3319 = vmatpush1.msra.mxu0 0.0
    %3320 = vmatprep.subr.mxu0 0.0
    %3321 = vmatpush1.msra.mxu0 0.0
    %3322 = vmatprep.subr.mxu0 0.0
    %3323 = vmatpush1.msra.mxu0 0.0
    %3324 = vmatprep.subr.mxu0 0.0
    %3325 = vmatpush1.msra.mxu0 0.0
    %3326 = vmatprep.subr.mxu0 0.0
    %3327 = vmatpush1.msra.mxu0 0.0
    %3328 = vmatprep.subr.mxu0 0.0
    %3329 = vmatpush1.msra.mxu0 0.0
    %3330 = vmatprep.subr.mxu0 0.0
    %3331 = vmatpush1.msra.mxu0 0.0
    %3332 = vmatprep.subr.mxu0 0.0
    %3333 = vmatpush1.msra.mxu0 0.0
    %3334 = vmatprep.subr.mxu0 0.0
    %3335 = vmatpush1.msra.mxu0 %v3304
    %3336 = vmatprep.subr.mxu0 0.0
    %3337 = vmatpush1.msra.mxu0 %v3298
    %3338 = vmatprep.subr.mxu0 0.0
    %3339 = vmatpush2.msra.mxu0 0.0
    %3340 = vmatprep.subr.mxu0 0.0
    %3341 = vmatpush2.msra.mxu0 0.0
    %3342 = vmatprep.subr.mxu0 0.0
    %3343 = vmatpush2.msra.mxu0 0.0
    %3344 = vmatprep.subr.mxu0 0.0
    %3345 = vmatpush2.msra.mxu0 0.0
    %3346 = vmatprep.subr.mxu0 0.0
    %3347 = vmatpush2.msra.mxu0 0.0
    %3348 = vmatprep.subr.mxu0 0.0
    %3349 = vmatpush2.msra.mxu0 0.0
    %3350 = vmatprep.subr.mxu0 0.0
    %3351 = vmatpush2.msra.mxu0 0.0
    %3352 = vmatprep.subr.mxu0 0.0
    %3353 = vmatpush2.msra.mxu0 0.0
    %3354 = vmatprep.subr.mxu0 0.0
    %3355 = vmatpush2.msra.mxu0 0.0
    %3356 = vmatprep.subr.mxu0 0.0
    %3357 = vmatpush2.msra.mxu0 0.0
    %3358 = vmatprep.subr.mxu0 0.0
    %3359 = vmatpush2.msra.mxu0 0.0
    %3360 = vmatprep.subr.mxu0 0.0
    %3361 = vmatpush2.msra.mxu0 0.0
    %3362 = vmatprep.subr.mxu0 0.0
    %3363 = vmatpush2.msra.mxu0 0.0
    %3364 = vmatprep.subr.mxu0 0.0
    %3365 = vmatpush2.msra.mxu0 0.0
    %3366 = vmatprep.subr.mxu0 0.0
    %3367 = vmatpush2.msra.mxu0 0.0
    %3368 = vmatprep.subr.mxu0 0.0
    %3369 = vmatpush2.msra.mxu0 0.0
    %3370 = vmatprep.mubr.f32.mxu0 0.0
    %3371 = vmatmul.mubr.f32.gmra.mxu0 %v3301
    %v3372 = vpop.f32.mrf.mxu0
    %v3373 = vadd.f32 0.0, %v3372
    %v3374 = vpop.f32.mrf.mxu0
    %3375 = vdwg.mxu0
    %v3376 = vadd.f32 %v3295, %v3373
    %v3377 = vld [vmem:[%s11] sm:$0xff]
    %v3378 = vld [vmem:[%s11 + $0x8] sm:$0xff]
    %v3379 = vld [vmem:[%s11 + $0x10] sm:$0xff]
    %vm3380 = vcmask 195584
    %v3382 = vsel %vm3380, %v3143, 0
    %3384 = vmatprep.subr.mxu0 0.0
    %3385 = vmatpush1.msra.mxu0 0.0
    %3386 = vmatprep.subr.mxu0 0.0
    %3387 = vmatpush1.msra.mxu0 0.0
    %3388 = vmatprep.subr.mxu0 0.0
    %3389 = vmatpush1.msra.mxu0 0.0
    %3390 = vmatprep.subr.mxu0 0.0
    %3391 = vmatpush1.msra.mxu0 0.0
    %3392 = vmatprep.subr.mxu0 0.0
    %3393 = vmatpush1.msra.mxu0 0.0
    %3394 = vmatprep.subr.mxu0 0.0
    %3395 = vmatpush1.msra.mxu0 0.0
    %3396 = vmatprep.subr.mxu0 0.0
    %3397 = vmatpush1.msra.mxu0 0.0
    %3398 = vmatprep.subr.mxu0 0.0
    %3399 = vmatpush1.msra.mxu0 0.0
    %3400 = vmatprep.subr.mxu0 0.0
    %3401 = vmatpush1.msra.mxu0 0.0
    %3402 = vmatprep.subr.mxu0 0.0
    %3403 = vmatpush1.msra.mxu0 0.0
    %3404 = vmatprep.subr.mxu0 0.0
    %3405 = vmatpush1.msra.mxu0 0.0
    %3406 = vmatprep.subr.mxu0 0.0
    %3407 = vmatpush1.msra.mxu0 0.0
    %3408 = vmatprep.subr.mxu0 0.0
    %3409 = vmatpush1.msra.mxu0 0.0
    %3410 = vmatprep.subr.mxu0 0.0
    %3411 = vmatpush1.msra.mxu0 %v3379
    %3412 = vmatprep.subr.mxu0 0.0
    %3413 = vmatpush1.msra.mxu0 %v3378
    %3414 = vmatprep.subr.mxu0 0.0
    %3415 = vmatpush1.msra.mxu0 %v3377
    %3416 = vmatprep.subr.mxu0 0.0
    %3417 = vmatpush2.msra.mxu0 0.0
    %3418 = vmatprep.subr.mxu0 0.0
    %3419 = vmatpush2.msra.mxu0 0.0
    %3420 = vmatprep.subr.mxu0 0.0
    %3421 = vmatpush2.msra.mxu0 0.0
    %3422 = vmatprep.subr.mxu0 0.0
    %3423 = vmatpush2.msra.mxu0 0.0
    %3424 = vmatprep.subr.mxu0 0.0
    %3425 = vmatpush2.msra.mxu0 0.0
    %3426 = vmatprep.subr.mxu0 0.0
    %3427 = vmatpush2.msra.mxu0 0.0
    %3428 = vmatprep.subr.mxu0 0.0
    %3429 = vmatpush2.msra.mxu0 0.0
    %3430 = vmatprep.subr.mxu0 0.0
    %3431 = vmatpush2.msra.mxu0 0.0
    %3432 = vmatprep.subr.mxu0 0.0
    %3433 = vmatpush2.msra.mxu0 0.0
    %3434 = vmatprep.subr.mxu0 0.0
    %3435 = vmatpush2.msra.mxu0 0.0
    %3436 = vmatprep.subr.mxu0 0.0
    %3437 = vmatpush2.msra.mxu0 0.0
    %3438 = vmatprep.subr.mxu0 0.0
    %3439 = vmatpush2.msra.mxu0 0.0
    %3440 = vmatprep.subr.mxu0 0.0
    %3441 = vmatpush2.msra.mxu0 0.0
    %3442 = vmatprep.subr.mxu0 0.0
    %3443 = vmatpush2.msra.mxu0 0.0
    %3444 = vmatprep.subr.mxu0 0.0
    %3445 = vmatpush2.msra.mxu0 0.0
    %3446 = vmatprep.subr.mxu0 0.0
    %3447 = vmatpush2.msra.mxu0 0.0
    %3448 = vmatprep.mubr.f32.mxu0 0.0
    %3449 = vmatmul.mubr.f32.gmra.mxu0 %v3382
    %v3450 = vpop.f32.mrf.mxu0
    %v3451 = vadd.f32 0.0, %v3450
    %v3452 = vpop.f32.mrf.mxu0
    %3453 = vdwg.mxu0
    %v3454 = vadd.f32 %v3376, %v3451
    %v3455 = vld [vmem:[%s12] sm:$0x1]
    %v3457 = vlaneseq
    %v3458 = vshrl.u32 %v3457, 7
    %v3459 = vsub.s32 0, %v3458
    %v3460 = vrot.slane %v3455, %v3459
    %v3462 = vadd.f32 %v3454, %v3460
    %v3463 = vmax.f32 %v3462, 0.0
    %v3464 = vld [vmem:[%s13] sm:$0x1]
    %v3466 = vlaneseq
    %v3467 = vshrl.u32 %v3466, 7
    %v3468 = vsub.s32 0, %v3467
    %v3469 = vrot.slane %v3464, %v3468
    %v3471 = vmul.f32 %v3463, %v3469
    %vm3472 = vcmask 517120
    %v3473 = vsel %vm3472, %v3471, 0.0
    %3474 = vadd.xlane.f32.xlu0 %v3473
    %v3475 = vpop.xlane.xlu0 %3474
    %v3476 = vld [vmem:[#allocation4] sm:$0x1]
    %v3478 = vlaneseq
    %v3479 = vshrl.u32 %v3478, 7
    %v3480 = vsub.s32 0, %v3479
    %v3481 = vrot.slane %v3476, %v3480
    %v3483 = vadd.f32 %v3475, %v3481
    %3484 = vst.msk [vmem:[%s15] sm:$0x3] %vm2344, %v3483
    // Predicated region
    $region86: #{tpu_custom_call.1} parent=1 // pred_check
      _
    $region87: #{tpu_custom_call.1} parent=1 // pred_check_branch
      %3486 = sbr.rel (0) target = $region89
    $region88: #{tpu_custom_call.1} parent=1 // pred_region
      _
    $region89: #{tpu_custom_call.1} parent=1 // pred_fallthru
      _
    // Predicated region
    $region90: #{tpu_custom_call.1} parent=1 // pred_check
      _
    $region91: #{tpu_custom_call.1} parent=1 // pred_check_branch
      %3488 = sbr.rel (0) target = $region93
    $region92: #{tpu_custom_call.1} parent=1 // pred_region
      _
    $region93: #{tpu_custom_call.1} parent=1 // pred_fallthru
      _
    %3489 = vsyncpa [#allocation6], 1
    %3490 = vsyncpa [#allocation8], 1
    %3491 = vsyncpa [#allocation11], 1
    %3492 = vsyncpa [#allocation14], 1

</llo_original>
